<compile_context>
chip_gen: v7x
topology: tpu7x:2x2x1
jax: 0.10.0
libtpu: 0.0.40
codegen_flags: <defaults>
</compile_context>

<pallas_src>
import functools

import jax
import jax.numpy as jnp
from jax.experimental import pallas as pl
from jax.experimental.pallas import tpu as pltpu

# ----------------------------- model constants -----------------------------
C_IN = 3          # RGB input channels (EfficientNet expects 3)
PATCH = 32        # EfficientNet-B3 reduces spatial dims by 32x
C_FEAT = 1536     # extract_features output channels for B3
FEAT_DIM = 12     # fc_pose output dim (feat_dim in the PyTorch module)
FEAT_PAD = 128    # lane-dense padding for the head output


def _pick_tile(dim, candidates):
    for c in candidates:
        if dim % c == 0:
            return c
    return dim


# --------------------------- Pallas kernel bodies ---------------------------
def _stem_matmul_kernel(x_ref, w_ref, o_ref, acc_ref):
    """Tiled matmul (patch embedding), bf16 operands, f32 accumulator, fused swish."""
    @pl.when(pl.program_id(1) == 0)
    def _():
        acc_ref[...] = jnp.zeros_like(acc_ref)

    acc_ref[...] += jnp.dot(
        x_ref[...], w_ref[...], preferred_element_type=jnp.float32
    )

    @pl.when(pl.program_id(1) == pl.num_programs(1) - 1)
    def _():
        a = acc_ref[...]
        # swish / SiLU (f32), as used throughout EfficientNet
        o_ref[...] = (a * jax.nn.sigmoid(a)).astype(o_ref.dtype)


def _head_kernel(f_ref, w_ref, b_ref, o_ref, acc_ref, *, inv_s):
    """Fused AdaptiveAvgPool2d(1) + Linear(1536, feat_dim), tiled over S."""
    step = pl.program_id(0)

    @pl.when(step == 0)
    def _():
        acc_ref[...] = jnp.zeros_like(acc_ref)

    # (B, ts, C) -> per-batch channel sums (B, C), accumulated in f32
    acc_ref[...] += jnp.sum(f_ref[...].astype(jnp.float32), axis=1)

    @pl.when(step == pl.num_programs(0) - 1)
    def _():
        pooled = acc_ref[...] * inv_s                                  # (B, C)
        out = jnp.dot(pooled, w_ref[...], preferred_element_type=jnp.float32)
        o_ref[...] = (out + b_ref[...]).astype(o_ref.dtype)


# ------------------------------ pallas wrappers ------------------------------
def _patchify(x_nchw):
    """(B, 3, H, W) -> (B*Hp*Wp, 3*32*32) patch rows, b-major ordering."""
    B, C, H, W = x_nchw.shape
    assert H % PATCH == 0 and W % PATCH == 0, "H and W must be multiples of 32"
    Hp, Wp = H // PATCH, W // PATCH
    patches = (
        x_nchw.reshape(B, C, Hp, PATCH, Wp, PATCH)
        .transpose(0, 2, 4, 1, 3, 5)
        .reshape(B * Hp * Wp, C * PATCH * PATCH)
    )
    return patches, (B, Hp, Wp)


def extract_features(x_nchw, w_stem):
    """Stand-in for backbone_net.extract_features.

    Returns the (M, 1536) feature slab (rows ordered (b, hp, wp)) plus (B, Hp, Wp);
    reshape to NCHW only when the caller actually needs the feature tensor.
    """
    patches, (B, Hp, Wp) = _patchify(x_nchw)
    M, K = patches.shape
    N = C_FEAT

    # bounded tiles: tm never scales with batch/resolution, weight held full-N
    tm = _pick_tile(M, (512, 256, 128, 64, 32, 16, 8))
    tk = _pick_tile(K, (1024, 512, 256, 128))

    cost = pl.CostEstimate(
        flops=2 * M * K * N,
        transcendentals=M * N,                       # sigmoid in the epilogue
        bytes_accessed=M * K * 2 + K * N * 2 + M * N * 4,
    )

    slab = pl.pallas_call(
        _stem_matmul_kernel,
        out_shape=jax.ShapeDtypeStruct((M, N), jnp.float32),
        grid_spec=pltpu.PrefetchScalarGridSpec(
            num_scalar_prefetch=0,
            grid=(M // tm, K // tk),                 # N kept fully resident (no j axis)
            in_specs=[
                pl.BlockSpec((tm, tk), lambda i, k: (i, k)),
                pl.BlockSpec((tk, N), lambda i, k: (k, 0)),
            ],
            out_specs=pl.BlockSpec((tm, N), lambda i, k: (i, 0)),
            scratch_shapes=[pltpu.VMEM((tm, N), jnp.float32)],
        ),
        compiler_params=pltpu.CompilerParams(
            dimension_semantics=("parallel", "arbitrary"),
            vmem_limit_bytes=32 * 1024 * 1024,
        ),
        cost_estimate=cost,
    )(patches.astype(jnp.bfloat16), w_stem.astype(jnp.bfloat16))

    return slab, (B, Hp, Wp)


def slab_to_nchw(slab, B, Hp, Wp):
    """(M, 1536) -> (B, 1536, Hp, Wp), matching PyTorch extract_features layout."""
    return slab.reshape(B, Hp, Wp, C_FEAT).transpose(0, 3, 1, 2)


def pose_head(slab, B, w_fc, b_fc):
    """avgpool(1) + reshape + fc_pose, fused; consumes the stem's (M, 1536) slab."""
    M, C = slab.shape
    S = M // B
    f = slab.reshape(B, S, C)                       # free reshape, C stays on lanes

    # zero-pad the narrow fc output to a lane-dense 128 wide slab
    w_pad = jnp.zeros((C, FEAT_PAD), jnp.float32).at[:, :FEAT_DIM].set(w_fc)
    b_pad = jnp.zeros((1, FEAT_PAD), jnp.float32).at[0, :FEAT_DIM].set(b_fc)

    ts = _pick_tile(S, (256, 128, 64, 32, 16, 8))

    out = pl.pallas_call(
        functools.partial(_head_kernel, inv_s=float(1.0 / S)),
        out_shape=jax.ShapeDtypeStruct((B, FEAT_PAD), jnp.float32),
        grid_spec=pltpu.PrefetchScalarGridSpec(
            num_scalar_prefetch=0,
            grid=(S // ts,),
            in_specs=[
                pl.BlockSpec((B, ts, C), lambda s: (0, s, 0)),
                pl.BlockSpec((C, FEAT_PAD), lambda s: (0, 0)),
                pl.BlockSpec((1, FEAT_PAD), lambda s: (0, 0)),
            ],
            out_specs=pl.BlockSpec((B, FEAT_PAD), lambda s: (0, 0)),
            scratch_shapes=[pltpu.VMEM((B, C), jnp.float32)],
        ),
        compiler_params=pltpu.CompilerParams(
            dimension_semantics=("arbitrary",),
        ),
    )(f, w_pad, b_pad)

    return out[:, :FEAT_DIM]


def _aggregate_feature2(x):
    """(2B, C, H, W) -> (2, B, C, H, W), mirroring the PyTorch helper."""
    batch = x.shape[0]
    feature_t = x[: batch // 2]
    feature_r = x[batch // 2:]
    return jnp.stack([feature_t, feature_r])


def efficientnet_b3_forward(x, params, return_feature=False, isSingleStream=False):
    """Mirrors EfficientNetB3.forward (feature_block == 6 path). Returns (feat_out, predict)."""
    feat_out = []
    slab, (B, Hp, Wp) = extract_features(x, params["w_stem"])
    if return_feature:
        fe = slab_to_nchw(slab, B, Hp, Wp)          # NCHW only materialized when needed
        if isSingleStream:
            feature = jnp.stack([fe])
        else:
            feature = _aggregate_feature2(fe)
        feat_out.append(feature)
    predict = pose_head(slab, B, params["w_fc"], params["b_fc"])
    return feat_out, predict


# ------------------------------ parameter init ------------------------------
def init_params(key):
    k_stem, k_fc_w, k_fc_b = jax.random.split(key, 3)
    K_stem = C_IN * PATCH * PATCH
    w_stem = jax.random.normal(k_stem, (K_stem, C_FEAT), jnp.float32) / jnp.sqrt(K_stem)
    w_fc = jax.random.normal(k_fc_w, (C_FEAT, FEAT_DIM), jnp.float32) / jnp.sqrt(C_FEAT)
    b_fc = jax.random.normal(k_fc_b, (FEAT_DIM,), jnp.float32) * 0.01
    return {"w_stem": w_stem, "w_fc": w_fc, "b_fc": b_fc}


# ----------------------------------- main -----------------------------------
if __name__ == "__main__":
    key = jax.random.PRNGKey(0)
    params = init_params(key)

    # siamese-style input: 2B = 4 images, NCHW
    B2, H, W = 4, 64, 64
    x = jax.random.normal(jax.random.fold_in(key, 7), (B2, C_IN, H, W), jnp.float32)

    feat_out, predict = efficientnet_b3_forward(
        x, params, return_feature=True, isSingleStream=False
    )
    jax.block_until_ready(predict)
    jax.block_until_ready(feat_out[0])

    # shape checks vs PyTorch semantics
    assert feat_out[0].shape == (2, B2 // 2, C_FEAT, H // PATCH, W // PATCH)
    assert predict.shape == (B2, FEAT_DIM)

    # numerical check against plain-JAX f32 reference (bf16 stem operands => loose tol)
    patches_ref, (Bref, Hp, Wp) = _patchify(x)
    feats_ref_slab = jax.nn.silu(patches_ref @ params["w_stem"])             # (M, 1536)
    feats_ref_nchw = feats_ref_slab.reshape(Bref, Hp, Wp, C_FEAT).transpose(0, 3, 1, 2)
    pooled_ref = jnp.mean(feats_ref_nchw.reshape(B2, C_FEAT, -1), axis=-1)
    predict_ref = pooled_ref @ params["w_fc"] + params["b_fc"]

    feats_nchw = jnp.concatenate([feat_out[0][0], feat_out[0][1]], axis=0)   # back to (2B,...)
    assert jnp.allclose(feats_nchw, feats_ref_nchw, atol=5e-2, rtol=5e-2)
    assert jnp.allclose(predict, predict_ref, atol=5e-2, rtol=5e-2)

    print("KERNEL_OK")
</pallas_src>

<mosaic_0001>
module attributes {stable_mosaic.version = 11 : i64} {
  func.func @_stem_matmul_kernel(%arg0: i32, %arg1: i32, %arg2: memref<16x1024xbf16, #tpu.memory_space<vmem>>, %arg3: memref<1024x1536xbf16, #tpu.memory_space<vmem>>, %arg4: memref<16x1536xf32, #tpu.memory_space<vmem>>, %arg5: memref<16x1536xf32, #tpu.memory_space<vmem>>) attributes {dimension_semantics = [#tpu.dimension_semantics<parallel>, #tpu.dimension_semantics<arbitrary>], iteration_bounds = array<i64: 1, 3>, scalar_prefetch = 0 : i64, scratch_operands = 1 : i64, tpu.core_type = #tpu.core_type<tc>, window_params = [{transform_indices = @transform_0, window_bounds = array<i64: 16, 1024>}, {transform_indices = @transform_1, window_bounds = array<i64: 1024, 1536>}, {transform_indices = @transform_2, window_bounds = array<i64: 16, 1536>}]} {
    %c0_i32 = arith.constant 0 : i32
    %0 = arith.cmpi eq, %arg1, %c0_i32 : i32
    %1 = arith.extui %0 : i1 to i32
    %c0_i32_0 = arith.constant 0 : i32
    %2 = arith.cmpi ne, %1, %c0_i32_0 : i32
    scf.if %2 {
      %cst_9 = arith.constant 0.000000e+00 : f32
      %12 = vector.broadcast %cst_9 : f32 to vector<16x1536xf32>
      %c0_10 = arith.constant 0 : index
      %c0_11 = arith.constant 0 : index
      %13 = vector.load %arg5[%c0_10, %c0_11] : memref<16x1536xf32, #tpu.memory_space<vmem>>, vector<16x1536xf32>
      tpu.vector_store %arg5[%c0_10, %c0_11], %12 {strides = array<i32>} : memref<16x1536xf32, #tpu.memory_space<vmem>>, vector<16x1536xf32>,
    } else {
    }
    %c0 = arith.constant 0 : index
    %c0_1 = arith.constant 0 : index
    %3 = vector.load %arg5[%c0, %c0_1] : memref<16x1536xf32, #tpu.memory_space<vmem>>, vector<16x1536xf32>
    %c0_2 = arith.constant 0 : index
    %c0_3 = arith.constant 0 : index
    %4 = vector.load %arg2[%c0_2, %c0_3] : memref<16x1024xbf16, #tpu.memory_space<vmem>>, vector<16x1024xbf16>
    %c0_4 = arith.constant 0 : index
    %c0_5 = arith.constant 0 : index
    %5 = vector.load %arg3[%c0_4, %c0_5] : memref<1024x1536xbf16, #tpu.memory_space<vmem>>, vector<1024x1536xbf16>
    %cst = arith.constant dense<0.000000e+00> : vector<16x1536xf32>
    %6 = tpu.matmul %4, %5, %cst {dimension_numbers = #tpu.dot_dimension_numbers<[1], [0], [0], [1], [0, 0, 1, 1], [], []>} : vector<16x1024xbf16>, vector<1024x1536xbf16>, vector<16x1536xf32> -> vector<16x1536xf32>
    %7 = arith.addf %3, %6 : vector<16x1536xf32>
    %c0_6 = arith.constant 0 : index
    %c0_7 = arith.constant 0 : index
    %8 = vector.load %arg5[%c0_6, %c0_7] : memref<16x1536xf32, #tpu.memory_space<vmem>>, vector<16x1536xf32>
    tpu.vector_store %arg5[%c0_6, %c0_7], %7 {strides = array<i32>} : memref<16x1536xf32, #tpu.memory_space<vmem>>, vector<16x1536xf32>,
    %c2_i32 = arith.constant 2 : i32
    %9 = arith.cmpi eq, %arg1, %c2_i32 : i32
    %10 = arith.extui %9 : i1 to i32
    %c0_i32_8 = arith.constant 0 : i32
    %11 = arith.cmpi ne, %10, %c0_i32_8 : i32
    scf.if %11 {
      %c0_9 = arith.constant 0 : index
      %c0_10 = arith.constant 0 : index
      %12 = vector.load %arg5[%c0_9, %c0_10] : memref<16x1536xf32, #tpu.memory_space<vmem>>, vector<16x1536xf32>
      %13 = arith.negf %12 : vector<16x1536xf32>
      %14 = math.exp %13 : vector<16x1536xf32>
      %cst_11 = arith.constant 1.000000e+00 : f32
      %15 = vector.broadcast %cst_11 : f32 to vector<16x1536xf32>
      %16 = arith.addf %15, %14 : vector<16x1536xf32>
      %17 = arith.divf %15, %16 : vector<16x1536xf32>
      %18 = arith.mulf %12, %17 : vector<16x1536xf32>
      %c0_12 = arith.constant 0 : index
      %c0_13 = arith.constant 0 : index
      %19 = vector.load %arg4[%c0_12, %c0_13] : memref<16x1536xf32, #tpu.memory_space<vmem>>, vector<16x1536xf32>
      tpu.vector_store %arg4[%c0_12, %c0_13], %18 {strides = array<i32>} : memref<16x1536xf32, #tpu.memory_space<vmem>>, vector<16x1536xf32>,
    } else {
    }
    return
  }
  func.func @transform_0(%arg0: i32, %arg1: i32) -> (i32, i32) {
    %c0_i32 = arith.constant 0 : i32
    return %arg0, %arg1 : i32, i32
  }
  func.func @transform_1(%arg0: i32, %arg1: i32) -> (i32, i32) {
    %c0_i32 = arith.constant 0 : i32
    %c0_i32_0 = arith.constant 0 : i32
    return %arg1, %c0_i32 : i32, i32
  }
  func.func @transform_2(%arg0: i32, %arg1: i32) -> (i32, i32) {
    %c0_i32 = arith.constant 0 : i32
    %c0_i32_0 = arith.constant 0 : i32
    return %arg0, %c0_i32 : i32, i32
  }
}

</mosaic_0001>

<llo_original>
// kernel: tpu_custom_call.1
$region0: #{tpu_custom_call.1}
  #allocation0 [shape = 'u32[]', space=smem, size = 0x4, offset = 0x4, fixed_abs, tag = 'smem constant byte address 0x4 - core index']
  #allocation1 [shape = 'u32[144,128]{1,0:T(1,128)}', space=vmem, size = 0x12000, scoped, tag = 'internal scratch']
  #allocation2 [shape = 'f32[16,1536]{1,0:T(8,128)}', space=vmem, size = 0x18000, scoped, tag = 'scratch operand']
  %s0 = inlined_call_operand.hbm [shape: bf16[16,3072], index: 0, kind: input, shape index: {}]
  %s1 = inlined_call_operand.hbm [shape: bf16[3072,1536], index: 1, kind: input, shape index: {}]
  %s2 = inlined_call_operand.hbm [shape: f32[16,1536], index: 2, kind: output, shape index: {}]
  %s3 = sld [smem:[#allocation0]]
  $region57: #{tpu_custom_call.1} parent=0
    _
  %s5 = ssub.s32 1, %s3
  %s6 = scalar_select 0, %s5, %s3
  $region1: #{tpu_custom_call.1} parent=0
    #allocation3 [shape = 'u8[65536]{0}', space=vmem, size = 0x10000, scoped, tag = 'input window, operand 0']
    #allocation4 [shape = 's32[2]{0}', space=sflag, size = 0x8, scoped, tag = 'scoped memory for tpu_custom_call.1']
    #allocation5 [shape = 's32[2]{0}', space=sflag, size = 0x8, scoped, tag = 'scoped memory for tpu_custom_call.1']
    #allocation6 [shape = 'u8[6291456]{0}', space=vmem, size = 0x600000, scoped, tag = 'input window, operand 1']
    #allocation7 [shape = 's32[2]{0}', space=sflag, size = 0x8, scoped, tag = 'scoped memory for tpu_custom_call.1']
    #allocation8 [shape = 'u8[98304]{0}', space=vmem, size = 0x18000, scoped, tag = 'output window, operand 0, single buffered']
    %7 = vsyncpa [#allocation4], 0
    %s8 = scalar_lea.sflag [#allocation4], 1
    %9 = vsyncpa %s8, 0
    %10 = vsyncpa [#allocation7], 0
    %s11 = scalar_lea.sflag [#allocation7], 1
    %12 = vsyncpa %s11, 0
    %13 = vsyncpa [#allocation5], 0
    loop: start=0, step=1, limit=5
    $region2: #{tpu_custom_call.1} parent=1 // loop_pre_header
      _
    $region3: #{tpu_custom_call.1} parent=1 // loop_header
      %s15 = sphi 0, %s19
      %p16 = scmp.ge.s32.totalorder %s15, 5
      %s22 = sphi 0, %s34
      %s23 = sphi 0, %s30
      %s24 = sphi 0, %s22
      %s25 = sphi 0, %s23
      %s26 = sphi 0, %s24
      %s27 = sphi 0, %s25
      %s39 = sphi 0, %s41
      %s42 = sphi 0, %s39
      %s43 = sphi 0, %s42
      %s59 = sphi 0, %s43
      %s65 = sphi 0, %s67
      %s68 = sphi 0, %s65
      %s69 = sphi 0, %s68
      %s85 = sphi 0, %s69
      %s91 = sphi 0, %s93
      %s94 = sphi 0, %s91
      %s95 = sphi 0, %s94
      %s111 = sphi 0, %s95
    $region4: #{tpu_custom_call.1} parent=1 // loop_header_branch
      %18 = sbr.rel (%p16) target = $region8
    $region5: #{tpu_custom_call.1} parent=1 // loop_body
      %s20 = ssub.s32 %s15, 1
      %s21 = ssub.s32 %s15, 2
      %s28 = sadd.s32 1, %s23
      %p29 = scmp.ge.s32.totalorder %s28, 3
      %s30 = scalar_select %p29, 0, %s28
      %s31 = sadd.s32 1, %s22
      %s32 = scalar_select %p29, %s31, %s22
      %p33 = scmp.ge.s32.totalorder %s32, 1
      %s34 = scalar_select %p33, 0, %s32
      %s35 = ssub.s32 %s22, %s34
      %s36 = ssub.s32 %s23, %s30
      %s37 = sor.u32 %s35, %s36
      %p38 = scmp.eq.s32.totalorder %s37, 0
      %s40 = sadd.s32 %s39, 1
      %s41 = scalar_select %p38, %s39, %s40
      %p44 = pneg %p38
      %p45 = scmp.eq.s32.totalorder %s15, 2
      %p46 = por %p44, %p45
      %p47 = scmp.ne.s32.totalorder %s39, %s42
      %p48 = scmp.eq.s32.totalorder %s15, 0
      %p49 = por %p47, %p48
      %p50 = scmp.ne.s32.totalorder %s39, %s42
      %p51 = scmp.eq.s32.totalorder %s20, 2
      %p52 = por %p50, %p51
      %p53 = scmp.ne.s32.totalorder %s42, %s43
      %p54 = scmp.eq.s32.totalorder %s20, 0
      %p55 = por %p53, %p54
      %p56 = scmp.ne.s32.totalorder %s42, %s43
      %p57 = scmp.eq.s32.totalorder %s21, 2
      %p58 = por %p56, %p57
      %p60 = scmp.ne.s32.totalorder %s43, %s59
      %p61 = scmp.eq.s32.totalorder %s21, 0
      %p62 = por %p60, %p61
      %s63 = ssub.s32 %s23, %s30
      %p64 = scmp.eq.s32.totalorder %s63, 0
      %s66 = sadd.s32 %s65, 1
      %s67 = scalar_select %p64, %s65, %s66
      %p70 = pneg %p64
      %p71 = scmp.eq.s32.totalorder %s15, 2
      %p72 = por %p70, %p71
      %p73 = scmp.ne.s32.totalorder %s65, %s68
      %p74 = scmp.eq.s32.totalorder %s15, 0
      %p75 = por %p73, %p74
      %p76 = scmp.ne.s32.totalorder %s65, %s68
      %p77 = scmp.eq.s32.totalorder %s20, 2
      %p78 = por %p76, %p77
      %p79 = scmp.ne.s32.totalorder %s68, %s69
      %p80 = scmp.eq.s32.totalorder %s20, 0
      %p81 = por %p79, %p80
      %p82 = scmp.ne.s32.totalorder %s68, %s69
      %p83 = scmp.eq.s32.totalorder %s21, 2
      %p84 = por %p82, %p83
      %p86 = scmp.ne.s32.totalorder %s69, %s85
      %p87 = scmp.eq.s32.totalorder %s21, 0
      %p88 = por %p86, %p87
      %s89 = ssub.s32 %s22, %s34
      %p90 = scmp.eq.s32.totalorder %s89, 0
      %s92 = sadd.s32 %s91, 1
      %s93 = scalar_select %p90, %s91, %s92
      %p96 = pneg %p90
      %p97 = scmp.eq.s32.totalorder %s15, 2
      %p98 = por %p96, %p97
      %p99 = scmp.ne.s32.totalorder %s91, %s94
      %p100 = scmp.eq.s32.totalorder %s15, 0
      %p101 = por %p99, %p100
      %p102 = scmp.ne.s32.totalorder %s91, %s94
      %p103 = scmp.eq.s32.totalorder %s20, 2
      %p104 = por %p102, %p103
      %p105 = scmp.ne.s32.totalorder %s94, %s95
      %p106 = scmp.eq.s32.totalorder %s20, 0
      %p107 = por %p105, %p106
      %p108 = scmp.ne.s32.totalorder %s94, %s95
      %p109 = scmp.eq.s32.totalorder %s21, 2
      %p110 = por %p108, %p109
      %p112 = scmp.ne.s32.totalorder %s95, %s111
      %p113 = scmp.eq.s32.totalorder %s21, 0
      %p114 = por %p112, %p113
      %p115 = scmp.le.s32.totalorder 1, %s15
      %p116 = scmp.lt.s32.totalorder %s15, 4
      %p117 = pnand %p115, %p116
      %p118 = pneg %p117
      // Predicated region
      $region9: #{tpu_custom_call.1} parent=5 // pred_check
        _
      $region10: #{tpu_custom_call.1} parent=5 // pred_check_branch
        %120 = sbr.rel (%p117) target = $region12
      $region11: #{tpu_custom_call.1} parent=5 // pred_region
        %s121 = ssub.s32 %s15, 1
      $region12: #{tpu_custom_call.1} parent=5 // pred_fallthru
        _
      %p122 = scmp.lt.s32.totalorder %s15, 3
      // Predicated region
      $region13: #{tpu_custom_call.1} parent=5 // pred_check
        %p123 = pneg %p122
      $region14: #{tpu_custom_call.1} parent=5 // pred_check_branch
        %125 = sbr.rel (%p123) target = $region16
      $region15: #{tpu_custom_call.1} parent=5 // pred_region
        // Predicated region
        $region17: #{tpu_custom_call.1} parent=15 // pred_check
          %p126 = pneg %p49
        $region18: #{tpu_custom_call.1} parent=15 // pred_check_branch
          %128 = sbr.rel (%p126) target = $region20
        $region19: #{tpu_custom_call.1} parent=15 // pred_region
          %s129 = sand.u32 %s39, 1
          %s130 = scalar_lea.sflag [#allocation4], %s129
          %s131 = sand.u32 %s39, 1
          %s132 = smul.addr %s131, 64
          %s133 = scalar_lea.vmem [#allocation3], %s132
          %s134 = smul.u32 2, %s22
          %s135 = smul.u32 8, %s23
          %s137 = ssub.s32 1024, 1024
          %138 = vsyncadd %s130, %s137
          %s139 = smul.addr %s134, 24
          %s140 = sadd.s32 %s135, %s139
          %s141 = smul.addr %s140, 64
          %s142 = scalar_lea.hbm %s0, %s141
          %s143 = sshll.u32 %s133, 4
          %s144 = int_to_ptr.vmem [resolvable:$true] %s143
          %149 = dma.hbm_to_vmem [thread:$0]  %s142, 1024, %s144, %s130, 1536, 512, 32
        $region20: #{tpu_custom_call.1} parent=15 // pred_fallthru
          _
        // Predicated region
        $region21: #{tpu_custom_call.1} parent=15 // pred_check
          %p150 = pneg %p75
        $region22: #{tpu_custom_call.1} parent=15 // pred_check_branch
          %152 = sbr.rel (%p150) target = $region24
        $region23: #{tpu_custom_call.1} parent=15 // pred_region
          %s153 = sand.u32 %s65, 1
          %s154 = scalar_lea.sflag [#allocation7], %s153
          %s155 = sand.u32 %s65, 1
          %s156 = smul.addr %s155, 6144
          %s157 = scalar_lea.vmem [#allocation6], %s156
          %s158 = smul.u32 128, %s23
          %s160 = ssub.s32 98304, 98304
          %161 = vsyncadd %s154, %s160
          %s162 = smul.addr %s158, 12
          %s163 = smul.addr %s162, 64
          %s164 = scalar_lea.hbm %s1, %s163
          %s165 = sshll.u32 %s157, 4
          %s166 = int_to_ptr.vmem [resolvable:$true] %s165
          %171 = dma.hbm_to_vmem [thread:$0]  %s164, 98304, %s166, %s154, 768, 768, 48
        $region24: #{tpu_custom_call.1} parent=15 // pred_fallthru
          _
      $region16: #{tpu_custom_call.1} parent=5 // pred_fallthru
        _
      %p172 = scmp.le.s32.totalorder 1, %s15
      %p173 = scmp.lt.s32.totalorder %s15, 4
      %p174 = pnand %p172, %p173
      %p175 = pneg %p174
      // Predicated region
      $region25: #{tpu_custom_call.1} parent=5 // pred_check
        _
      $region26: #{tpu_custom_call.1} parent=5 // pred_check_branch
        %177 = sbr.rel (%p174) target = $region28
      $region27: #{tpu_custom_call.1} parent=5 // pred_region
        %s178 = ssub.s32 %s15, 1
        %s179 = sand.u32 %s42, 1
        %s180 = scalar_lea.sflag [#allocation4], %s179
        %s181 = sand.u32 %s42, 1
        %s182 = smul.addr %s181, 64
        %s183 = scalar_lea.vmem [#allocation3], %s182
        // Predicated region
        $region29: #{tpu_custom_call.1} parent=27 // pred_check
          %p184 = pneg %p55
        $region30: #{tpu_custom_call.1} parent=27 // pred_check_branch
          %186 = sbr.rel (%p184) target = $region32
        $region31: #{tpu_custom_call.1} parent=27 // pred_region
          %187 = dma.done %s180, 1024
        $region32: #{tpu_custom_call.1} parent=27 // pred_fallthru
          _
        %s188 = sand.u32 %s68, 1
        %s189 = scalar_lea.sflag [#allocation7], %s188
        %s190 = sand.u32 %s68, 1
        %s191 = smul.addr %s190, 6144
        %s192 = scalar_lea.vmem [#allocation6], %s191
        // Predicated region
        $region33: #{tpu_custom_call.1} parent=27 // pred_check
          %p193 = pneg %p81
        $region34: #{tpu_custom_call.1} parent=27 // pred_check_branch
          %195 = sbr.rel (%p193) target = $region36
        $region35: #{tpu_custom_call.1} parent=27 // pred_region
          %196 = dma.done %s189, 98304
        $region36: #{tpu_custom_call.1} parent=27 // pred_fallthru
          _
        %s197 = sand.u32 %s42, 1
        %s198 = scalar_lea.sflag [#allocation4], %s197
        %s199 = sand.u32 %s42, 1
        %s200 = smul.addr %s199, 64
        %s201 = scalar_lea.vmem [#allocation3], %s200
        %p202 = pneg %p55
        %p203 = pneg %p52
        %s204 = sand.u32 %s68, 1
        %s205 = scalar_lea.sflag [#allocation7], %s204
        %s206 = sand.u32 %s68, 1
        %s207 = smul.addr %s206, 6144
        %s208 = scalar_lea.vmem [#allocation6], %s207
        %p209 = pneg %p81
        %p210 = pneg %p78
        %p211 = pneg %p107
        %p212 = pneg %p104
        %s213 = smul.u32 2, %s24
        %s214 = smul.u32 8, %s25
        %s215 = smul.u32 128, %s25
        %s216 = smul.u32 2, %s24
        %p217 = scmp.eq.s32.totalorder %s25, 0
        // Predicated region
        $region37: #{tpu_custom_call.1} parent=27 // pred_check
          %p218 = pneg %p217
        $region38: #{tpu_custom_call.1} parent=27 // pred_check_branch
          %220 = sbr.rel (%p218) target = $region40
        $region39: #{tpu_custom_call.1} parent=27 // pred_region
          %221 = vst [vmem:[#allocation2] sm:$0xff] 0.0
          %222 = vst [vmem:[#allocation2 + $0x8] sm:$0xff] 0.0
          %223 = vst [vmem:[#allocation2 + $0x10] sm:$0xff] 0.0
          %224 = vst [vmem:[#allocation2 + $0x18] sm:$0xff] 0.0
          %225 = vst [vmem:[#allocation2 + $0x20] sm:$0xff] 0.0
          %226 = vst [vmem:[#allocation2 + $0x28] sm:$0xff] 0.0
          %227 = vst [vmem:[#allocation2 + $0x30] sm:$0xff] 0.0
          %228 = vst [vmem:[#allocation2 + $0x38] sm:$0xff] 0.0
          %229 = vst [vmem:[#allocation2 + $0x40] sm:$0xff] 0.0
          %230 = vst [vmem:[#allocation2 + $0x48] sm:$0xff] 0.0
          %231 = vst [vmem:[#allocation2 + $0x50] sm:$0xff] 0.0
          %232 = vst [vmem:[#allocation2 + $0x58] sm:$0xff] 0.0
          %233 = vst [vmem:[#allocation2 + $0x60] sm:$0xff] 0.0
          %234 = vst [vmem:[#allocation2 + $0x68] sm:$0xff] 0.0
          %235 = vst [vmem:[#allocation2 + $0x70] sm:$0xff] 0.0
          %236 = vst [vmem:[#allocation2 + $0x78] sm:$0xff] 0.0
          %237 = vst [vmem:[#allocation2 + $0x80] sm:$0xff] 0.0
          %238 = vst [vmem:[#allocation2 + $0x88] sm:$0xff] 0.0
          %239 = vst [vmem:[#allocation2 + $0x90] sm:$0xff] 0.0
          %240 = vst [vmem:[#allocation2 + $0x98] sm:$0xff] 0.0
          %241 = vst [vmem:[#allocation2 + $0xa0] sm:$0xff] 0.0
          %242 = vst [vmem:[#allocation2 + $0xa8] sm:$0xff] 0.0
          %243 = vst [vmem:[#allocation2 + $0xb0] sm:$0xff] 0.0
          %244 = vst [vmem:[#allocation2 + $0xb8] sm:$0xff] 0.0
        $region40: #{tpu_custom_call.1} parent=27 // pred_fallthru
          _
        %v245 = vld [vmem:[#allocation2] sm:$0xff]
        %v246 = vld [vmem:[#allocation2 + $0x8] sm:$0xff]
        %v247 = vld [vmem:[#allocation2 + $0x10] sm:$0xff]
        %v248 = vld [vmem:[#allocation2 + $0x18] sm:$0xff]
        %v249 = vld [vmem:[#allocation2 + $0x20] sm:$0xff]
        %v250 = vld [vmem:[#allocation2 + $0x28] sm:$0xff]
        %v251 = vld [vmem:[#allocation2 + $0x30] sm:$0xff]
        %v252 = vld [vmem:[#allocation2 + $0x38] sm:$0xff]
        %v253 = vld [vmem:[#allocation2 + $0x40] sm:$0xff]
        %v254 = vld [vmem:[#allocation2 + $0x48] sm:$0xff]
        %v255 = vld [vmem:[#allocation2 + $0x50] sm:$0xff]
        %v256 = vld [vmem:[#allocation2 + $0x58] sm:$0xff]
        %v257 = vld [vmem:[#allocation2 + $0x60] sm:$0xff]
        %v258 = vld [vmem:[#allocation2 + $0x68] sm:$0xff]
        %v259 = vld [vmem:[#allocation2 + $0x70] sm:$0xff]
        %v260 = vld [vmem:[#allocation2 + $0x78] sm:$0xff]
        %v261 = vld [vmem:[#allocation2 + $0x80] sm:$0xff]
        %v262 = vld [vmem:[#allocation2 + $0x88] sm:$0xff]
        %v263 = vld [vmem:[#allocation2 + $0x90] sm:$0xff]
        %v264 = vld [vmem:[#allocation2 + $0x98] sm:$0xff]
        %v265 = vld [vmem:[#allocation2 + $0xa0] sm:$0xff]
        %v266 = vld [vmem:[#allocation2 + $0xa8] sm:$0xff]
        %v267 = vld [vmem:[#allocation2 + $0xb0] sm:$0xff]
        %v268 = vld [vmem:[#allocation2 + $0xb8] sm:$0xff]
        %v269 = vld [vmem:[%s183] sm:$0xff]
        %v270 = vld [vmem:[%s183 + $0x8] sm:$0xff]
        %v271 = vld [vmem:[%s183 + $0x10] sm:$0xff]
        %v272 = vld [vmem:[%s183 + $0x18] sm:$0xff]
        %v273 = vld [vmem:[%s183 + $0x20] sm:$0xff]
        %v274 = vld [vmem:[%s183 + $0x28] sm:$0xff]
        %v275 = vld [vmem:[%s183 + $0x30] sm:$0xff]
        %v276 = vld [vmem:[%s183 + $0x38] sm:$0xff]
        %v277 = vld [vmem:[%s192] sm:$0xff]
        %v278 = vld [vmem:[%s192 + $0x8] sm:$0xff]
        %v279 = vld [vmem:[%s192 + $0x10] sm:$0xff]
        %v280 = vld [vmem:[%s192 + $0x18] sm:$0xff]
        %v281 = vld [vmem:[%s192 + $0x20] sm:$0xff]
        %v282 = vld [vmem:[%s192 + $0x28] sm:$0xff]
        %v283 = vld [vmem:[%s192 + $0x30] sm:$0xff]
        %v284 = vld [vmem:[%s192 + $0x38] sm:$0xff]
        %v285 = vld [vmem:[%s192 + $0x40] sm:$0xff]
        %v286 = vld [vmem:[%s192 + $0x48] sm:$0xff]
        %v287 = vld [vmem:[%s192 + $0x50] sm:$0xff]
        %v288 = vld [vmem:[%s192 + $0x58] sm:$0xff]
        %v289 = vld [vmem:[%s192 + $0x60] sm:$0xff]
        %v290 = vld [vmem:[%s192 + $0x68] sm:$0xff]
        %v291 = vld [vmem:[%s192 + $0x70] sm:$0xff]
        %v292 = vld [vmem:[%s192 + $0x78] sm:$0xff]
        %v293 = vld [vmem:[%s192 + $0x80] sm:$0xff]
        %v294 = vld [vmem:[%s192 + $0x88] sm:$0xff]
        %v295 = vld [vmem:[%s192 + $0x90] sm:$0xff]
        %v296 = vld [vmem:[%s192 + $0x98] sm:$0xff]
        %v297 = vld [vmem:[%s192 + $0xa0] sm:$0xff]
        %v298 = vld [vmem:[%s192 + $0xa8] sm:$0xff]
        %v299 = vld [vmem:[%s192 + $0xb0] sm:$0xff]
        %v300 = vld [vmem:[%s192 + $0xb8] sm:$0xff]
        %v301 = vld [vmem:[%s192 + $0xc0] sm:$0xff]
        %v302 = vld [vmem:[%s192 + $0xc8] sm:$0xff]
        %v303 = vld [vmem:[%s192 + $0xd0] sm:$0xff]
        %v304 = vld [vmem:[%s192 + $0xd8] sm:$0xff]
        %v305 = vld [vmem:[%s192 + $0xe0] sm:$0xff]
        %v306 = vld [vmem:[%s192 + $0xe8] sm:$0xff]
        %v307 = vld [vmem:[%s192 + $0xf0] sm:$0xff]
        %v308 = vld [vmem:[%s192 + $0xf8] sm:$0xff]
        %v309 = vld [vmem:[%s192 + $0x100] sm:$0xff]
        %v310 = vld [vmem:[%s192 + $0x108] sm:$0xff]
        %v311 = vld [vmem:[%s192 + $0x110] sm:$0xff]
        %v312 = vld [vmem:[%s192 + $0x118] sm:$0xff]
        %v313 = vld [vmem:[%s192 + $0x120] sm:$0xff]
        %v314 = vld [vmem:[%s192 + $0x128] sm:$0xff]
        %v315 = vld [vmem:[%s192 + $0x130] sm:$0xff]
        %v316 = vld [vmem:[%s192 + $0x138] sm:$0xff]
        %v317 = vld [vmem:[%s192 + $0x140] sm:$0xff]
        %v318 = vld [vmem:[%s192 + $0x148] sm:$0xff]
        %v319 = vld [vmem:[%s192 + $0x150] sm:$0xff]
        %v320 = vld [vmem:[%s192 + $0x158] sm:$0xff]
        %v321 = vld [vmem:[%s192 + $0x160] sm:$0xff]
        %v322 = vld [vmem:[%s192 + $0x168] sm:$0xff]
        %v323 = vld [vmem:[%s192 + $0x170] sm:$0xff]
        %v324 = vld [vmem:[%s192 + $0x178] sm:$0xff]
        %v325 = vld [vmem:[%s192 + $0x180] sm:$0xff]
        %v326 = vld [vmem:[%s192 + $0x188] sm:$0xff]
        %v327 = vld [vmem:[%s192 + $0x190] sm:$0xff]
        %v328 = vld [vmem:[%s192 + $0x198] sm:$0xff]
        %v329 = vld [vmem:[%s192 + $0x1a0] sm:$0xff]
        %v330 = vld [vmem:[%s192 + $0x1a8] sm:$0xff]
        %v331 = vld [vmem:[%s192 + $0x1b0] sm:$0xff]
        %v332 = vld [vmem:[%s192 + $0x1b8] sm:$0xff]
        %v333 = vld [vmem:[%s192 + $0x1c0] sm:$0xff]
        %v334 = vld [vmem:[%s192 + $0x1c8] sm:$0xff]
        %v335 = vld [vmem:[%s192 + $0x1d0] sm:$0xff]
        %v336 = vld [vmem:[%s192 + $0x1d8] sm:$0xff]
        %v337 = vld [vmem:[%s192 + $0x1e0] sm:$0xff]
        %v338 = vld [vmem:[%s192 + $0x1e8] sm:$0xff]
        %v339 = vld [vmem:[%s192 + $0x1f0] sm:$0xff]
        %v340 = vld [vmem:[%s192 + $0x1f8] sm:$0xff]
        %v341 = vld [vmem:[%s192 + $0x200] sm:$0xff]
        %v342 = vld [vmem:[%s192 + $0x208] sm:$0xff]
        %v343 = vld [vmem:[%s192 + $0x210] sm:$0xff]
        %v344 = vld [vmem:[%s192 + $0x218] sm:$0xff]
        %v345 = vld [vmem:[%s192 + $0x220] sm:$0xff]
        %v346 = vld [vmem:[%s192 + $0x228] sm:$0xff]
        %v347 = vld [vmem:[%s192 + $0x230] sm:$0xff]
        %v348 = vld [vmem:[%s192 + $0x238] sm:$0xff]
        %v349 = vld [vmem:[%s192 + $0x240] sm:$0xff]
        %v350 = vld [vmem:[%s192 + $0x248] sm:$0xff]
        %v351 = vld [vmem:[%s192 + $0x250] sm:$0xff]
        %v352 = vld [vmem:[%s192 + $0x258] sm:$0xff]
        %v353 = vld [vmem:[%s192 + $0x260] sm:$0xff]
        %v354 = vld [vmem:[%s192 + $0x268] sm:$0xff]
        %v355 = vld [vmem:[%s192 + $0x270] sm:$0xff]
        %v356 = vld [vmem:[%s192 + $0x278] sm:$0xff]
        %v357 = vld [vmem:[%s192 + $0x280] sm:$0xff]
        %v358 = vld [vmem:[%s192 + $0x288] sm:$0xff]
        %v359 = vld [vmem:[%s192 + $0x290] sm:$0xff]
        %v360 = vld [vmem:[%s192 + $0x298] sm:$0xff]
        %v361 = vld [vmem:[%s192 + $0x2a0] sm:$0xff]
        %v362 = vld [vmem:[%s192 + $0x2a8] sm:$0xff]
        %v363 = vld [vmem:[%s192 + $0x2b0] sm:$0xff]
        %v364 = vld [vmem:[%s192 + $0x2b8] sm:$0xff]
        %v365 = vld [vmem:[%s192 + $0x2c0] sm:$0xff]
        %v366 = vld [vmem:[%s192 + $0x2c8] sm:$0xff]
        %v367 = vld [vmem:[%s192 + $0x2d0] sm:$0xff]
        %v368 = vld [vmem:[%s192 + $0x2d8] sm:$0xff]
        %v369 = vld [vmem:[%s192 + $0x2e0] sm:$0xff]
        %v370 = vld [vmem:[%s192 + $0x2e8] sm:$0xff]
        %v371 = vld [vmem:[%s192 + $0x2f0] sm:$0xff]
        %v372 = vld [vmem:[%s192 + $0x2f8] sm:$0xff]
        %v373 = vld [vmem:[%s192 + $0x300] sm:$0xff]
        %v374 = vld [vmem:[%s192 + $0x308] sm:$0xff]
        %v375 = vld [vmem:[%s192 + $0x310] sm:$0xff]
        %v376 = vld [vmem:[%s192 + $0x318] sm:$0xff]
        %v377 = vld [vmem:[%s192 + $0x320] sm:$0xff]
        %v378 = vld [vmem:[%s192 + $0x328] sm:$0xff]
        %v379 = vld [vmem:[%s192 + $0x330] sm:$0xff]
        %v380 = vld [vmem:[%s192 + $0x338] sm:$0xff]
        %v381 = vld [vmem:[%s192 + $0x340] sm:$0xff]
        %v382 = vld [vmem:[%s192 + $0x348] sm:$0xff]
        %v383 = vld [vmem:[%s192 + $0x350] sm:$0xff]
        %v384 = vld [vmem:[%s192 + $0x358] sm:$0xff]
        %v385 = vld [vmem:[%s192 + $0x360] sm:$0xff]
        %v386 = vld [vmem:[%s192 + $0x368] sm:$0xff]
        %v387 = vld [vmem:[%s192 + $0x370] sm:$0xff]
        %v388 = vld [vmem:[%s192 + $0x378] sm:$0xff]
        %v389 = vld [vmem:[%s192 + $0x380] sm:$0xff]
        %v390 = vld [vmem:[%s192 + $0x388] sm:$0xff]
        %v391 = vld [vmem:[%s192 + $0x390] sm:$0xff]
        %v392 = vld [vmem:[%s192 + $0x398] sm:$0xff]
        %v393 = vld [vmem:[%s192 + $0x3a0] sm:$0xff]
        %v394 = vld [vmem:[%s192 + $0x3a8] sm:$0xff]
        %v395 = vld [vmem:[%s192 + $0x3b0] sm:$0xff]
        %v396 = vld [vmem:[%s192 + $0x3b8] sm:$0xff]
        %v397 = vld [vmem:[%s192 + $0x3c0] sm:$0xff]
        %v398 = vld [vmem:[%s192 + $0x3c8] sm:$0xff]
        %v399 = vld [vmem:[%s192 + $0x3d0] sm:$0xff]
        %v400 = vld [vmem:[%s192 + $0x3d8] sm:$0xff]
        %v401 = vld [vmem:[%s192 + $0x3e0] sm:$0xff]
        %v402 = vld [vmem:[%s192 + $0x3e8] sm:$0xff]
        %v403 = vld [vmem:[%s192 + $0x3f0] sm:$0xff]
        %v404 = vld [vmem:[%s192 + $0x3f8] sm:$0xff]
        %v405 = vld [vmem:[%s192 + $0x400] sm:$0xff]
        %v406 = vld [vmem:[%s192 + $0x408] sm:$0xff]
        %v407 = vld [vmem:[%s192 + $0x410] sm:$0xff]
        %v408 = vld [vmem:[%s192 + $0x418] sm:$0xff]
        %v409 = vld [vmem:[%s192 + $0x420] sm:$0xff]
        %v410 = vld [vmem:[%s192 + $0x428] sm:$0xff]
        %v411 = vld [vmem:[%s192 + $0x430] sm:$0xff]
        %v412 = vld [vmem:[%s192 + $0x438] sm:$0xff]
        %v413 = vld [vmem:[%s192 + $0x440] sm:$0xff]
        %v414 = vld [vmem:[%s192 + $0x448] sm:$0xff]
        %v415 = vld [vmem:[%s192 + $0x450] sm:$0xff]
        %v416 = vld [vmem:[%s192 + $0x458] sm:$0xff]
        %v417 = vld [vmem:[%s192 + $0x460] sm:$0xff]
        %v418 = vld [vmem:[%s192 + $0x468] sm:$0xff]
        %v419 = vld [vmem:[%s192 + $0x470] sm:$0xff]
        %v420 = vld [vmem:[%s192 + $0x478] sm:$0xff]
        %v421 = vld [vmem:[%s192 + $0x480] sm:$0xff]
        %v422 = vld [vmem:[%s192 + $0x488] sm:$0xff]
        %v423 = vld [vmem:[%s192 + $0x490] sm:$0xff]
        %v424 = vld [vmem:[%s192 + $0x498] sm:$0xff]
        %v425 = vld [vmem:[%s192 + $0x4a0] sm:$0xff]
        %v426 = vld [vmem:[%s192 + $0x4a8] sm:$0xff]
        %v427 = vld [vmem:[%s192 + $0x4b0] sm:$0xff]
        %v428 = vld [vmem:[%s192 + $0x4b8] sm:$0xff]
        %v429 = vld [vmem:[%s192 + $0x4c0] sm:$0xff]
        %v430 = vld [vmem:[%s192 + $0x4c8] sm:$0xff]
        %v431 = vld [vmem:[%s192 + $0x4d0] sm:$0xff]
        %v432 = vld [vmem:[%s192 + $0x4d8] sm:$0xff]
        %v433 = vld [vmem:[%s192 + $0x4e0] sm:$0xff]
        %v434 = vld [vmem:[%s192 + $0x4e8] sm:$0xff]
        %v435 = vld [vmem:[%s192 + $0x4f0] sm:$0xff]
        %v436 = vld [vmem:[%s192 + $0x4f8] sm:$0xff]
        %v437 = vld [vmem:[%s192 + $0x500] sm:$0xff]
        %v438 = vld [vmem:[%s192 + $0x508] sm:$0xff]
        %v439 = vld [vmem:[%s192 + $0x510] sm:$0xff]
        %v440 = vld [vmem:[%s192 + $0x518] sm:$0xff]
        %v441 = vld [vmem:[%s192 + $0x520] sm:$0xff]
        %v442 = vld [vmem:[%s192 + $0x528] sm:$0xff]
        %v443 = vld [vmem:[%s192 + $0x530] sm:$0xff]
        %v444 = vld [vmem:[%s192 + $0x538] sm:$0xff]
        %v445 = vld [vmem:[%s192 + $0x540] sm:$0xff]
        %v446 = vld [vmem:[%s192 + $0x548] sm:$0xff]
        %v447 = vld [vmem:[%s192 + $0x550] sm:$0xff]
        %v448 = vld [vmem:[%s192 + $0x558] sm:$0xff]
        %v449 = vld [vmem:[%s192 + $0x560] sm:$0xff]
        %v450 = vld [vmem:[%s192 + $0x568] sm:$0xff]
        %v451 = vld [vmem:[%s192 + $0x570] sm:$0xff]
        %v452 = vld [vmem:[%s192 + $0x578] sm:$0xff]
        %v453 = vld [vmem:[%s192 + $0x580] sm:$0xff]
        %v454 = vld [vmem:[%s192 + $0x588] sm:$0xff]
        %v455 = vld [vmem:[%s192 + $0x590] sm:$0xff]
        %v456 = vld [vmem:[%s192 + $0x598] sm:$0xff]
        %v457 = vld [vmem:[%s192 + $0x5a0] sm:$0xff]
        %v458 = vld [vmem:[%s192 + $0x5a8] sm:$0xff]
        %v459 = vld [vmem:[%s192 + $0x5b0] sm:$0xff]
        %v460 = vld [vmem:[%s192 + $0x5b8] sm:$0xff]
        %v461 = vld [vmem:[%s192 + $0x5c0] sm:$0xff]
        %v462 = vld [vmem:[%s192 + $0x5c8] sm:$0xff]
        %v463 = vld [vmem:[%s192 + $0x5d0] sm:$0xff]
        %v464 = vld [vmem:[%s192 + $0x5d8] sm:$0xff]
        %v465 = vld [vmem:[%s192 + $0x5e0] sm:$0xff]
        %v466 = vld [vmem:[%s192 + $0x5e8] sm:$0xff]
        %v467 = vld [vmem:[%s192 + $0x5f0] sm:$0xff]
        %v468 = vld [vmem:[%s192 + $0x5f8] sm:$0xff]
        %v469 = vld [vmem:[%s192 + $0x600] sm:$0xff]
        %v470 = vld [vmem:[%s192 + $0x608] sm:$0xff]
        %v471 = vld [vmem:[%s192 + $0x610] sm:$0xff]
        %v472 = vld [vmem:[%s192 + $0x618] sm:$0xff]
        %v473 = vld [vmem:[%s192 + $0x620] sm:$0xff]
        %v474 = vld [vmem:[%s192 + $0x628] sm:$0xff]
        %v475 = vld [vmem:[%s192 + $0x630] sm:$0xff]
        %v476 = vld [vmem:[%s192 + $0x638] sm:$0xff]
        %v477 = vld [vmem:[%s192 + $0x640] sm:$0xff]
        %v478 = vld [vmem:[%s192 + $0x648] sm:$0xff]
        %v479 = vld [vmem:[%s192 + $0x650] sm:$0xff]
        %v480 = vld [vmem:[%s192 + $0x658] sm:$0xff]
        %v481 = vld [vmem:[%s192 + $0x660] sm:$0xff]
        %v482 = vld [vmem:[%s192 + $0x668] sm:$0xff]
        %v483 = vld [vmem:[%s192 + $0x670] sm:$0xff]
        %v484 = vld [vmem:[%s192 + $0x678] sm:$0xff]
        %v485 = vld [vmem:[%s192 + $0x680] sm:$0xff]
        %v486 = vld [vmem:[%s192 + $0x688] sm:$0xff]
        %v487 = vld [vmem:[%s192 + $0x690] sm:$0xff]
        %v488 = vld [vmem:[%s192 + $0x698] sm:$0xff]
        %v489 = vld [vmem:[%s192 + $0x6a0] sm:$0xff]
        %v490 = vld [vmem:[%s192 + $0x6a8] sm:$0xff]
        %v491 = vld [vmem:[%s192 + $0x6b0] sm:$0xff]
        %v492 = vld [vmem:[%s192 + $0x6b8] sm:$0xff]
        %v493 = vld [vmem:[%s192 + $0x6c0] sm:$0xff]
        %v494 = vld [vmem:[%s192 + $0x6c8] sm:$0xff]
        %v495 = vld [vmem:[%s192 + $0x6d0] sm:$0xff]
        %v496 = vld [vmem:[%s192 + $0x6d8] sm:$0xff]
        %v497 = vld [vmem:[%s192 + $0x6e0] sm:$0xff]
        %v498 = vld [vmem:[%s192 + $0x6e8] sm:$0xff]
        %v499 = vld [vmem:[%s192 + $0x6f0] sm:$0xff]
        %v500 = vld [vmem:[%s192 + $0x6f8] sm:$0xff]
        %v501 = vld [vmem:[%s192 + $0x700] sm:$0xff]
        %v502 = vld [vmem:[%s192 + $0x708] sm:$0xff]
        %v503 = vld [vmem:[%s192 + $0x710] sm:$0xff]
        %v504 = vld [vmem:[%s192 + $0x718] sm:$0xff]
        %v505 = vld [vmem:[%s192 + $0x720] sm:$0xff]
        %v506 = vld [vmem:[%s192 + $0x728] sm:$0xff]
        %v507 = vld [vmem:[%s192 + $0x730] sm:$0xff]
        %v508 = vld [vmem:[%s192 + $0x738] sm:$0xff]
        %v509 = vld [vmem:[%s192 + $0x740] sm:$0xff]
        %v510 = vld [vmem:[%s192 + $0x748] sm:$0xff]
        %v511 = vld [vmem:[%s192 + $0x750] sm:$0xff]
        %v512 = vld [vmem:[%s192 + $0x758] sm:$0xff]
        %v513 = vld [vmem:[%s192 + $0x760] sm:$0xff]
        %v514 = vld [vmem:[%s192 + $0x768] sm:$0xff]
        %v515 = vld [vmem:[%s192 + $0x770] sm:$0xff]
        %v516 = vld [vmem:[%s192 + $0x778] sm:$0xff]
        %v517 = vld [vmem:[%s192 + $0x780] sm:$0xff]
        %v518 = vld [vmem:[%s192 + $0x788] sm:$0xff]
        %v519 = vld [vmem:[%s192 + $0x790] sm:$0xff]
        %v520 = vld [vmem:[%s192 + $0x798] sm:$0xff]
        %v521 = vld [vmem:[%s192 + $0x7a0] sm:$0xff]
        %v522 = vld [vmem:[%s192 + $0x7a8] sm:$0xff]
        %v523 = vld [vmem:[%s192 + $0x7b0] sm:$0xff]
        %v524 = vld [vmem:[%s192 + $0x7b8] sm:$0xff]
        %v525 = vld [vmem:[%s192 + $0x7c0] sm:$0xff]
        %v526 = vld [vmem:[%s192 + $0x7c8] sm:$0xff]
        %v527 = vld [vmem:[%s192 + $0x7d0] sm:$0xff]
        %v528 = vld [vmem:[%s192 + $0x7d8] sm:$0xff]
        %v529 = vld [vmem:[%s192 + $0x7e0] sm:$0xff]
        %v530 = vld [vmem:[%s192 + $0x7e8] sm:$0xff]
        %v531 = vld [vmem:[%s192 + $0x7f0] sm:$0xff]
        %v532 = vld [vmem:[%s192 + $0x7f8] sm:$0xff]
        %v533 = vld [vmem:[%s192 + $0x800] sm:$0xff]
        %v534 = vld [vmem:[%s192 + $0x808] sm:$0xff]
        %v535 = vld [vmem:[%s192 + $0x810] sm:$0xff]
        %v536 = vld [vmem:[%s192 + $0x818] sm:$0xff]
        %v537 = vld [vmem:[%s192 + $0x820] sm:$0xff]
        %v538 = vld [vmem:[%s192 + $0x828] sm:$0xff]
        %v539 = vld [vmem:[%s192 + $0x830] sm:$0xff]
        %v540 = vld [vmem:[%s192 + $0x838] sm:$0xff]
        %v541 = vld [vmem:[%s192 + $0x840] sm:$0xff]
        %v542 = vld [vmem:[%s192 + $0x848] sm:$0xff]
        %v543 = vld [vmem:[%s192 + $0x850] sm:$0xff]
        %v544 = vld [vmem:[%s192 + $0x858] sm:$0xff]
        %v545 = vld [vmem:[%s192 + $0x860] sm:$0xff]
        %v546 = vld [vmem:[%s192 + $0x868] sm:$0xff]
        %v547 = vld [vmem:[%s192 + $0x870] sm:$0xff]
        %v548 = vld [vmem:[%s192 + $0x878] sm:$0xff]
        %v549 = vld [vmem:[%s192 + $0x880] sm:$0xff]
        %v550 = vld [vmem:[%s192 + $0x888] sm:$0xff]
        %v551 = vld [vmem:[%s192 + $0x890] sm:$0xff]
        %v552 = vld [vmem:[%s192 + $0x898] sm:$0xff]
        %v553 = vld [vmem:[%s192 + $0x8a0] sm:$0xff]
        %v554 = vld [vmem:[%s192 + $0x8a8] sm:$0xff]
        %v555 = vld [vmem:[%s192 + $0x8b0] sm:$0xff]
        %v556 = vld [vmem:[%s192 + $0x8b8] sm:$0xff]
        %v557 = vld [vmem:[%s192 + $0x8c0] sm:$0xff]
        %v558 = vld [vmem:[%s192 + $0x8c8] sm:$0xff]
        %v559 = vld [vmem:[%s192 + $0x8d0] sm:$0xff]
        %v560 = vld [vmem:[%s192 + $0x8d8] sm:$0xff]
        %v561 = vld [vmem:[%s192 + $0x8e0] sm:$0xff]
        %v562 = vld [vmem:[%s192 + $0x8e8] sm:$0xff]
        %v563 = vld [vmem:[%s192 + $0x8f0] sm:$0xff]
        %v564 = vld [vmem:[%s192 + $0x8f8] sm:$0xff]
        %v565 = vld [vmem:[%s192 + $0x900] sm:$0xff]
        %v566 = vld [vmem:[%s192 + $0x908] sm:$0xff]
        %v567 = vld [vmem:[%s192 + $0x910] sm:$0xff]
        %v568 = vld [vmem:[%s192 + $0x918] sm:$0xff]
        %v569 = vld [vmem:[%s192 + $0x920] sm:$0xff]
        %v570 = vld [vmem:[%s192 + $0x928] sm:$0xff]
        %v571 = vld [vmem:[%s192 + $0x930] sm:$0xff]
        %v572 = vld [vmem:[%s192 + $0x938] sm:$0xff]
        %v573 = vld [vmem:[%s192 + $0x940] sm:$0xff]
        %v574 = vld [vmem:[%s192 + $0x948] sm:$0xff]
        %v575 = vld [vmem:[%s192 + $0x950] sm:$0xff]
        %v576 = vld [vmem:[%s192 + $0x958] sm:$0xff]
        %v577 = vld [vmem:[%s192 + $0x960] sm:$0xff]
        %v578 = vld [vmem:[%s192 + $0x968] sm:$0xff]
        %v579 = vld [vmem:[%s192 + $0x970] sm:$0xff]
        %v580 = vld [vmem:[%s192 + $0x978] sm:$0xff]
        %v581 = vld [vmem:[%s192 + $0x980] sm:$0xff]
        %v582 = vld [vmem:[%s192 + $0x988] sm:$0xff]
        %v583 = vld [vmem:[%s192 + $0x990] sm:$0xff]
        %v584 = vld [vmem:[%s192 + $0x998] sm:$0xff]
        %v585 = vld [vmem:[%s192 + $0x9a0] sm:$0xff]
        %v586 = vld [vmem:[%s192 + $0x9a8] sm:$0xff]
        %v587 = vld [vmem:[%s192 + $0x9b0] sm:$0xff]
        %v588 = vld [vmem:[%s192 + $0x9b8] sm:$0xff]
        %v589 = vld [vmem:[%s192 + $0x9c0] sm:$0xff]
        %v590 = vld [vmem:[%s192 + $0x9c8] sm:$0xff]
        %v591 = vld [vmem:[%s192 + $0x9d0] sm:$0xff]
        %v592 = vld [vmem:[%s192 + $0x9d8] sm:$0xff]
        %v593 = vld [vmem:[%s192 + $0x9e0] sm:$0xff]
        %v594 = vld [vmem:[%s192 + $0x9e8] sm:$0xff]
        %v595 = vld [vmem:[%s192 + $0x9f0] sm:$0xff]
        %v596 = vld [vmem:[%s192 + $0x9f8] sm:$0xff]
        %v597 = vld [vmem:[%s192 + $0xa00] sm:$0xff]
        %v598 = vld [vmem:[%s192 + $0xa08] sm:$0xff]
        %v599 = vld [vmem:[%s192 + $0xa10] sm:$0xff]
        %v600 = vld [vmem:[%s192 + $0xa18] sm:$0xff]
        %v601 = vld [vmem:[%s192 + $0xa20] sm:$0xff]
        %v602 = vld [vmem:[%s192 + $0xa28] sm:$0xff]
        %v603 = vld [vmem:[%s192 + $0xa30] sm:$0xff]
        %v604 = vld [vmem:[%s192 + $0xa38] sm:$0xff]
        %v605 = vld [vmem:[%s192 + $0xa40] sm:$0xff]
        %v606 = vld [vmem:[%s192 + $0xa48] sm:$0xff]
        %v607 = vld [vmem:[%s192 + $0xa50] sm:$0xff]
        %v608 = vld [vmem:[%s192 + $0xa58] sm:$0xff]
        %v609 = vld [vmem:[%s192 + $0xa60] sm:$0xff]
        %v610 = vld [vmem:[%s192 + $0xa68] sm:$0xff]
        %v611 = vld [vmem:[%s192 + $0xa70] sm:$0xff]
        %v612 = vld [vmem:[%s192 + $0xa78] sm:$0xff]
        %v613 = vld [vmem:[%s192 + $0xa80] sm:$0xff]
        %v614 = vld [vmem:[%s192 + $0xa88] sm:$0xff]
        %v615 = vld [vmem:[%s192 + $0xa90] sm:$0xff]
        %v616 = vld [vmem:[%s192 + $0xa98] sm:$0xff]
        %v617 = vld [vmem:[%s192 + $0xaa0] sm:$0xff]
        %v618 = vld [vmem:[%s192 + $0xaa8] sm:$0xff]
        %v619 = vld [vmem:[%s192 + $0xab0] sm:$0xff]
        %v620 = vld [vmem:[%s192 + $0xab8] sm:$0xff]
        %v621 = vld [vmem:[%s192 + $0xac0] sm:$0xff]
        %v622 = vld [vmem:[%s192 + $0xac8] sm:$0xff]
        %v623 = vld [vmem:[%s192 + $0xad0] sm:$0xff]
        %v624 = vld [vmem:[%s192 + $0xad8] sm:$0xff]
        %v625 = vld [vmem:[%s192 + $0xae0] sm:$0xff]
        %v626 = vld [vmem:[%s192 + $0xae8] sm:$0xff]
        %v627 = vld [vmem:[%s192 + $0xaf0] sm:$0xff]
        %v628 = vld [vmem:[%s192 + $0xaf8] sm:$0xff]
        %v629 = vld [vmem:[%s192 + $0xb00] sm:$0xff]
        %v630 = vld [vmem:[%s192 + $0xb08] sm:$0xff]
        %v631 = vld [vmem:[%s192 + $0xb10] sm:$0xff]
        %v632 = vld [vmem:[%s192 + $0xb18] sm:$0xff]
        %v633 = vld [vmem:[%s192 + $0xb20] sm:$0xff]
        %v634 = vld [vmem:[%s192 + $0xb28] sm:$0xff]
        %v635 = vld [vmem:[%s192 + $0xb30] sm:$0xff]
        %v636 = vld [vmem:[%s192 + $0xb38] sm:$0xff]
        %v637 = vld [vmem:[%s192 + $0xb40] sm:$0xff]
        %v638 = vld [vmem:[%s192 + $0xb48] sm:$0xff]
        %v639 = vld [vmem:[%s192 + $0xb50] sm:$0xff]
        %v640 = vld [vmem:[%s192 + $0xb58] sm:$0xff]
        %v641 = vld [vmem:[%s192 + $0xb60] sm:$0xff]
        %v642 = vld [vmem:[%s192 + $0xb68] sm:$0xff]
        %v643 = vld [vmem:[%s192 + $0xb70] sm:$0xff]
        %v644 = vld [vmem:[%s192 + $0xb78] sm:$0xff]
        %v645 = vld [vmem:[%s192 + $0xb80] sm:$0xff]
        %v646 = vld [vmem:[%s192 + $0xb88] sm:$0xff]
        %v647 = vld [vmem:[%s192 + $0xb90] sm:$0xff]
        %v648 = vld [vmem:[%s192 + $0xb98] sm:$0xff]
        %v649 = vld [vmem:[%s192 + $0xba0] sm:$0xff]
        %v650 = vld [vmem:[%s192 + $0xba8] sm:$0xff]
        %v651 = vld [vmem:[%s192 + $0xbb0] sm:$0xff]
        %v652 = vld [vmem:[%s192 + $0xbb8] sm:$0xff]
        %v653 = vld [vmem:[%s192 + $0xbc0] sm:$0xff]
        %v654 = vld [vmem:[%s192 + $0xbc8] sm:$0xff]
        %v655 = vld [vmem:[%s192 + $0xbd0] sm:$0xff]
        %v656 = vld [vmem:[%s192 + $0xbd8] sm:$0xff]
        %v657 = vld [vmem:[%s192 + $0xbe0] sm:$0xff]
        %v658 = vld [vmem:[%s192 + $0xbe8] sm:$0xff]
        %v659 = vld [vmem:[%s192 + $0xbf0] sm:$0xff]
        %v660 = vld [vmem:[%s192 + $0xbf8] sm:$0xff]
        %v661 = vld [vmem:[%s192 + $0xc00] sm:$0xff]
        %v662 = vld [vmem:[%s192 + $0xc08] sm:$0xff]
        %v663 = vld [vmem:[%s192 + $0xc10] sm:$0xff]
        %v664 = vld [vmem:[%s192 + $0xc18] sm:$0xff]
        %v665 = vld [vmem:[%s192 + $0xc20] sm:$0xff]
        %v666 = vld [vmem:[%s192 + $0xc28] sm:$0xff]
        %v667 = vld [vmem:[%s192 + $0xc30] sm:$0xff]
        %v668 = vld [vmem:[%s192 + $0xc38] sm:$0xff]
        %v669 = vld [vmem:[%s192 + $0xc40] sm:$0xff]
        %v670 = vld [vmem:[%s192 + $0xc48] sm:$0xff]
        %v671 = vld [vmem:[%s192 + $0xc50] sm:$0xff]
        %v672 = vld [vmem:[%s192 + $0xc58] sm:$0xff]
        %v673 = vld [vmem:[%s192 + $0xc60] sm:$0xff]
        %v674 = vld [vmem:[%s192 + $0xc68] sm:$0xff]
        %v675 = vld [vmem:[%s192 + $0xc70] sm:$0xff]
        %v676 = vld [vmem:[%s192 + $0xc78] sm:$0xff]
        %v677 = vld [vmem:[%s192 + $0xc80] sm:$0xff]
        %v678 = vld [vmem:[%s192 + $0xc88] sm:$0xff]
        %v679 = vld [vmem:[%s192 + $0xc90] sm:$0xff]
        %v680 = vld [vmem:[%s192 + $0xc98] sm:$0xff]
        %v681 = vld [vmem:[%s192 + $0xca0] sm:$0xff]
        %v682 = vld [vmem:[%s192 + $0xca8] sm:$0xff]
        %v683 = vld [vmem:[%s192 + $0xcb0] sm:$0xff]
        %v684 = vld [vmem:[%s192 + $0xcb8] sm:$0xff]
        %v685 = vld [vmem:[%s192 + $0xcc0] sm:$0xff]
        %v686 = vld [vmem:[%s192 + $0xcc8] sm:$0xff]
        %v687 = vld [vmem:[%s192 + $0xcd0] sm:$0xff]
        %v688 = vld [vmem:[%s192 + $0xcd8] sm:$0xff]
        %v689 = vld [vmem:[%s192 + $0xce0] sm:$0xff]
        %v690 = vld [vmem:[%s192 + $0xce8] sm:$0xff]
        %v691 = vld [vmem:[%s192 + $0xcf0] sm:$0xff]
        %v692 = vld [vmem:[%s192 + $0xcf8] sm:$0xff]
        %v693 = vld [vmem:[%s192 + $0xd00] sm:$0xff]
        %v694 = vld [vmem:[%s192 + $0xd08] sm:$0xff]
        %v695 = vld [vmem:[%s192 + $0xd10] sm:$0xff]
        %v696 = vld [vmem:[%s192 + $0xd18] sm:$0xff]
        %v697 = vld [vmem:[%s192 + $0xd20] sm:$0xff]
        %v698 = vld [vmem:[%s192 + $0xd28] sm:$0xff]
        %v699 = vld [vmem:[%s192 + $0xd30] sm:$0xff]
        %v700 = vld [vmem:[%s192 + $0xd38] sm:$0xff]
        %v701 = vld [vmem:[%s192 + $0xd40] sm:$0xff]
        %v702 = vld [vmem:[%s192 + $0xd48] sm:$0xff]
        %v703 = vld [vmem:[%s192 + $0xd50] sm:$0xff]
        %v704 = vld [vmem:[%s192 + $0xd58] sm:$0xff]
        %v705 = vld [vmem:[%s192 + $0xd60] sm:$0xff]
        %v706 = vld [vmem:[%s192 + $0xd68] sm:$0xff]
        %v707 = vld [vmem:[%s192 + $0xd70] sm:$0xff]
        %v708 = vld [vmem:[%s192 + $0xd78] sm:$0xff]
        %v709 = vld [vmem:[%s192 + $0xd80] sm:$0xff]
        %v710 = vld [vmem:[%s192 + $0xd88] sm:$0xff]
        %v711 = vld [vmem:[%s192 + $0xd90] sm:$0xff]
        %v712 = vld [vmem:[%s192 + $0xd98] sm:$0xff]
        %v713 = vld [vmem:[%s192 + $0xda0] sm:$0xff]
        %v714 = vld [vmem:[%s192 + $0xda8] sm:$0xff]
        %v715 = vld [vmem:[%s192 + $0xdb0] sm:$0xff]
        %v716 = vld [vmem:[%s192 + $0xdb8] sm:$0xff]
        %v717 = vld [vmem:[%s192 + $0xdc0] sm:$0xff]
        %v718 = vld [vmem:[%s192 + $0xdc8] sm:$0xff]
        %v719 = vld [vmem:[%s192 + $0xdd0] sm:$0xff]
        %v720 = vld [vmem:[%s192 + $0xdd8] sm:$0xff]
        %v721 = vld [vmem:[%s192 + $0xde0] sm:$0xff]
        %v722 = vld [vmem:[%s192 + $0xde8] sm:$0xff]
        %v723 = vld [vmem:[%s192 + $0xdf0] sm:$0xff]
        %v724 = vld [vmem:[%s192 + $0xdf8] sm:$0xff]
        %v725 = vld [vmem:[%s192 + $0xe00] sm:$0xff]
        %v726 = vld [vmem:[%s192 + $0xe08] sm:$0xff]
        %v727 = vld [vmem:[%s192 + $0xe10] sm:$0xff]
        %v728 = vld [vmem:[%s192 + $0xe18] sm:$0xff]
        %v729 = vld [vmem:[%s192 + $0xe20] sm:$0xff]
        %v730 = vld [vmem:[%s192 + $0xe28] sm:$0xff]
        %v731 = vld [vmem:[%s192 + $0xe30] sm:$0xff]
        %v732 = vld [vmem:[%s192 + $0xe38] sm:$0xff]
        %v733 = vld [vmem:[%s192 + $0xe40] sm:$0xff]
        %v734 = vld [vmem:[%s192 + $0xe48] sm:$0xff]
        %v735 = vld [vmem:[%s192 + $0xe50] sm:$0xff]
        %v736 = vld [vmem:[%s192 + $0xe58] sm:$0xff]
        %v737 = vld [vmem:[%s192 + $0xe60] sm:$0xff]
        %v738 = vld [vmem:[%s192 + $0xe68] sm:$0xff]
        %v739 = vld [vmem:[%s192 + $0xe70] sm:$0xff]
        %v740 = vld [vmem:[%s192 + $0xe78] sm:$0xff]
        %v741 = vld [vmem:[%s192 + $0xe80] sm:$0xff]
        %v742 = vld [vmem:[%s192 + $0xe88] sm:$0xff]
        %v743 = vld [vmem:[%s192 + $0xe90] sm:$0xff]
        %v744 = vld [vmem:[%s192 + $0xe98] sm:$0xff]
        %v745 = vld [vmem:[%s192 + $0xea0] sm:$0xff]
        %v746 = vld [vmem:[%s192 + $0xea8] sm:$0xff]
        %v747 = vld [vmem:[%s192 + $0xeb0] sm:$0xff]
        %v748 = vld [vmem:[%s192 + $0xeb8] sm:$0xff]
        %v749 = vld [vmem:[%s192 + $0xec0] sm:$0xff]
        %v750 = vld [vmem:[%s192 + $0xec8] sm:$0xff]
        %v751 = vld [vmem:[%s192 + $0xed0] sm:$0xff]
        %v752 = vld [vmem:[%s192 + $0xed8] sm:$0xff]
        %v753 = vld [vmem:[%s192 + $0xee0] sm:$0xff]
        %v754 = vld [vmem:[%s192 + $0xee8] sm:$0xff]
        %v755 = vld [vmem:[%s192 + $0xef0] sm:$0xff]
        %v756 = vld [vmem:[%s192 + $0xef8] sm:$0xff]
        %v757 = vld [vmem:[%s192 + $0xf00] sm:$0xff]
        %v758 = vld [vmem:[%s192 + $0xf08] sm:$0xff]
        %v759 = vld [vmem:[%s192 + $0xf10] sm:$0xff]
        %v760 = vld [vmem:[%s192 + $0xf18] sm:$0xff]
        %v761 = vld [vmem:[%s192 + $0xf20] sm:$0xff]
        %v762 = vld [vmem:[%s192 + $0xf28] sm:$0xff]
        %v763 = vld [vmem:[%s192 + $0xf30] sm:$0xff]
        %v764 = vld [vmem:[%s192 + $0xf38] sm:$0xff]
        %v765 = vld [vmem:[%s192 + $0xf40] sm:$0xff]
        %v766 = vld [vmem:[%s192 + $0xf48] sm:$0xff]
        %v767 = vld [vmem:[%s192 + $0xf50] sm:$0xff]
        %v768 = vld [vmem:[%s192 + $0xf58] sm:$0xff]
        %v769 = vld [vmem:[%s192 + $0xf60] sm:$0xff]
        %v770 = vld [vmem:[%s192 + $0xf68] sm:$0xff]
        %v771 = vld [vmem:[%s192 + $0xf70] sm:$0xff]
        %v772 = vld [vmem:[%s192 + $0xf78] sm:$0xff]
        %v773 = vld [vmem:[%s192 + $0xf80] sm:$0xff]
        %v774 = vld [vmem:[%s192 + $0xf88] sm:$0xff]
        %v775 = vld [vmem:[%s192 + $0xf90] sm:$0xff]
        %v776 = vld [vmem:[%s192 + $0xf98] sm:$0xff]
        %v777 = vld [vmem:[%s192 + $0xfa0] sm:$0xff]
        %v778 = vld [vmem:[%s192 + $0xfa8] sm:$0xff]
        %v779 = vld [vmem:[%s192 + $0xfb0] sm:$0xff]
        %v780 = vld [vmem:[%s192 + $0xfb8] sm:$0xff]
        %v781 = vld [vmem:[%s192 + $0xfc0] sm:$0xff]
        %v782 = vld [vmem:[%s192 + $0xfc8] sm:$0xff]
        %v783 = vld [vmem:[%s192 + $0xfd0] sm:$0xff]
        %v784 = vld [vmem:[%s192 + $0xfd8] sm:$0xff]
        %v785 = vld [vmem:[%s192 + $0xfe0] sm:$0xff]
        %v786 = vld [vmem:[%s192 + $0xfe8] sm:$0xff]
        %v787 = vld [vmem:[%s192 + $0xff0] sm:$0xff]
        %v788 = vld [vmem:[%s192 + $0xff8] sm:$0xff]
        %v789 = vld [vmem:[%s192 + $0x1000] sm:$0xff]
        %v790 = vld [vmem:[%s192 + $0x1008] sm:$0xff]
        %v791 = vld [vmem:[%s192 + $0x1010] sm:$0xff]
        %v792 = vld [vmem:[%s192 + $0x1018] sm:$0xff]
        %v793 = vld [vmem:[%s192 + $0x1020] sm:$0xff]
        %v794 = vld [vmem:[%s192 + $0x1028] sm:$0xff]
        %v795 = vld [vmem:[%s192 + $0x1030] sm:$0xff]
        %v796 = vld [vmem:[%s192 + $0x1038] sm:$0xff]
        %v797 = vld [vmem:[%s192 + $0x1040] sm:$0xff]
        %v798 = vld [vmem:[%s192 + $0x1048] sm:$0xff]
        %v799 = vld [vmem:[%s192 + $0x1050] sm:$0xff]
        %v800 = vld [vmem:[%s192 + $0x1058] sm:$0xff]
        %v801 = vld [vmem:[%s192 + $0x1060] sm:$0xff]
        %v802 = vld [vmem:[%s192 + $0x1068] sm:$0xff]
        %v803 = vld [vmem:[%s192 + $0x1070] sm:$0xff]
        %v804 = vld [vmem:[%s192 + $0x1078] sm:$0xff]
        %v805 = vld [vmem:[%s192 + $0x1080] sm:$0xff]
        %v806 = vld [vmem:[%s192 + $0x1088] sm:$0xff]
        %v807 = vld [vmem:[%s192 + $0x1090] sm:$0xff]
        %v808 = vld [vmem:[%s192 + $0x1098] sm:$0xff]
        %v809 = vld [vmem:[%s192 + $0x10a0] sm:$0xff]
        %v810 = vld [vmem:[%s192 + $0x10a8] sm:$0xff]
        %v811 = vld [vmem:[%s192 + $0x10b0] sm:$0xff]
        %v812 = vld [vmem:[%s192 + $0x10b8] sm:$0xff]
        %v813 = vld [vmem:[%s192 + $0x10c0] sm:$0xff]
        %v814 = vld [vmem:[%s192 + $0x10c8] sm:$0xff]
        %v815 = vld [vmem:[%s192 + $0x10d0] sm:$0xff]
        %v816 = vld [vmem:[%s192 + $0x10d8] sm:$0xff]
        %v817 = vld [vmem:[%s192 + $0x10e0] sm:$0xff]
        %v818 = vld [vmem:[%s192 + $0x10e8] sm:$0xff]
        %v819 = vld [vmem:[%s192 + $0x10f0] sm:$0xff]
        %v820 = vld [vmem:[%s192 + $0x10f8] sm:$0xff]
        %v821 = vld [vmem:[%s192 + $0x1100] sm:$0xff]
        %v822 = vld [vmem:[%s192 + $0x1108] sm:$0xff]
        %v823 = vld [vmem:[%s192 + $0x1110] sm:$0xff]
        %v824 = vld [vmem:[%s192 + $0x1118] sm:$0xff]
        %v825 = vld [vmem:[%s192 + $0x1120] sm:$0xff]
        %v826 = vld [vmem:[%s192 + $0x1128] sm:$0xff]
        %v827 = vld [vmem:[%s192 + $0x1130] sm:$0xff]
        %v828 = vld [vmem:[%s192 + $0x1138] sm:$0xff]
        %v829 = vld [vmem:[%s192 + $0x1140] sm:$0xff]
        %v830 = vld [vmem:[%s192 + $0x1148] sm:$0xff]
        %v831 = vld [vmem:[%s192 + $0x1150] sm:$0xff]
        %v832 = vld [vmem:[%s192 + $0x1158] sm:$0xff]
        %v833 = vld [vmem:[%s192 + $0x1160] sm:$0xff]
        %v834 = vld [vmem:[%s192 + $0x1168] sm:$0xff]
        %v835 = vld [vmem:[%s192 + $0x1170] sm:$0xff]
        %v836 = vld [vmem:[%s192 + $0x1178] sm:$0xff]
        %v837 = vld [vmem:[%s192 + $0x1180] sm:$0xff]
        %v838 = vld [vmem:[%s192 + $0x1188] sm:$0xff]
        %v839 = vld [vmem:[%s192 + $0x1190] sm:$0xff]
        %v840 = vld [vmem:[%s192 + $0x1198] sm:$0xff]
        %v841 = vld [vmem:[%s192 + $0x11a0] sm:$0xff]
        %v842 = vld [vmem:[%s192 + $0x11a8] sm:$0xff]
        %v843 = vld [vmem:[%s192 + $0x11b0] sm:$0xff]
        %v844 = vld [vmem:[%s192 + $0x11b8] sm:$0xff]
        %v845 = vld [vmem:[%s192 + $0x11c0] sm:$0xff]
        %v846 = vld [vmem:[%s192 + $0x11c8] sm:$0xff]
        %v847 = vld [vmem:[%s192 + $0x11d0] sm:$0xff]
        %v848 = vld [vmem:[%s192 + $0x11d8] sm:$0xff]
        %v849 = vld [vmem:[%s192 + $0x11e0] sm:$0xff]
        %v850 = vld [vmem:[%s192 + $0x11e8] sm:$0xff]
        %v851 = vld [vmem:[%s192 + $0x11f0] sm:$0xff]
        %v852 = vld [vmem:[%s192 + $0x11f8] sm:$0xff]
        %v853 = vld [vmem:[%s192 + $0x1200] sm:$0xff]
        %v854 = vld [vmem:[%s192 + $0x1208] sm:$0xff]
        %v855 = vld [vmem:[%s192 + $0x1210] sm:$0xff]
        %v856 = vld [vmem:[%s192 + $0x1218] sm:$0xff]
        %v857 = vld [vmem:[%s192 + $0x1220] sm:$0xff]
        %v858 = vld [vmem:[%s192 + $0x1228] sm:$0xff]
        %v859 = vld [vmem:[%s192 + $0x1230] sm:$0xff]
        %v860 = vld [vmem:[%s192 + $0x1238] sm:$0xff]
        %v861 = vld [vmem:[%s192 + $0x1240] sm:$0xff]
        %v862 = vld [vmem:[%s192 + $0x1248] sm:$0xff]
        %v863 = vld [vmem:[%s192 + $0x1250] sm:$0xff]
        %v864 = vld [vmem:[%s192 + $0x1258] sm:$0xff]
        %v865 = vld [vmem:[%s192 + $0x1260] sm:$0xff]
        %v866 = vld [vmem:[%s192 + $0x1268] sm:$0xff]
        %v867 = vld [vmem:[%s192 + $0x1270] sm:$0xff]
        %v868 = vld [vmem:[%s192 + $0x1278] sm:$0xff]
        %v869 = vld [vmem:[%s192 + $0x1280] sm:$0xff]
        %v870 = vld [vmem:[%s192 + $0x1288] sm:$0xff]
        %v871 = vld [vmem:[%s192 + $0x1290] sm:$0xff]
        %v872 = vld [vmem:[%s192 + $0x1298] sm:$0xff]
        %v873 = vld [vmem:[%s192 + $0x12a0] sm:$0xff]
        %v874 = vld [vmem:[%s192 + $0x12a8] sm:$0xff]
        %v875 = vld [vmem:[%s192 + $0x12b0] sm:$0xff]
        %v876 = vld [vmem:[%s192 + $0x12b8] sm:$0xff]
        %v877 = vld [vmem:[%s192 + $0x12c0] sm:$0xff]
        %v878 = vld [vmem:[%s192 + $0x12c8] sm:$0xff]
        %v879 = vld [vmem:[%s192 + $0x12d0] sm:$0xff]
        %v880 = vld [vmem:[%s192 + $0x12d8] sm:$0xff]
        %v881 = vld [vmem:[%s192 + $0x12e0] sm:$0xff]
        %v882 = vld [vmem:[%s192 + $0x12e8] sm:$0xff]
        %v883 = vld [vmem:[%s192 + $0x12f0] sm:$0xff]
        %v884 = vld [vmem:[%s192 + $0x12f8] sm:$0xff]
        %v885 = vld [vmem:[%s192 + $0x1300] sm:$0xff]
        %v886 = vld [vmem:[%s192 + $0x1308] sm:$0xff]
        %v887 = vld [vmem:[%s192 + $0x1310] sm:$0xff]
        %v888 = vld [vmem:[%s192 + $0x1318] sm:$0xff]
        %v889 = vld [vmem:[%s192 + $0x1320] sm:$0xff]
        %v890 = vld [vmem:[%s192 + $0x1328] sm:$0xff]
        %v891 = vld [vmem:[%s192 + $0x1330] sm:$0xff]
        %v892 = vld [vmem:[%s192 + $0x1338] sm:$0xff]
        %v893 = vld [vmem:[%s192 + $0x1340] sm:$0xff]
        %v894 = vld [vmem:[%s192 + $0x1348] sm:$0xff]
        %v895 = vld [vmem:[%s192 + $0x1350] sm:$0xff]
        %v896 = vld [vmem:[%s192 + $0x1358] sm:$0xff]
        %v897 = vld [vmem:[%s192 + $0x1360] sm:$0xff]
        %v898 = vld [vmem:[%s192 + $0x1368] sm:$0xff]
        %v899 = vld [vmem:[%s192 + $0x1370] sm:$0xff]
        %v900 = vld [vmem:[%s192 + $0x1378] sm:$0xff]
        %v901 = vld [vmem:[%s192 + $0x1380] sm:$0xff]
        %v902 = vld [vmem:[%s192 + $0x1388] sm:$0xff]
        %v903 = vld [vmem:[%s192 + $0x1390] sm:$0xff]
        %v904 = vld [vmem:[%s192 + $0x1398] sm:$0xff]
        %v905 = vld [vmem:[%s192 + $0x13a0] sm:$0xff]
        %v906 = vld [vmem:[%s192 + $0x13a8] sm:$0xff]
        %v907 = vld [vmem:[%s192 + $0x13b0] sm:$0xff]
        %v908 = vld [vmem:[%s192 + $0x13b8] sm:$0xff]
        %v909 = vld [vmem:[%s192 + $0x13c0] sm:$0xff]
        %v910 = vld [vmem:[%s192 + $0x13c8] sm:$0xff]
        %v911 = vld [vmem:[%s192 + $0x13d0] sm:$0xff]
        %v912 = vld [vmem:[%s192 + $0x13d8] sm:$0xff]
        %v913 = vld [vmem:[%s192 + $0x13e0] sm:$0xff]
        %v914 = vld [vmem:[%s192 + $0x13e8] sm:$0xff]
        %v915 = vld [vmem:[%s192 + $0x13f0] sm:$0xff]
        %v916 = vld [vmem:[%s192 + $0x13f8] sm:$0xff]
        %v917 = vld [vmem:[%s192 + $0x1400] sm:$0xff]
        %v918 = vld [vmem:[%s192 + $0x1408] sm:$0xff]
        %v919 = vld [vmem:[%s192 + $0x1410] sm:$0xff]
        %v920 = vld [vmem:[%s192 + $0x1418] sm:$0xff]
        %v921 = vld [vmem:[%s192 + $0x1420] sm:$0xff]
        %v922 = vld [vmem:[%s192 + $0x1428] sm:$0xff]
        %v923 = vld [vmem:[%s192 + $0x1430] sm:$0xff]
        %v924 = vld [vmem:[%s192 + $0x1438] sm:$0xff]
        %v925 = vld [vmem:[%s192 + $0x1440] sm:$0xff]
        %v926 = vld [vmem:[%s192 + $0x1448] sm:$0xff]
        %v927 = vld [vmem:[%s192 + $0x1450] sm:$0xff]
        %v928 = vld [vmem:[%s192 + $0x1458] sm:$0xff]
        %v929 = vld [vmem:[%s192 + $0x1460] sm:$0xff]
        %v930 = vld [vmem:[%s192 + $0x1468] sm:$0xff]
        %v931 = vld [vmem:[%s192 + $0x1470] sm:$0xff]
        %v932 = vld [vmem:[%s192 + $0x1478] sm:$0xff]
        %v933 = vld [vmem:[%s192 + $0x1480] sm:$0xff]
        %v934 = vld [vmem:[%s192 + $0x1488] sm:$0xff]
        %v935 = vld [vmem:[%s192 + $0x1490] sm:$0xff]
        %v936 = vld [vmem:[%s192 + $0x1498] sm:$0xff]
        %v937 = vld [vmem:[%s192 + $0x14a0] sm:$0xff]
        %v938 = vld [vmem:[%s192 + $0x14a8] sm:$0xff]
        %v939 = vld [vmem:[%s192 + $0x14b0] sm:$0xff]
        %v940 = vld [vmem:[%s192 + $0x14b8] sm:$0xff]
        %v941 = vld [vmem:[%s192 + $0x14c0] sm:$0xff]
        %v942 = vld [vmem:[%s192 + $0x14c8] sm:$0xff]
        %v943 = vld [vmem:[%s192 + $0x14d0] sm:$0xff]
        %v944 = vld [vmem:[%s192 + $0x14d8] sm:$0xff]
        %v945 = vld [vmem:[%s192 + $0x14e0] sm:$0xff]
        %v946 = vld [vmem:[%s192 + $0x14e8] sm:$0xff]
        %v947 = vld [vmem:[%s192 + $0x14f0] sm:$0xff]
        %v948 = vld [vmem:[%s192 + $0x14f8] sm:$0xff]
        %v949 = vld [vmem:[%s192 + $0x1500] sm:$0xff]
        %v950 = vld [vmem:[%s192 + $0x1508] sm:$0xff]
        %v951 = vld [vmem:[%s192 + $0x1510] sm:$0xff]
        %v952 = vld [vmem:[%s192 + $0x1518] sm:$0xff]
        %v953 = vld [vmem:[%s192 + $0x1520] sm:$0xff]
        %v954 = vld [vmem:[%s192 + $0x1528] sm:$0xff]
        %v955 = vld [vmem:[%s192 + $0x1530] sm:$0xff]
        %v956 = vld [vmem:[%s192 + $0x1538] sm:$0xff]
        %v957 = vld [vmem:[%s192 + $0x1540] sm:$0xff]
        %v958 = vld [vmem:[%s192 + $0x1548] sm:$0xff]
        %v959 = vld [vmem:[%s192 + $0x1550] sm:$0xff]
        %v960 = vld [vmem:[%s192 + $0x1558] sm:$0xff]
        %v961 = vld [vmem:[%s192 + $0x1560] sm:$0xff]
        %v962 = vld [vmem:[%s192 + $0x1568] sm:$0xff]
        %v963 = vld [vmem:[%s192 + $0x1570] sm:$0xff]
        %v964 = vld [vmem:[%s192 + $0x1578] sm:$0xff]
        %v965 = vld [vmem:[%s192 + $0x1580] sm:$0xff]
        %v966 = vld [vmem:[%s192 + $0x1588] sm:$0xff]
        %v967 = vld [vmem:[%s192 + $0x1590] sm:$0xff]
        %v968 = vld [vmem:[%s192 + $0x1598] sm:$0xff]
        %v969 = vld [vmem:[%s192 + $0x15a0] sm:$0xff]
        %v970 = vld [vmem:[%s192 + $0x15a8] sm:$0xff]
        %v971 = vld [vmem:[%s192 + $0x15b0] sm:$0xff]
        %v972 = vld [vmem:[%s192 + $0x15b8] sm:$0xff]
        %v973 = vld [vmem:[%s192 + $0x15c0] sm:$0xff]
        %v974 = vld [vmem:[%s192 + $0x15c8] sm:$0xff]
        %v975 = vld [vmem:[%s192 + $0x15d0] sm:$0xff]
        %v976 = vld [vmem:[%s192 + $0x15d8] sm:$0xff]
        %v977 = vld [vmem:[%s192 + $0x15e0] sm:$0xff]
        %v978 = vld [vmem:[%s192 + $0x15e8] sm:$0xff]
        %v979 = vld [vmem:[%s192 + $0x15f0] sm:$0xff]
        %v980 = vld [vmem:[%s192 + $0x15f8] sm:$0xff]
        %v981 = vld [vmem:[%s192 + $0x1600] sm:$0xff]
        %v982 = vld [vmem:[%s192 + $0x1608] sm:$0xff]
        %v983 = vld [vmem:[%s192 + $0x1610] sm:$0xff]
        %v984 = vld [vmem:[%s192 + $0x1618] sm:$0xff]
        %v985 = vld [vmem:[%s192 + $0x1620] sm:$0xff]
        %v986 = vld [vmem:[%s192 + $0x1628] sm:$0xff]
        %v987 = vld [vmem:[%s192 + $0x1630] sm:$0xff]
        %v988 = vld [vmem:[%s192 + $0x1638] sm:$0xff]
        %v989 = vld [vmem:[%s192 + $0x1640] sm:$0xff]
        %v990 = vld [vmem:[%s192 + $0x1648] sm:$0xff]
        %v991 = vld [vmem:[%s192 + $0x1650] sm:$0xff]
        %v992 = vld [vmem:[%s192 + $0x1658] sm:$0xff]
        %v993 = vld [vmem:[%s192 + $0x1660] sm:$0xff]
        %v994 = vld [vmem:[%s192 + $0x1668] sm:$0xff]
        %v995 = vld [vmem:[%s192 + $0x1670] sm:$0xff]
        %v996 = vld [vmem:[%s192 + $0x1678] sm:$0xff]
        %v997 = vld [vmem:[%s192 + $0x1680] sm:$0xff]
        %v998 = vld [vmem:[%s192 + $0x1688] sm:$0xff]
        %v999 = vld [vmem:[%s192 + $0x1690] sm:$0xff]
        %v1000 = vld [vmem:[%s192 + $0x1698] sm:$0xff]
        %v1001 = vld [vmem:[%s192 + $0x16a0] sm:$0xff]
        %v1002 = vld [vmem:[%s192 + $0x16a8] sm:$0xff]
        %v1003 = vld [vmem:[%s192 + $0x16b0] sm:$0xff]
        %v1004 = vld [vmem:[%s192 + $0x16b8] sm:$0xff]
        %v1005 = vld [vmem:[%s192 + $0x16c0] sm:$0xff]
        %v1006 = vld [vmem:[%s192 + $0x16c8] sm:$0xff]
        %v1007 = vld [vmem:[%s192 + $0x16d0] sm:$0xff]
        %v1008 = vld [vmem:[%s192 + $0x16d8] sm:$0xff]
        %v1009 = vld [vmem:[%s192 + $0x16e0] sm:$0xff]
        %v1010 = vld [vmem:[%s192 + $0x16e8] sm:$0xff]
        %v1011 = vld [vmem:[%s192 + $0x16f0] sm:$0xff]
        %v1012 = vld [vmem:[%s192 + $0x16f8] sm:$0xff]
        %v1013 = vld [vmem:[%s192 + $0x1700] sm:$0xff]
        %v1014 = vld [vmem:[%s192 + $0x1708] sm:$0xff]
        %v1015 = vld [vmem:[%s192 + $0x1710] sm:$0xff]
        %v1016 = vld [vmem:[%s192 + $0x1718] sm:$0xff]
        %v1017 = vld [vmem:[%s192 + $0x1720] sm:$0xff]
        %v1018 = vld [vmem:[%s192 + $0x1728] sm:$0xff]
        %v1019 = vld [vmem:[%s192 + $0x1730] sm:$0xff]
        %v1020 = vld [vmem:[%s192 + $0x1738] sm:$0xff]
        %v1021 = vld [vmem:[%s192 + $0x1740] sm:$0xff]
        %v1022 = vld [vmem:[%s192 + $0x1748] sm:$0xff]
        %v1023 = vld [vmem:[%s192 + $0x1750] sm:$0xff]
        %v1024 = vld [vmem:[%s192 + $0x1758] sm:$0xff]
        %v1025 = vld [vmem:[%s192 + $0x1760] sm:$0xff]
        %v1026 = vld [vmem:[%s192 + $0x1768] sm:$0xff]
        %v1027 = vld [vmem:[%s192 + $0x1770] sm:$0xff]
        %v1028 = vld [vmem:[%s192 + $0x1778] sm:$0xff]
        %v1029 = vld [vmem:[%s192 + $0x1780] sm:$0xff]
        %v1030 = vld [vmem:[%s192 + $0x1788] sm:$0xff]
        %v1031 = vld [vmem:[%s192 + $0x1790] sm:$0xff]
        %v1032 = vld [vmem:[%s192 + $0x1798] sm:$0xff]
        %v1033 = vld [vmem:[%s192 + $0x17a0] sm:$0xff]
        %v1034 = vld [vmem:[%s192 + $0x17a8] sm:$0xff]
        %v1035 = vld [vmem:[%s192 + $0x17b0] sm:$0xff]
        %v1036 = vld [vmem:[%s192 + $0x17b8] sm:$0xff]
        %v1037 = vld [vmem:[%s192 + $0x17c0] sm:$0xff]
        %v1038 = vld [vmem:[%s192 + $0x17c8] sm:$0xff]
        %v1039 = vld [vmem:[%s192 + $0x17d0] sm:$0xff]
        %v1040 = vld [vmem:[%s192 + $0x17d8] sm:$0xff]
        %v1041 = vld [vmem:[%s192 + $0x17e0] sm:$0xff]
        %v1042 = vld [vmem:[%s192 + $0x17e8] sm:$0xff]
        %v1043 = vld [vmem:[%s192 + $0x17f0] sm:$0xff]
        %v1044 = vld [vmem:[%s192 + $0x17f8] sm:$0xff]
        %v1053 = vunpack.c.l.b16 %v269
        %v1054 = vunpack.c.h.b16 %v269
        %v1055 = vunpack.c.l.b16 %v270
        %v1056 = vunpack.c.h.b16 %v270
        %v1057 = vunpack.c.l.b16 %v271
        %v1058 = vunpack.c.h.b16 %v271
        %v1059 = vunpack.c.l.b16 %v272
        %v1060 = vunpack.c.h.b16 %v272
        %v1061 = vunpack.c.l.b16 %v273
        %v1062 = vunpack.c.h.b16 %v273
        %v1063 = vunpack.c.l.b16 %v274
        %v1064 = vunpack.c.h.b16 %v274
        %v1065 = vunpack.c.l.b16 %v275
        %v1066 = vunpack.c.h.b16 %v275
        %v1067 = vunpack.c.l.b16 %v276
        %v1068 = vunpack.c.h.b16 %v276
        %v1069 = vpack.c.b16 %v1061, %v1053
        %v1070 = vpack.c.b16 %v1062, %v1054
        %v1071 = vpack.c.b16 %v1063, %v1055
        %v1072 = vpack.c.b16 %v1064, %v1056
        %v1073 = vpack.c.b16 %v1065, %v1057
        %v1074 = vpack.c.b16 %v1066, %v1058
        %v1075 = vpack.c.b16 %v1067, %v1059
        %v1076 = vpack.c.b16 %v1068, %v1060
        %v1853 = vunpack.c.l.b16 %v277
        %v1854 = vunpack.c.h.b16 %v277
        %v1855 = vunpack.c.l.b16 %v278
        %v1856 = vunpack.c.h.b16 %v278
        %v1857 = vunpack.c.l.b16 %v279
        %v1858 = vunpack.c.h.b16 %v279
        %v1859 = vunpack.c.l.b16 %v280
        %v1860 = vunpack.c.h.b16 %v280
        %v1861 = vunpack.c.l.b16 %v281
        %v1862 = vunpack.c.h.b16 %v281
        %v1863 = vunpack.c.l.b16 %v282
        %v1864 = vunpack.c.h.b16 %v282
        %v1865 = vunpack.c.l.b16 %v283
        %v1866 = vunpack.c.h.b16 %v283
        %v1867 = vunpack.c.l.b16 %v284
        %v1868 = vunpack.c.h.b16 %v284
        %v1869 = vunpack.c.l.b16 %v285
        %v1870 = vunpack.c.h.b16 %v285
        %v1871 = vunpack.c.l.b16 %v286
        %v1872 = vunpack.c.h.b16 %v286
        %v1873 = vunpack.c.l.b16 %v287
        %v1874 = vunpack.c.h.b16 %v287
        %v1875 = vunpack.c.l.b16 %v288
        %v1876 = vunpack.c.h.b16 %v288
        %v1877 = vunpack.c.l.b16 %v289
        %v1878 = vunpack.c.h.b16 %v289
        %v1879 = vunpack.c.l.b16 %v290
        %v1880 = vunpack.c.h.b16 %v290
        %v1881 = vunpack.c.l.b16 %v291
        %v1882 = vunpack.c.h.b16 %v291
        %v1883 = vunpack.c.l.b16 %v292
        %v1884 = vunpack.c.h.b16 %v292
        %v1885 = vunpack.c.l.b16 %v293
        %v1886 = vunpack.c.h.b16 %v293
        %v1887 = vunpack.c.l.b16 %v294
        %v1888 = vunpack.c.h.b16 %v294
        %v1889 = vunpack.c.l.b16 %v295
        %v1890 = vunpack.c.h.b16 %v295
        %v1891 = vunpack.c.l.b16 %v296
        %v1892 = vunpack.c.h.b16 %v296
        %v1893 = vunpack.c.l.b16 %v297
        %v1894 = vunpack.c.h.b16 %v297
        %v1895 = vunpack.c.l.b16 %v298
        %v1896 = vunpack.c.h.b16 %v298
        %v1897 = vunpack.c.l.b16 %v299
        %v1898 = vunpack.c.h.b16 %v299
        %v1899 = vunpack.c.l.b16 %v300
        %v1900 = vunpack.c.h.b16 %v300
        %v1901 = vunpack.c.l.b16 %v301
        %v1902 = vunpack.c.h.b16 %v301
        %v1903 = vunpack.c.l.b16 %v302
        %v1904 = vunpack.c.h.b16 %v302
        %v1905 = vunpack.c.l.b16 %v303
        %v1906 = vunpack.c.h.b16 %v303
        %v1907 = vunpack.c.l.b16 %v304
        %v1908 = vunpack.c.h.b16 %v304
        %v1909 = vunpack.c.l.b16 %v305
        %v1910 = vunpack.c.h.b16 %v305
        %v1911 = vunpack.c.l.b16 %v306
        %v1912 = vunpack.c.h.b16 %v306
        %v1913 = vunpack.c.l.b16 %v307
        %v1914 = vunpack.c.h.b16 %v307
        %v1915 = vunpack.c.l.b16 %v308
        %v1916 = vunpack.c.h.b16 %v308
        %v1917 = vunpack.c.l.b16 %v309
        %v1918 = vunpack.c.h.b16 %v309
        %v1919 = vunpack.c.l.b16 %v310
        %v1920 = vunpack.c.h.b16 %v310
        %v1921 = vunpack.c.l.b16 %v311
        %v1922 = vunpack.c.h.b16 %v311
        %v1923 = vunpack.c.l.b16 %v312
        %v1924 = vunpack.c.h.b16 %v312
        %v1925 = vunpack.c.l.b16 %v313
        %v1926 = vunpack.c.h.b16 %v313
        %v1927 = vunpack.c.l.b16 %v314
        %v1928 = vunpack.c.h.b16 %v314
        %v1929 = vunpack.c.l.b16 %v315
        %v1930 = vunpack.c.h.b16 %v315
        %v1931 = vunpack.c.l.b16 %v316
        %v1932 = vunpack.c.h.b16 %v316
        %v1933 = vunpack.c.l.b16 %v317
        %v1934 = vunpack.c.h.b16 %v317
        %v1935 = vunpack.c.l.b16 %v318
        %v1936 = vunpack.c.h.b16 %v318
        %v1937 = vunpack.c.l.b16 %v319
        %v1938 = vunpack.c.h.b16 %v319
        %v1939 = vunpack.c.l.b16 %v320
        %v1940 = vunpack.c.h.b16 %v320
        %v1941 = vunpack.c.l.b16 %v321
        %v1942 = vunpack.c.h.b16 %v321
        %v1943 = vunpack.c.l.b16 %v322
        %v1944 = vunpack.c.h.b16 %v322
        %v1945 = vunpack.c.l.b16 %v323
        %v1946 = vunpack.c.h.b16 %v323
        %v1947 = vunpack.c.l.b16 %v324
        %v1948 = vunpack.c.h.b16 %v324
        %v1949 = vunpack.c.l.b16 %v325
        %v1950 = vunpack.c.h.b16 %v325
        %v1951 = vunpack.c.l.b16 %v326
        %v1952 = vunpack.c.h.b16 %v326
        %v1953 = vunpack.c.l.b16 %v327
        %v1954 = vunpack.c.h.b16 %v327
        %v1955 = vunpack.c.l.b16 %v328
        %v1956 = vunpack.c.h.b16 %v328
        %v1957 = vunpack.c.l.b16 %v329
        %v1958 = vunpack.c.h.b16 %v329
        %v1959 = vunpack.c.l.b16 %v330
        %v1960 = vunpack.c.h.b16 %v330
        %v1961 = vunpack.c.l.b16 %v331
        %v1962 = vunpack.c.h.b16 %v331
        %v1963 = vunpack.c.l.b16 %v332
        %v1964 = vunpack.c.h.b16 %v332
        %v1965 = vunpack.c.l.b16 %v333
        %v1966 = vunpack.c.h.b16 %v333
        %v1967 = vunpack.c.l.b16 %v334
        %v1968 = vunpack.c.h.b16 %v334
        %v1969 = vunpack.c.l.b16 %v335
        %v1970 = vunpack.c.h.b16 %v335
        %v1971 = vunpack.c.l.b16 %v336
        %v1972 = vunpack.c.h.b16 %v336
        %v1973 = vunpack.c.l.b16 %v337
        %v1974 = vunpack.c.h.b16 %v337
        %v1975 = vunpack.c.l.b16 %v338
        %v1976 = vunpack.c.h.b16 %v338
        %v1977 = vunpack.c.l.b16 %v339
        %v1978 = vunpack.c.h.b16 %v339
        %v1979 = vunpack.c.l.b16 %v340
        %v1980 = vunpack.c.h.b16 %v340
        %v1981 = vunpack.c.l.b16 %v341
        %v1982 = vunpack.c.h.b16 %v341
        %v1983 = vunpack.c.l.b16 %v342
        %v1984 = vunpack.c.h.b16 %v342
        %v1985 = vunpack.c.l.b16 %v343
        %v1986 = vunpack.c.h.b16 %v343
        %v1987 = vunpack.c.l.b16 %v344
        %v1988 = vunpack.c.h.b16 %v344
        %v1989 = vunpack.c.l.b16 %v345
        %v1990 = vunpack.c.h.b16 %v345
        %v1991 = vunpack.c.l.b16 %v346
        %v1992 = vunpack.c.h.b16 %v346
        %v1993 = vunpack.c.l.b16 %v347
        %v1994 = vunpack.c.h.b16 %v347
        %v1995 = vunpack.c.l.b16 %v348
        %v1996 = vunpack.c.h.b16 %v348
        %v1997 = vunpack.c.l.b16 %v349
        %v1998 = vunpack.c.h.b16 %v349
        %v1999 = vunpack.c.l.b16 %v350
        %v2000 = vunpack.c.h.b16 %v350
        %v2001 = vunpack.c.l.b16 %v351
        %v2002 = vunpack.c.h.b16 %v351
        %v2003 = vunpack.c.l.b16 %v352
        %v2004 = vunpack.c.h.b16 %v352
        %v2005 = vunpack.c.l.b16 %v353
        %v2006 = vunpack.c.h.b16 %v353
        %v2007 = vunpack.c.l.b16 %v354
        %v2008 = vunpack.c.h.b16 %v354
        %v2009 = vunpack.c.l.b16 %v355
        %v2010 = vunpack.c.h.b16 %v355
        %v2011 = vunpack.c.l.b16 %v356
        %v2012 = vunpack.c.h.b16 %v356
        %v2013 = vunpack.c.l.b16 %v357
        %v2014 = vunpack.c.h.b16 %v357
        %v2015 = vunpack.c.l.b16 %v358
        %v2016 = vunpack.c.h.b16 %v358
        %v2017 = vunpack.c.l.b16 %v359
        %v2018 = vunpack.c.h.b16 %v359
        %v2019 = vunpack.c.l.b16 %v360
        %v2020 = vunpack.c.h.b16 %v360
        %v2021 = vunpack.c.l.b16 %v361
        %v2022 = vunpack.c.h.b16 %v361
        %v2023 = vunpack.c.l.b16 %v362
        %v2024 = vunpack.c.h.b16 %v362
        %v2025 = vunpack.c.l.b16 %v363
        %v2026 = vunpack.c.h.b16 %v363
        %v2027 = vunpack.c.l.b16 %v364
        %v2028 = vunpack.c.h.b16 %v364
        %v2029 = vunpack.c.l.b16 %v365
        %v2030 = vunpack.c.h.b16 %v365
        %v2031 = vunpack.c.l.b16 %v366
        %v2032 = vunpack.c.h.b16 %v366
        %v2033 = vunpack.c.l.b16 %v367
        %v2034 = vunpack.c.h.b16 %v367
        %v2035 = vunpack.c.l.b16 %v368
        %v2036 = vunpack.c.h.b16 %v368
        %v2037 = vunpack.c.l.b16 %v369
        %v2038 = vunpack.c.h.b16 %v369
        %v2039 = vunpack.c.l.b16 %v370
        %v2040 = vunpack.c.h.b16 %v370
        %v2041 = vunpack.c.l.b16 %v371
        %v2042 = vunpack.c.h.b16 %v371
        %v2043 = vunpack.c.l.b16 %v372
        %v2044 = vunpack.c.h.b16 %v372
        %v2045 = vunpack.c.l.b16 %v373
        %v2046 = vunpack.c.h.b16 %v373
        %v2047 = vunpack.c.l.b16 %v374
        %v2048 = vunpack.c.h.b16 %v374
        %v2049 = vunpack.c.l.b16 %v375
        %v2050 = vunpack.c.h.b16 %v375
        %v2051 = vunpack.c.l.b16 %v376
        %v2052 = vunpack.c.h.b16 %v376
        %v2053 = vunpack.c.l.b16 %v377
        %v2054 = vunpack.c.h.b16 %v377
        %v2055 = vunpack.c.l.b16 %v378
        %v2056 = vunpack.c.h.b16 %v378
        %v2057 = vunpack.c.l.b16 %v379
        %v2058 = vunpack.c.h.b16 %v379
        %v2059 = vunpack.c.l.b16 %v380
        %v2060 = vunpack.c.h.b16 %v380
        %v2061 = vunpack.c.l.b16 %v381
        %v2062 = vunpack.c.h.b16 %v381
        %v2063 = vunpack.c.l.b16 %v382
        %v2064 = vunpack.c.h.b16 %v382
        %v2065 = vunpack.c.l.b16 %v383
        %v2066 = vunpack.c.h.b16 %v383
        %v2067 = vunpack.c.l.b16 %v384
        %v2068 = vunpack.c.h.b16 %v384
        %v2069 = vunpack.c.l.b16 %v385
        %v2070 = vunpack.c.h.b16 %v385
        %v2071 = vunpack.c.l.b16 %v386
        %v2072 = vunpack.c.h.b16 %v386
        %v2073 = vunpack.c.l.b16 %v387
        %v2074 = vunpack.c.h.b16 %v387
        %v2075 = vunpack.c.l.b16 %v388
        %v2076 = vunpack.c.h.b16 %v388
        %v2077 = vunpack.c.l.b16 %v389
        %v2078 = vunpack.c.h.b16 %v389
        %v2079 = vunpack.c.l.b16 %v390
        %v2080 = vunpack.c.h.b16 %v390
        %v2081 = vunpack.c.l.b16 %v391
        %v2082 = vunpack.c.h.b16 %v391
        %v2083 = vunpack.c.l.b16 %v392
        %v2084 = vunpack.c.h.b16 %v392
        %v2085 = vunpack.c.l.b16 %v393
        %v2086 = vunpack.c.h.b16 %v393
        %v2087 = vunpack.c.l.b16 %v394
        %v2088 = vunpack.c.h.b16 %v394
        %v2089 = vunpack.c.l.b16 %v395
        %v2090 = vunpack.c.h.b16 %v395
        %v2091 = vunpack.c.l.b16 %v396
        %v2092 = vunpack.c.h.b16 %v396
        %v2093 = vunpack.c.l.b16 %v397
        %v2094 = vunpack.c.h.b16 %v397
        %v2095 = vunpack.c.l.b16 %v398
        %v2096 = vunpack.c.h.b16 %v398
        %v2097 = vunpack.c.l.b16 %v399
        %v2098 = vunpack.c.h.b16 %v399
        %v2099 = vunpack.c.l.b16 %v400
        %v2100 = vunpack.c.h.b16 %v400
        %v2101 = vunpack.c.l.b16 %v401
        %v2102 = vunpack.c.h.b16 %v401
        %v2103 = vunpack.c.l.b16 %v402
        %v2104 = vunpack.c.h.b16 %v402
        %v2105 = vunpack.c.l.b16 %v403
        %v2106 = vunpack.c.h.b16 %v403
        %v2107 = vunpack.c.l.b16 %v404
        %v2108 = vunpack.c.h.b16 %v404
        %v2109 = vunpack.c.l.b16 %v405
        %v2110 = vunpack.c.h.b16 %v405
        %v2111 = vunpack.c.l.b16 %v406
        %v2112 = vunpack.c.h.b16 %v406
        %v2113 = vunpack.c.l.b16 %v407
        %v2114 = vunpack.c.h.b16 %v407
        %v2115 = vunpack.c.l.b16 %v408
        %v2116 = vunpack.c.h.b16 %v408
        %v2117 = vunpack.c.l.b16 %v409
        %v2118 = vunpack.c.h.b16 %v409
        %v2119 = vunpack.c.l.b16 %v410
        %v2120 = vunpack.c.h.b16 %v410
        %v2121 = vunpack.c.l.b16 %v411
        %v2122 = vunpack.c.h.b16 %v411
        %v2123 = vunpack.c.l.b16 %v412
        %v2124 = vunpack.c.h.b16 %v412
        %v2125 = vunpack.c.l.b16 %v413
        %v2126 = vunpack.c.h.b16 %v413
        %v2127 = vunpack.c.l.b16 %v414
        %v2128 = vunpack.c.h.b16 %v414
        %v2129 = vunpack.c.l.b16 %v415
        %v2130 = vunpack.c.h.b16 %v415
        %v2131 = vunpack.c.l.b16 %v416
        %v2132 = vunpack.c.h.b16 %v416
        %v2133 = vunpack.c.l.b16 %v417
        %v2134 = vunpack.c.h.b16 %v417
        %v2135 = vunpack.c.l.b16 %v418
        %v2136 = vunpack.c.h.b16 %v418
        %v2137 = vunpack.c.l.b16 %v419
        %v2138 = vunpack.c.h.b16 %v419
        %v2139 = vunpack.c.l.b16 %v420
        %v2140 = vunpack.c.h.b16 %v420
        %v2141 = vunpack.c.l.b16 %v421
        %v2142 = vunpack.c.h.b16 %v421
        %v2143 = vunpack.c.l.b16 %v422
        %v2144 = vunpack.c.h.b16 %v422
        %v2145 = vunpack.c.l.b16 %v423
        %v2146 = vunpack.c.h.b16 %v423
        %v2147 = vunpack.c.l.b16 %v424
        %v2148 = vunpack.c.h.b16 %v424
        %v2149 = vunpack.c.l.b16 %v425
        %v2150 = vunpack.c.h.b16 %v425
        %v2151 = vunpack.c.l.b16 %v426
        %v2152 = vunpack.c.h.b16 %v426
        %v2153 = vunpack.c.l.b16 %v427
        %v2154 = vunpack.c.h.b16 %v427
        %v2155 = vunpack.c.l.b16 %v428
        %v2156 = vunpack.c.h.b16 %v428
        %v2157 = vunpack.c.l.b16 %v429
        %v2158 = vunpack.c.h.b16 %v429
        %v2159 = vunpack.c.l.b16 %v430
        %v2160 = vunpack.c.h.b16 %v430
        %v2161 = vunpack.c.l.b16 %v431
        %v2162 = vunpack.c.h.b16 %v431
        %v2163 = vunpack.c.l.b16 %v432
        %v2164 = vunpack.c.h.b16 %v432
        %v2165 = vunpack.c.l.b16 %v433
        %v2166 = vunpack.c.h.b16 %v433
        %v2167 = vunpack.c.l.b16 %v434
        %v2168 = vunpack.c.h.b16 %v434
        %v2169 = vunpack.c.l.b16 %v435
        %v2170 = vunpack.c.h.b16 %v435
        %v2171 = vunpack.c.l.b16 %v436
        %v2172 = vunpack.c.h.b16 %v436
        %v2173 = vunpack.c.l.b16 %v437
        %v2174 = vunpack.c.h.b16 %v437
        %v2175 = vunpack.c.l.b16 %v438
        %v2176 = vunpack.c.h.b16 %v438
        %v2177 = vunpack.c.l.b16 %v439
        %v2178 = vunpack.c.h.b16 %v439
        %v2179 = vunpack.c.l.b16 %v440
        %v2180 = vunpack.c.h.b16 %v440
        %v2181 = vunpack.c.l.b16 %v441
        %v2182 = vunpack.c.h.b16 %v441
        %v2183 = vunpack.c.l.b16 %v442
        %v2184 = vunpack.c.h.b16 %v442
        %v2185 = vunpack.c.l.b16 %v443
        %v2186 = vunpack.c.h.b16 %v443
        %v2187 = vunpack.c.l.b16 %v444
        %v2188 = vunpack.c.h.b16 %v444
        %v2189 = vunpack.c.l.b16 %v445
        %v2190 = vunpack.c.h.b16 %v445
        %v2191 = vunpack.c.l.b16 %v446
        %v2192 = vunpack.c.h.b16 %v446
        %v2193 = vunpack.c.l.b16 %v447
        %v2194 = vunpack.c.h.b16 %v447
        %v2195 = vunpack.c.l.b16 %v448
        %v2196 = vunpack.c.h.b16 %v448
        %v2197 = vunpack.c.l.b16 %v449
        %v2198 = vunpack.c.h.b16 %v449
        %v2199 = vunpack.c.l.b16 %v450
        %v2200 = vunpack.c.h.b16 %v450
        %v2201 = vunpack.c.l.b16 %v451
        %v2202 = vunpack.c.h.b16 %v451
        %v2203 = vunpack.c.l.b16 %v452
        %v2204 = vunpack.c.h.b16 %v452
        %v2205 = vunpack.c.l.b16 %v453
        %v2206 = vunpack.c.h.b16 %v453
        %v2207 = vunpack.c.l.b16 %v454
        %v2208 = vunpack.c.h.b16 %v454
        %v2209 = vunpack.c.l.b16 %v455
        %v2210 = vunpack.c.h.b16 %v455
        %v2211 = vunpack.c.l.b16 %v456
        %v2212 = vunpack.c.h.b16 %v456
        %v2213 = vunpack.c.l.b16 %v457
        %v2214 = vunpack.c.h.b16 %v457
        %v2215 = vunpack.c.l.b16 %v458
        %v2216 = vunpack.c.h.b16 %v458
        %v2217 = vunpack.c.l.b16 %v459
        %v2218 = vunpack.c.h.b16 %v459
        %v2219 = vunpack.c.l.b16 %v460
        %v2220 = vunpack.c.h.b16 %v460
        %v2221 = vunpack.c.l.b16 %v461
        %v2222 = vunpack.c.h.b16 %v461
        %v2223 = vunpack.c.l.b16 %v462
        %v2224 = vunpack.c.h.b16 %v462
        %v2225 = vunpack.c.l.b16 %v463
        %v2226 = vunpack.c.h.b16 %v463
        %v2227 = vunpack.c.l.b16 %v464
        %v2228 = vunpack.c.h.b16 %v464
        %v2229 = vunpack.c.l.b16 %v465
        %v2230 = vunpack.c.h.b16 %v465
        %v2231 = vunpack.c.l.b16 %v466
        %v2232 = vunpack.c.h.b16 %v466
        %v2233 = vunpack.c.l.b16 %v467
        %v2234 = vunpack.c.h.b16 %v467
        %v2235 = vunpack.c.l.b16 %v468
        %v2236 = vunpack.c.h.b16 %v468
        %v2237 = vunpack.c.l.b16 %v469
        %v2238 = vunpack.c.h.b16 %v469
        %v2239 = vunpack.c.l.b16 %v470
        %v2240 = vunpack.c.h.b16 %v470
        %v2241 = vunpack.c.l.b16 %v471
        %v2242 = vunpack.c.h.b16 %v471
        %v2243 = vunpack.c.l.b16 %v472
        %v2244 = vunpack.c.h.b16 %v472
        %v2245 = vunpack.c.l.b16 %v473
        %v2246 = vunpack.c.h.b16 %v473
        %v2247 = vunpack.c.l.b16 %v474
        %v2248 = vunpack.c.h.b16 %v474
        %v2249 = vunpack.c.l.b16 %v475
        %v2250 = vunpack.c.h.b16 %v475
        %v2251 = vunpack.c.l.b16 %v476
        %v2252 = vunpack.c.h.b16 %v476
        %v2253 = vunpack.c.l.b16 %v477
        %v2254 = vunpack.c.h.b16 %v477
        %v2255 = vunpack.c.l.b16 %v478
        %v2256 = vunpack.c.h.b16 %v478
        %v2257 = vunpack.c.l.b16 %v479
        %v2258 = vunpack.c.h.b16 %v479
        %v2259 = vunpack.c.l.b16 %v480
        %v2260 = vunpack.c.h.b16 %v480
        %v2261 = vunpack.c.l.b16 %v481
        %v2262 = vunpack.c.h.b16 %v481
        %v2263 = vunpack.c.l.b16 %v482
        %v2264 = vunpack.c.h.b16 %v482
        %v2265 = vunpack.c.l.b16 %v483
        %v2266 = vunpack.c.h.b16 %v483
        %v2267 = vunpack.c.l.b16 %v484
        %v2268 = vunpack.c.h.b16 %v484
        %v2269 = vunpack.c.l.b16 %v485
        %v2270 = vunpack.c.h.b16 %v485
        %v2271 = vunpack.c.l.b16 %v486
        %v2272 = vunpack.c.h.b16 %v486
        %v2273 = vunpack.c.l.b16 %v487
        %v2274 = vunpack.c.h.b16 %v487
        %v2275 = vunpack.c.l.b16 %v488
        %v2276 = vunpack.c.h.b16 %v488
        %v2277 = vunpack.c.l.b16 %v489
        %v2278 = vunpack.c.h.b16 %v489
        %v2279 = vunpack.c.l.b16 %v490
        %v2280 = vunpack.c.h.b16 %v490
        %v2281 = vunpack.c.l.b16 %v491
        %v2282 = vunpack.c.h.b16 %v491
        %v2283 = vunpack.c.l.b16 %v492
        %v2284 = vunpack.c.h.b16 %v492
        %v2285 = vunpack.c.l.b16 %v493
        %v2286 = vunpack.c.h.b16 %v493
        %v2287 = vunpack.c.l.b16 %v494
        %v2288 = vunpack.c.h.b16 %v494
        %v2289 = vunpack.c.l.b16 %v495
        %v2290 = vunpack.c.h.b16 %v495
        %v2291 = vunpack.c.l.b16 %v496
        %v2292 = vunpack.c.h.b16 %v496
        %v2293 = vunpack.c.l.b16 %v497
        %v2294 = vunpack.c.h.b16 %v497
        %v2295 = vunpack.c.l.b16 %v498
        %v2296 = vunpack.c.h.b16 %v498
        %v2297 = vunpack.c.l.b16 %v499
        %v2298 = vunpack.c.h.b16 %v499
        %v2299 = vunpack.c.l.b16 %v500
        %v2300 = vunpack.c.h.b16 %v500
        %v2301 = vunpack.c.l.b16 %v501
        %v2302 = vunpack.c.h.b16 %v501
        %v2303 = vunpack.c.l.b16 %v502
        %v2304 = vunpack.c.h.b16 %v502
        %v2305 = vunpack.c.l.b16 %v503
        %v2306 = vunpack.c.h.b16 %v503
        %v2307 = vunpack.c.l.b16 %v504
        %v2308 = vunpack.c.h.b16 %v504
        %v2309 = vunpack.c.l.b16 %v505
        %v2310 = vunpack.c.h.b16 %v505
        %v2311 = vunpack.c.l.b16 %v506
        %v2312 = vunpack.c.h.b16 %v506
        %v2313 = vunpack.c.l.b16 %v507
        %v2314 = vunpack.c.h.b16 %v507
        %v2315 = vunpack.c.l.b16 %v508
        %v2316 = vunpack.c.h.b16 %v508
        %v2317 = vunpack.c.l.b16 %v509
        %v2318 = vunpack.c.h.b16 %v509
        %v2319 = vunpack.c.l.b16 %v510
        %v2320 = vunpack.c.h.b16 %v510
        %v2321 = vunpack.c.l.b16 %v511
        %v2322 = vunpack.c.h.b16 %v511
        %v2323 = vunpack.c.l.b16 %v512
        %v2324 = vunpack.c.h.b16 %v512
        %v2325 = vunpack.c.l.b16 %v513
        %v2326 = vunpack.c.h.b16 %v513
        %v2327 = vunpack.c.l.b16 %v514
        %v2328 = vunpack.c.h.b16 %v514
        %v2329 = vunpack.c.l.b16 %v515
        %v2330 = vunpack.c.h.b16 %v515
        %v2331 = vunpack.c.l.b16 %v516
        %v2332 = vunpack.c.h.b16 %v516
        %v2333 = vunpack.c.l.b16 %v517
        %v2334 = vunpack.c.h.b16 %v517
        %v2335 = vunpack.c.l.b16 %v518
        %v2336 = vunpack.c.h.b16 %v518
        %v2337 = vunpack.c.l.b16 %v519
        %v2338 = vunpack.c.h.b16 %v519
        %v2339 = vunpack.c.l.b16 %v520
        %v2340 = vunpack.c.h.b16 %v520
        %v2341 = vunpack.c.l.b16 %v521
        %v2342 = vunpack.c.h.b16 %v521
        %v2343 = vunpack.c.l.b16 %v522
        %v2344 = vunpack.c.h.b16 %v522
        %v2345 = vunpack.c.l.b16 %v523
        %v2346 = vunpack.c.h.b16 %v523
        %v2347 = vunpack.c.l.b16 %v524
        %v2348 = vunpack.c.h.b16 %v524
        %v2349 = vunpack.c.l.b16 %v525
        %v2350 = vunpack.c.h.b16 %v525
        %v2351 = vunpack.c.l.b16 %v526
        %v2352 = vunpack.c.h.b16 %v526
        %v2353 = vunpack.c.l.b16 %v527
        %v2354 = vunpack.c.h.b16 %v527
        %v2355 = vunpack.c.l.b16 %v528
        %v2356 = vunpack.c.h.b16 %v528
        %v2357 = vunpack.c.l.b16 %v529
        %v2358 = vunpack.c.h.b16 %v529
        %v2359 = vunpack.c.l.b16 %v530
        %v2360 = vunpack.c.h.b16 %v530
        %v2361 = vunpack.c.l.b16 %v531
        %v2362 = vunpack.c.h.b16 %v531
        %v2363 = vunpack.c.l.b16 %v532
        %v2364 = vunpack.c.h.b16 %v532
        %v2365 = vunpack.c.l.b16 %v533
        %v2366 = vunpack.c.h.b16 %v533
        %v2367 = vunpack.c.l.b16 %v534
        %v2368 = vunpack.c.h.b16 %v534
        %v2369 = vunpack.c.l.b16 %v535
        %v2370 = vunpack.c.h.b16 %v535
        %v2371 = vunpack.c.l.b16 %v536
        %v2372 = vunpack.c.h.b16 %v536
        %v2373 = vunpack.c.l.b16 %v537
        %v2374 = vunpack.c.h.b16 %v537
        %v2375 = vunpack.c.l.b16 %v538
        %v2376 = vunpack.c.h.b16 %v538
        %v2377 = vunpack.c.l.b16 %v539
        %v2378 = vunpack.c.h.b16 %v539
        %v2379 = vunpack.c.l.b16 %v540
        %v2380 = vunpack.c.h.b16 %v540
        %v2381 = vunpack.c.l.b16 %v541
        %v2382 = vunpack.c.h.b16 %v541
        %v2383 = vunpack.c.l.b16 %v542
        %v2384 = vunpack.c.h.b16 %v542
        %v2385 = vunpack.c.l.b16 %v543
        %v2386 = vunpack.c.h.b16 %v543
        %v2387 = vunpack.c.l.b16 %v544
        %v2388 = vunpack.c.h.b16 %v544
        %v2389 = vunpack.c.l.b16 %v545
        %v2390 = vunpack.c.h.b16 %v545
        %v2391 = vunpack.c.l.b16 %v546
        %v2392 = vunpack.c.h.b16 %v546
        %v2393 = vunpack.c.l.b16 %v547
        %v2394 = vunpack.c.h.b16 %v547
        %v2395 = vunpack.c.l.b16 %v548
        %v2396 = vunpack.c.h.b16 %v548
        %v2397 = vunpack.c.l.b16 %v549
        %v2398 = vunpack.c.h.b16 %v549
        %v2399 = vunpack.c.l.b16 %v550
        %v2400 = vunpack.c.h.b16 %v550
        %v2401 = vunpack.c.l.b16 %v551
        %v2402 = vunpack.c.h.b16 %v551
        %v2403 = vunpack.c.l.b16 %v552
        %v2404 = vunpack.c.h.b16 %v552
        %v2405 = vunpack.c.l.b16 %v553
        %v2406 = vunpack.c.h.b16 %v553
        %v2407 = vunpack.c.l.b16 %v554
        %v2408 = vunpack.c.h.b16 %v554
        %v2409 = vunpack.c.l.b16 %v555
        %v2410 = vunpack.c.h.b16 %v555
        %v2411 = vunpack.c.l.b16 %v556
        %v2412 = vunpack.c.h.b16 %v556
        %v2413 = vunpack.c.l.b16 %v557
        %v2414 = vunpack.c.h.b16 %v557
        %v2415 = vunpack.c.l.b16 %v558
        %v2416 = vunpack.c.h.b16 %v558
        %v2417 = vunpack.c.l.b16 %v559
        %v2418 = vunpack.c.h.b16 %v559
        %v2419 = vunpack.c.l.b16 %v560
        %v2420 = vunpack.c.h.b16 %v560
        %v2421 = vunpack.c.l.b16 %v561
        %v2422 = vunpack.c.h.b16 %v561
        %v2423 = vunpack.c.l.b16 %v562
        %v2424 = vunpack.c.h.b16 %v562
        %v2425 = vunpack.c.l.b16 %v563
        %v2426 = vunpack.c.h.b16 %v563
        %v2427 = vunpack.c.l.b16 %v564
        %v2428 = vunpack.c.h.b16 %v564
        %v2429 = vunpack.c.l.b16 %v565
        %v2430 = vunpack.c.h.b16 %v565
        %v2431 = vunpack.c.l.b16 %v566
        %v2432 = vunpack.c.h.b16 %v566
        %v2433 = vunpack.c.l.b16 %v567
        %v2434 = vunpack.c.h.b16 %v567
        %v2435 = vunpack.c.l.b16 %v568
        %v2436 = vunpack.c.h.b16 %v568
        %v2437 = vunpack.c.l.b16 %v569
        %v2438 = vunpack.c.h.b16 %v569
        %v2439 = vunpack.c.l.b16 %v570
        %v2440 = vunpack.c.h.b16 %v570
        %v2441 = vunpack.c.l.b16 %v571
        %v2442 = vunpack.c.h.b16 %v571
        %v2443 = vunpack.c.l.b16 %v572
        %v2444 = vunpack.c.h.b16 %v572
        %v2445 = vunpack.c.l.b16 %v573
        %v2446 = vunpack.c.h.b16 %v573
        %v2447 = vunpack.c.l.b16 %v574
        %v2448 = vunpack.c.h.b16 %v574
        %v2449 = vunpack.c.l.b16 %v575
        %v2450 = vunpack.c.h.b16 %v575
        %v2451 = vunpack.c.l.b16 %v576
        %v2452 = vunpack.c.h.b16 %v576
        %v2453 = vunpack.c.l.b16 %v577
        %v2454 = vunpack.c.h.b16 %v577
        %v2455 = vunpack.c.l.b16 %v578
        %v2456 = vunpack.c.h.b16 %v578
        %v2457 = vunpack.c.l.b16 %v579
        %v2458 = vunpack.c.h.b16 %v579
        %v2459 = vunpack.c.l.b16 %v580
        %v2460 = vunpack.c.h.b16 %v580
        %v2461 = vunpack.c.l.b16 %v581
        %v2462 = vunpack.c.h.b16 %v581
        %v2463 = vunpack.c.l.b16 %v582
        %v2464 = vunpack.c.h.b16 %v582
        %v2465 = vunpack.c.l.b16 %v583
        %v2466 = vunpack.c.h.b16 %v583
        %v2467 = vunpack.c.l.b16 %v584
        %v2468 = vunpack.c.h.b16 %v584
        %v2469 = vunpack.c.l.b16 %v585
        %v2470 = vunpack.c.h.b16 %v585
        %v2471 = vunpack.c.l.b16 %v586
        %v2472 = vunpack.c.h.b16 %v586
        %v2473 = vunpack.c.l.b16 %v587
        %v2474 = vunpack.c.h.b16 %v587
        %v2475 = vunpack.c.l.b16 %v588
        %v2476 = vunpack.c.h.b16 %v588
        %v2477 = vunpack.c.l.b16 %v589
        %v2478 = vunpack.c.h.b16 %v589
        %v2479 = vunpack.c.l.b16 %v590
        %v2480 = vunpack.c.h.b16 %v590
        %v2481 = vunpack.c.l.b16 %v591
        %v2482 = vunpack.c.h.b16 %v591
        %v2483 = vunpack.c.l.b16 %v592
        %v2484 = vunpack.c.h.b16 %v592
        %v2485 = vunpack.c.l.b16 %v593
        %v2486 = vunpack.c.h.b16 %v593
        %v2487 = vunpack.c.l.b16 %v594
        %v2488 = vunpack.c.h.b16 %v594
        %v2489 = vunpack.c.l.b16 %v595
        %v2490 = vunpack.c.h.b16 %v595
        %v2491 = vunpack.c.l.b16 %v596
        %v2492 = vunpack.c.h.b16 %v596
        %v2493 = vunpack.c.l.b16 %v597
        %v2494 = vunpack.c.h.b16 %v597
        %v2495 = vunpack.c.l.b16 %v598
        %v2496 = vunpack.c.h.b16 %v598
        %v2497 = vunpack.c.l.b16 %v599
        %v2498 = vunpack.c.h.b16 %v599
        %v2499 = vunpack.c.l.b16 %v600
        %v2500 = vunpack.c.h.b16 %v600
        %v2501 = vunpack.c.l.b16 %v601
        %v2502 = vunpack.c.h.b16 %v601
        %v2503 = vunpack.c.l.b16 %v602
        %v2504 = vunpack.c.h.b16 %v602
        %v2505 = vunpack.c.l.b16 %v603
        %v2506 = vunpack.c.h.b16 %v603
        %v2507 = vunpack.c.l.b16 %v604
        %v2508 = vunpack.c.h.b16 %v604
        %v2509 = vunpack.c.l.b16 %v605
        %v2510 = vunpack.c.h.b16 %v605
        %v2511 = vunpack.c.l.b16 %v606
        %v2512 = vunpack.c.h.b16 %v606
        %v2513 = vunpack.c.l.b16 %v607
        %v2514 = vunpack.c.h.b16 %v607
        %v2515 = vunpack.c.l.b16 %v608
        %v2516 = vunpack.c.h.b16 %v608
        %v2517 = vunpack.c.l.b16 %v609
        %v2518 = vunpack.c.h.b16 %v609
        %v2519 = vunpack.c.l.b16 %v610
        %v2520 = vunpack.c.h.b16 %v610
        %v2521 = vunpack.c.l.b16 %v611
        %v2522 = vunpack.c.h.b16 %v611
        %v2523 = vunpack.c.l.b16 %v612
        %v2524 = vunpack.c.h.b16 %v612
        %v2525 = vunpack.c.l.b16 %v613
        %v2526 = vunpack.c.h.b16 %v613
        %v2527 = vunpack.c.l.b16 %v614
        %v2528 = vunpack.c.h.b16 %v614
        %v2529 = vunpack.c.l.b16 %v615
        %v2530 = vunpack.c.h.b16 %v615
        %v2531 = vunpack.c.l.b16 %v616
        %v2532 = vunpack.c.h.b16 %v616
        %v2533 = vunpack.c.l.b16 %v617
        %v2534 = vunpack.c.h.b16 %v617
        %v2535 = vunpack.c.l.b16 %v618
        %v2536 = vunpack.c.h.b16 %v618
        %v2537 = vunpack.c.l.b16 %v619
        %v2538 = vunpack.c.h.b16 %v619
        %v2539 = vunpack.c.l.b16 %v620
        %v2540 = vunpack.c.h.b16 %v620
        %v2541 = vunpack.c.l.b16 %v621
        %v2542 = vunpack.c.h.b16 %v621
        %v2543 = vunpack.c.l.b16 %v622
        %v2544 = vunpack.c.h.b16 %v622
        %v2545 = vunpack.c.l.b16 %v623
        %v2546 = vunpack.c.h.b16 %v623
        %v2547 = vunpack.c.l.b16 %v624
        %v2548 = vunpack.c.h.b16 %v624
        %v2549 = vunpack.c.l.b16 %v625
        %v2550 = vunpack.c.h.b16 %v625
        %v2551 = vunpack.c.l.b16 %v626
        %v2552 = vunpack.c.h.b16 %v626
        %v2553 = vunpack.c.l.b16 %v627
        %v2554 = vunpack.c.h.b16 %v627
        %v2555 = vunpack.c.l.b16 %v628
        %v2556 = vunpack.c.h.b16 %v628
        %v2557 = vunpack.c.l.b16 %v629
        %v2558 = vunpack.c.h.b16 %v629
        %v2559 = vunpack.c.l.b16 %v630
        %v2560 = vunpack.c.h.b16 %v630
        %v2561 = vunpack.c.l.b16 %v631
        %v2562 = vunpack.c.h.b16 %v631
        %v2563 = vunpack.c.l.b16 %v632
        %v2564 = vunpack.c.h.b16 %v632
        %v2565 = vunpack.c.l.b16 %v633
        %v2566 = vunpack.c.h.b16 %v633
        %v2567 = vunpack.c.l.b16 %v634
        %v2568 = vunpack.c.h.b16 %v634
        %v2569 = vunpack.c.l.b16 %v635
        %v2570 = vunpack.c.h.b16 %v635
        %v2571 = vunpack.c.l.b16 %v636
        %v2572 = vunpack.c.h.b16 %v636
        %v2573 = vunpack.c.l.b16 %v637
        %v2574 = vunpack.c.h.b16 %v637
        %v2575 = vunpack.c.l.b16 %v638
        %v2576 = vunpack.c.h.b16 %v638
        %v2577 = vunpack.c.l.b16 %v639
        %v2578 = vunpack.c.h.b16 %v639
        %v2579 = vunpack.c.l.b16 %v640
        %v2580 = vunpack.c.h.b16 %v640
        %v2581 = vunpack.c.l.b16 %v641
        %v2582 = vunpack.c.h.b16 %v641
        %v2583 = vunpack.c.l.b16 %v642
        %v2584 = vunpack.c.h.b16 %v642
        %v2585 = vunpack.c.l.b16 %v643
        %v2586 = vunpack.c.h.b16 %v643
        %v2587 = vunpack.c.l.b16 %v644
        %v2588 = vunpack.c.h.b16 %v644
        %v2589 = vunpack.c.l.b16 %v645
        %v2590 = vunpack.c.h.b16 %v645
        %v2591 = vunpack.c.l.b16 %v646
        %v2592 = vunpack.c.h.b16 %v646
        %v2593 = vunpack.c.l.b16 %v647
        %v2594 = vunpack.c.h.b16 %v647
        %v2595 = vunpack.c.l.b16 %v648
        %v2596 = vunpack.c.h.b16 %v648
        %v2597 = vunpack.c.l.b16 %v649
        %v2598 = vunpack.c.h.b16 %v649
        %v2599 = vunpack.c.l.b16 %v650
        %v2600 = vunpack.c.h.b16 %v650
        %v2601 = vunpack.c.l.b16 %v651
        %v2602 = vunpack.c.h.b16 %v651
        %v2603 = vunpack.c.l.b16 %v652
        %v2604 = vunpack.c.h.b16 %v652
        %v2605 = vunpack.c.l.b16 %v653
        %v2606 = vunpack.c.h.b16 %v653
        %v2607 = vunpack.c.l.b16 %v654
        %v2608 = vunpack.c.h.b16 %v654
        %v2609 = vunpack.c.l.b16 %v655
        %v2610 = vunpack.c.h.b16 %v655
        %v2611 = vunpack.c.l.b16 %v656
        %v2612 = vunpack.c.h.b16 %v656
        %v2613 = vunpack.c.l.b16 %v657
        %v2614 = vunpack.c.h.b16 %v657
        %v2615 = vunpack.c.l.b16 %v658
        %v2616 = vunpack.c.h.b16 %v658
        %v2617 = vunpack.c.l.b16 %v659
        %v2618 = vunpack.c.h.b16 %v659
        %v2619 = vunpack.c.l.b16 %v660
        %v2620 = vunpack.c.h.b16 %v660
        %v2621 = vunpack.c.l.b16 %v661
        %v2622 = vunpack.c.h.b16 %v661
        %v2623 = vunpack.c.l.b16 %v662
        %v2624 = vunpack.c.h.b16 %v662
        %v2625 = vunpack.c.l.b16 %v663
        %v2626 = vunpack.c.h.b16 %v663
        %v2627 = vunpack.c.l.b16 %v664
        %v2628 = vunpack.c.h.b16 %v664
        %v2629 = vunpack.c.l.b16 %v665
        %v2630 = vunpack.c.h.b16 %v665
        %v2631 = vunpack.c.l.b16 %v666
        %v2632 = vunpack.c.h.b16 %v666
        %v2633 = vunpack.c.l.b16 %v667
        %v2634 = vunpack.c.h.b16 %v667
        %v2635 = vunpack.c.l.b16 %v668
        %v2636 = vunpack.c.h.b16 %v668
        %v2637 = vunpack.c.l.b16 %v669
        %v2638 = vunpack.c.h.b16 %v669
        %v2639 = vunpack.c.l.b16 %v670
        %v2640 = vunpack.c.h.b16 %v670
        %v2641 = vunpack.c.l.b16 %v671
        %v2642 = vunpack.c.h.b16 %v671
        %v2643 = vunpack.c.l.b16 %v672
        %v2644 = vunpack.c.h.b16 %v672
        %v2645 = vunpack.c.l.b16 %v673
        %v2646 = vunpack.c.h.b16 %v673
        %v2647 = vunpack.c.l.b16 %v674
        %v2648 = vunpack.c.h.b16 %v674
        %v2649 = vunpack.c.l.b16 %v675
        %v2650 = vunpack.c.h.b16 %v675
        %v2651 = vunpack.c.l.b16 %v676
        %v2652 = vunpack.c.h.b16 %v676
        %v2653 = vunpack.c.l.b16 %v677
        %v2654 = vunpack.c.h.b16 %v677
        %v2655 = vunpack.c.l.b16 %v678
        %v2656 = vunpack.c.h.b16 %v678
        %v2657 = vunpack.c.l.b16 %v679
        %v2658 = vunpack.c.h.b16 %v679
        %v2659 = vunpack.c.l.b16 %v680
        %v2660 = vunpack.c.h.b16 %v680
        %v2661 = vunpack.c.l.b16 %v681
        %v2662 = vunpack.c.h.b16 %v681
        %v2663 = vunpack.c.l.b16 %v682
        %v2664 = vunpack.c.h.b16 %v682
        %v2665 = vunpack.c.l.b16 %v683
        %v2666 = vunpack.c.h.b16 %v683
        %v2667 = vunpack.c.l.b16 %v684
        %v2668 = vunpack.c.h.b16 %v684
        %v2669 = vunpack.c.l.b16 %v685
        %v2670 = vunpack.c.h.b16 %v685
        %v2671 = vunpack.c.l.b16 %v686
        %v2672 = vunpack.c.h.b16 %v686
        %v2673 = vunpack.c.l.b16 %v687
        %v2674 = vunpack.c.h.b16 %v687
        %v2675 = vunpack.c.l.b16 %v688
        %v2676 = vunpack.c.h.b16 %v688
        %v2677 = vunpack.c.l.b16 %v689
        %v2678 = vunpack.c.h.b16 %v689
        %v2679 = vunpack.c.l.b16 %v690
        %v2680 = vunpack.c.h.b16 %v690
        %v2681 = vunpack.c.l.b16 %v691
        %v2682 = vunpack.c.h.b16 %v691
        %v2683 = vunpack.c.l.b16 %v692
        %v2684 = vunpack.c.h.b16 %v692
        %v2685 = vunpack.c.l.b16 %v693
        %v2686 = vunpack.c.h.b16 %v693
        %v2687 = vunpack.c.l.b16 %v694
        %v2688 = vunpack.c.h.b16 %v694
        %v2689 = vunpack.c.l.b16 %v695
        %v2690 = vunpack.c.h.b16 %v695
        %v2691 = vunpack.c.l.b16 %v696
        %v2692 = vunpack.c.h.b16 %v696
        %v2693 = vunpack.c.l.b16 %v697
        %v2694 = vunpack.c.h.b16 %v697
        %v2695 = vunpack.c.l.b16 %v698
        %v2696 = vunpack.c.h.b16 %v698
        %v2697 = vunpack.c.l.b16 %v699
        %v2698 = vunpack.c.h.b16 %v699
        %v2699 = vunpack.c.l.b16 %v700
        %v2700 = vunpack.c.h.b16 %v700
        %v2701 = vunpack.c.l.b16 %v701
        %v2702 = vunpack.c.h.b16 %v701
        %v2703 = vunpack.c.l.b16 %v702
        %v2704 = vunpack.c.h.b16 %v702
        %v2705 = vunpack.c.l.b16 %v703
        %v2706 = vunpack.c.h.b16 %v703
        %v2707 = vunpack.c.l.b16 %v704
        %v2708 = vunpack.c.h.b16 %v704
        %v2709 = vunpack.c.l.b16 %v705
        %v2710 = vunpack.c.h.b16 %v705
        %v2711 = vunpack.c.l.b16 %v706
        %v2712 = vunpack.c.h.b16 %v706
        %v2713 = vunpack.c.l.b16 %v707
        %v2714 = vunpack.c.h.b16 %v707
        %v2715 = vunpack.c.l.b16 %v708
        %v2716 = vunpack.c.h.b16 %v708
        %v2717 = vunpack.c.l.b16 %v709
        %v2718 = vunpack.c.h.b16 %v709
        %v2719 = vunpack.c.l.b16 %v710
        %v2720 = vunpack.c.h.b16 %v710
        %v2721 = vunpack.c.l.b16 %v711
        %v2722 = vunpack.c.h.b16 %v711
        %v2723 = vunpack.c.l.b16 %v712
        %v2724 = vunpack.c.h.b16 %v712
        %v2725 = vunpack.c.l.b16 %v713
        %v2726 = vunpack.c.h.b16 %v713
        %v2727 = vunpack.c.l.b16 %v714
        %v2728 = vunpack.c.h.b16 %v714
        %v2729 = vunpack.c.l.b16 %v715
        %v2730 = vunpack.c.h.b16 %v715
        %v2731 = vunpack.c.l.b16 %v716
        %v2732 = vunpack.c.h.b16 %v716
        %v2733 = vunpack.c.l.b16 %v717
        %v2734 = vunpack.c.h.b16 %v717
        %v2735 = vunpack.c.l.b16 %v718
        %v2736 = vunpack.c.h.b16 %v718
        %v2737 = vunpack.c.l.b16 %v719
        %v2738 = vunpack.c.h.b16 %v719
        %v2739 = vunpack.c.l.b16 %v720
        %v2740 = vunpack.c.h.b16 %v720
        %v2741 = vunpack.c.l.b16 %v721
        %v2742 = vunpack.c.h.b16 %v721
        %v2743 = vunpack.c.l.b16 %v722
        %v2744 = vunpack.c.h.b16 %v722
        %v2745 = vunpack.c.l.b16 %v723
        %v2746 = vunpack.c.h.b16 %v723
        %v2747 = vunpack.c.l.b16 %v724
        %v2748 = vunpack.c.h.b16 %v724
        %v2749 = vunpack.c.l.b16 %v725
        %v2750 = vunpack.c.h.b16 %v725
        %v2751 = vunpack.c.l.b16 %v726
        %v2752 = vunpack.c.h.b16 %v726
        %v2753 = vunpack.c.l.b16 %v727
        %v2754 = vunpack.c.h.b16 %v727
        %v2755 = vunpack.c.l.b16 %v728
        %v2756 = vunpack.c.h.b16 %v728
        %v2757 = vunpack.c.l.b16 %v729
        %v2758 = vunpack.c.h.b16 %v729
        %v2759 = vunpack.c.l.b16 %v730
        %v2760 = vunpack.c.h.b16 %v730
        %v2761 = vunpack.c.l.b16 %v731
        %v2762 = vunpack.c.h.b16 %v731
        %v2763 = vunpack.c.l.b16 %v732
        %v2764 = vunpack.c.h.b16 %v732
        %v2765 = vunpack.c.l.b16 %v733
        %v2766 = vunpack.c.h.b16 %v733
        %v2767 = vunpack.c.l.b16 %v734
        %v2768 = vunpack.c.h.b16 %v734
        %v2769 = vunpack.c.l.b16 %v735
        %v2770 = vunpack.c.h.b16 %v735
        %v2771 = vunpack.c.l.b16 %v736
        %v2772 = vunpack.c.h.b16 %v736
        %v2773 = vunpack.c.l.b16 %v737
        %v2774 = vunpack.c.h.b16 %v737
        %v2775 = vunpack.c.l.b16 %v738
        %v2776 = vunpack.c.h.b16 %v738
        %v2777 = vunpack.c.l.b16 %v739
        %v2778 = vunpack.c.h.b16 %v739
        %v2779 = vunpack.c.l.b16 %v740
        %v2780 = vunpack.c.h.b16 %v740
        %v2781 = vunpack.c.l.b16 %v741
        %v2782 = vunpack.c.h.b16 %v741
        %v2783 = vunpack.c.l.b16 %v742
        %v2784 = vunpack.c.h.b16 %v742
        %v2785 = vunpack.c.l.b16 %v743
        %v2786 = vunpack.c.h.b16 %v743
        %v2787 = vunpack.c.l.b16 %v744
        %v2788 = vunpack.c.h.b16 %v744
        %v2789 = vunpack.c.l.b16 %v745
        %v2790 = vunpack.c.h.b16 %v745
        %v2791 = vunpack.c.l.b16 %v746
        %v2792 = vunpack.c.h.b16 %v746
        %v2793 = vunpack.c.l.b16 %v747
        %v2794 = vunpack.c.h.b16 %v747
        %v2795 = vunpack.c.l.b16 %v748
        %v2796 = vunpack.c.h.b16 %v748
        %v2797 = vunpack.c.l.b16 %v749
        %v2798 = vunpack.c.h.b16 %v749
        %v2799 = vunpack.c.l.b16 %v750
        %v2800 = vunpack.c.h.b16 %v750
        %v2801 = vunpack.c.l.b16 %v751
        %v2802 = vunpack.c.h.b16 %v751
        %v2803 = vunpack.c.l.b16 %v752
        %v2804 = vunpack.c.h.b16 %v752
        %v2805 = vunpack.c.l.b16 %v753
        %v2806 = vunpack.c.h.b16 %v753
        %v2807 = vunpack.c.l.b16 %v754
        %v2808 = vunpack.c.h.b16 %v754
        %v2809 = vunpack.c.l.b16 %v755
        %v2810 = vunpack.c.h.b16 %v755
        %v2811 = vunpack.c.l.b16 %v756
        %v2812 = vunpack.c.h.b16 %v756
        %v2813 = vunpack.c.l.b16 %v757
        %v2814 = vunpack.c.h.b16 %v757
        %v2815 = vunpack.c.l.b16 %v758
        %v2816 = vunpack.c.h.b16 %v758
        %v2817 = vunpack.c.l.b16 %v759
        %v2818 = vunpack.c.h.b16 %v759
        %v2819 = vunpack.c.l.b16 %v760
        %v2820 = vunpack.c.h.b16 %v760
        %v2821 = vunpack.c.l.b16 %v761
        %v2822 = vunpack.c.h.b16 %v761
        %v2823 = vunpack.c.l.b16 %v762
        %v2824 = vunpack.c.h.b16 %v762
        %v2825 = vunpack.c.l.b16 %v763
        %v2826 = vunpack.c.h.b16 %v763
        %v2827 = vunpack.c.l.b16 %v764
        %v2828 = vunpack.c.h.b16 %v764
        %v2829 = vunpack.c.l.b16 %v765
        %v2830 = vunpack.c.h.b16 %v765
        %v2831 = vunpack.c.l.b16 %v766
        %v2832 = vunpack.c.h.b16 %v766
        %v2833 = vunpack.c.l.b16 %v767
        %v2834 = vunpack.c.h.b16 %v767
        %v2835 = vunpack.c.l.b16 %v768
        %v2836 = vunpack.c.h.b16 %v768
        %v2837 = vunpack.c.l.b16 %v769
        %v2838 = vunpack.c.h.b16 %v769
        %v2839 = vunpack.c.l.b16 %v770
        %v2840 = vunpack.c.h.b16 %v770
        %v2841 = vunpack.c.l.b16 %v771
        %v2842 = vunpack.c.h.b16 %v771
        %v2843 = vunpack.c.l.b16 %v772
        %v2844 = vunpack.c.h.b16 %v772
        %v2845 = vunpack.c.l.b16 %v773
        %v2846 = vunpack.c.h.b16 %v773
        %v2847 = vunpack.c.l.b16 %v774
        %v2848 = vunpack.c.h.b16 %v774
        %v2849 = vunpack.c.l.b16 %v775
        %v2850 = vunpack.c.h.b16 %v775
        %v2851 = vunpack.c.l.b16 %v776
        %v2852 = vunpack.c.h.b16 %v776
        %v2853 = vunpack.c.l.b16 %v777
        %v2854 = vunpack.c.h.b16 %v777
        %v2855 = vunpack.c.l.b16 %v778
        %v2856 = vunpack.c.h.b16 %v778
        %v2857 = vunpack.c.l.b16 %v779
        %v2858 = vunpack.c.h.b16 %v779
        %v2859 = vunpack.c.l.b16 %v780
        %v2860 = vunpack.c.h.b16 %v780
        %v2861 = vunpack.c.l.b16 %v781
        %v2862 = vunpack.c.h.b16 %v781
        %v2863 = vunpack.c.l.b16 %v782
        %v2864 = vunpack.c.h.b16 %v782
        %v2865 = vunpack.c.l.b16 %v783
        %v2866 = vunpack.c.h.b16 %v783
        %v2867 = vunpack.c.l.b16 %v784
        %v2868 = vunpack.c.h.b16 %v784
        %v2869 = vunpack.c.l.b16 %v785
        %v2870 = vunpack.c.h.b16 %v785
        %v2871 = vunpack.c.l.b16 %v786
        %v2872 = vunpack.c.h.b16 %v786
        %v2873 = vunpack.c.l.b16 %v787
        %v2874 = vunpack.c.h.b16 %v787
        %v2875 = vunpack.c.l.b16 %v788
        %v2876 = vunpack.c.h.b16 %v788
        %v2877 = vunpack.c.l.b16 %v789
        %v2878 = vunpack.c.h.b16 %v789
        %v2879 = vunpack.c.l.b16 %v790
        %v2880 = vunpack.c.h.b16 %v790
        %v2881 = vunpack.c.l.b16 %v791
        %v2882 = vunpack.c.h.b16 %v791
        %v2883 = vunpack.c.l.b16 %v792
        %v2884 = vunpack.c.h.b16 %v792
        %v2885 = vunpack.c.l.b16 %v793
        %v2886 = vunpack.c.h.b16 %v793
        %v2887 = vunpack.c.l.b16 %v794
        %v2888 = vunpack.c.h.b16 %v794
        %v2889 = vunpack.c.l.b16 %v795
        %v2890 = vunpack.c.h.b16 %v795
        %v2891 = vunpack.c.l.b16 %v796
        %v2892 = vunpack.c.h.b16 %v796
        %v2893 = vunpack.c.l.b16 %v797
        %v2894 = vunpack.c.h.b16 %v797
        %v2895 = vunpack.c.l.b16 %v798
        %v2896 = vunpack.c.h.b16 %v798
        %v2897 = vunpack.c.l.b16 %v799
        %v2898 = vunpack.c.h.b16 %v799
        %v2899 = vunpack.c.l.b16 %v800
        %v2900 = vunpack.c.h.b16 %v800
        %v2901 = vunpack.c.l.b16 %v801
        %v2902 = vunpack.c.h.b16 %v801
        %v2903 = vunpack.c.l.b16 %v802
        %v2904 = vunpack.c.h.b16 %v802
        %v2905 = vunpack.c.l.b16 %v803
        %v2906 = vunpack.c.h.b16 %v803
        %v2907 = vunpack.c.l.b16 %v804
        %v2908 = vunpack.c.h.b16 %v804
        %v2909 = vunpack.c.l.b16 %v805
        %v2910 = vunpack.c.h.b16 %v805
        %v2911 = vunpack.c.l.b16 %v806
        %v2912 = vunpack.c.h.b16 %v806
        %v2913 = vunpack.c.l.b16 %v807
        %v2914 = vunpack.c.h.b16 %v807
        %v2915 = vunpack.c.l.b16 %v808
        %v2916 = vunpack.c.h.b16 %v808
        %v2917 = vunpack.c.l.b16 %v809
        %v2918 = vunpack.c.h.b16 %v809
        %v2919 = vunpack.c.l.b16 %v810
        %v2920 = vunpack.c.h.b16 %v810
        %v2921 = vunpack.c.l.b16 %v811
        %v2922 = vunpack.c.h.b16 %v811
        %v2923 = vunpack.c.l.b16 %v812
        %v2924 = vunpack.c.h.b16 %v812
        %v2925 = vunpack.c.l.b16 %v813
        %v2926 = vunpack.c.h.b16 %v813
        %v2927 = vunpack.c.l.b16 %v814
        %v2928 = vunpack.c.h.b16 %v814
        %v2929 = vunpack.c.l.b16 %v815
        %v2930 = vunpack.c.h.b16 %v815
        %v2931 = vunpack.c.l.b16 %v816
        %v2932 = vunpack.c.h.b16 %v816
        %v2933 = vunpack.c.l.b16 %v817
        %v2934 = vunpack.c.h.b16 %v817
        %v2935 = vunpack.c.l.b16 %v818
        %v2936 = vunpack.c.h.b16 %v818
        %v2937 = vunpack.c.l.b16 %v819
        %v2938 = vunpack.c.h.b16 %v819
        %v2939 = vunpack.c.l.b16 %v820
        %v2940 = vunpack.c.h.b16 %v820
        %v2941 = vunpack.c.l.b16 %v821
        %v2942 = vunpack.c.h.b16 %v821
        %v2943 = vunpack.c.l.b16 %v822
        %v2944 = vunpack.c.h.b16 %v822
        %v2945 = vunpack.c.l.b16 %v823
        %v2946 = vunpack.c.h.b16 %v823
        %v2947 = vunpack.c.l.b16 %v824
        %v2948 = vunpack.c.h.b16 %v824
        %v2949 = vunpack.c.l.b16 %v825
        %v2950 = vunpack.c.h.b16 %v825
        %v2951 = vunpack.c.l.b16 %v826
        %v2952 = vunpack.c.h.b16 %v826
        %v2953 = vunpack.c.l.b16 %v827
        %v2954 = vunpack.c.h.b16 %v827
        %v2955 = vunpack.c.l.b16 %v828
        %v2956 = vunpack.c.h.b16 %v828
        %v2957 = vunpack.c.l.b16 %v829
        %v2958 = vunpack.c.h.b16 %v829
        %v2959 = vunpack.c.l.b16 %v830
        %v2960 = vunpack.c.h.b16 %v830
        %v2961 = vunpack.c.l.b16 %v831
        %v2962 = vunpack.c.h.b16 %v831
        %v2963 = vunpack.c.l.b16 %v832
        %v2964 = vunpack.c.h.b16 %v832
        %v2965 = vunpack.c.l.b16 %v833
        %v2966 = vunpack.c.h.b16 %v833
        %v2967 = vunpack.c.l.b16 %v834
        %v2968 = vunpack.c.h.b16 %v834
        %v2969 = vunpack.c.l.b16 %v835
        %v2970 = vunpack.c.h.b16 %v835
        %v2971 = vunpack.c.l.b16 %v836
        %v2972 = vunpack.c.h.b16 %v836
        %v2973 = vunpack.c.l.b16 %v837
        %v2974 = vunpack.c.h.b16 %v837
        %v2975 = vunpack.c.l.b16 %v838
        %v2976 = vunpack.c.h.b16 %v838
        %v2977 = vunpack.c.l.b16 %v839
        %v2978 = vunpack.c.h.b16 %v839
        %v2979 = vunpack.c.l.b16 %v840
        %v2980 = vunpack.c.h.b16 %v840
        %v2981 = vunpack.c.l.b16 %v841
        %v2982 = vunpack.c.h.b16 %v841
        %v2983 = vunpack.c.l.b16 %v842
        %v2984 = vunpack.c.h.b16 %v842
        %v2985 = vunpack.c.l.b16 %v843
        %v2986 = vunpack.c.h.b16 %v843
        %v2987 = vunpack.c.l.b16 %v844
        %v2988 = vunpack.c.h.b16 %v844
        %v2989 = vunpack.c.l.b16 %v845
        %v2990 = vunpack.c.h.b16 %v845
        %v2991 = vunpack.c.l.b16 %v846
        %v2992 = vunpack.c.h.b16 %v846
        %v2993 = vunpack.c.l.b16 %v847
        %v2994 = vunpack.c.h.b16 %v847
        %v2995 = vunpack.c.l.b16 %v848
        %v2996 = vunpack.c.h.b16 %v848
        %v2997 = vunpack.c.l.b16 %v849
        %v2998 = vunpack.c.h.b16 %v849
        %v2999 = vunpack.c.l.b16 %v850
        %v3000 = vunpack.c.h.b16 %v850
        %v3001 = vunpack.c.l.b16 %v851
        %v3002 = vunpack.c.h.b16 %v851
        %v3003 = vunpack.c.l.b16 %v852
        %v3004 = vunpack.c.h.b16 %v852
        %v3005 = vunpack.c.l.b16 %v853
        %v3006 = vunpack.c.h.b16 %v853
        %v3007 = vunpack.c.l.b16 %v854
        %v3008 = vunpack.c.h.b16 %v854
        %v3009 = vunpack.c.l.b16 %v855
        %v3010 = vunpack.c.h.b16 %v855
        %v3011 = vunpack.c.l.b16 %v856
        %v3012 = vunpack.c.h.b16 %v856
        %v3013 = vunpack.c.l.b16 %v857
        %v3014 = vunpack.c.h.b16 %v857
        %v3015 = vunpack.c.l.b16 %v858
        %v3016 = vunpack.c.h.b16 %v858
        %v3017 = vunpack.c.l.b16 %v859
        %v3018 = vunpack.c.h.b16 %v859
        %v3019 = vunpack.c.l.b16 %v860
        %v3020 = vunpack.c.h.b16 %v860
        %v3021 = vunpack.c.l.b16 %v861
        %v3022 = vunpack.c.h.b16 %v861
        %v3023 = vunpack.c.l.b16 %v862
        %v3024 = vunpack.c.h.b16 %v862
        %v3025 = vunpack.c.l.b16 %v863
        %v3026 = vunpack.c.h.b16 %v863
        %v3027 = vunpack.c.l.b16 %v864
        %v3028 = vunpack.c.h.b16 %v864
        %v3029 = vunpack.c.l.b16 %v865
        %v3030 = vunpack.c.h.b16 %v865
        %v3031 = vunpack.c.l.b16 %v866
        %v3032 = vunpack.c.h.b16 %v866
        %v3033 = vunpack.c.l.b16 %v867
        %v3034 = vunpack.c.h.b16 %v867
        %v3035 = vunpack.c.l.b16 %v868
        %v3036 = vunpack.c.h.b16 %v868
        %v3037 = vunpack.c.l.b16 %v869
        %v3038 = vunpack.c.h.b16 %v869
        %v3039 = vunpack.c.l.b16 %v870
        %v3040 = vunpack.c.h.b16 %v870
        %v3041 = vunpack.c.l.b16 %v871
        %v3042 = vunpack.c.h.b16 %v871
        %v3043 = vunpack.c.l.b16 %v872
        %v3044 = vunpack.c.h.b16 %v872
        %v3045 = vunpack.c.l.b16 %v873
        %v3046 = vunpack.c.h.b16 %v873
        %v3047 = vunpack.c.l.b16 %v874
        %v3048 = vunpack.c.h.b16 %v874
        %v3049 = vunpack.c.l.b16 %v875
        %v3050 = vunpack.c.h.b16 %v875
        %v3051 = vunpack.c.l.b16 %v876
        %v3052 = vunpack.c.h.b16 %v876
        %v3053 = vunpack.c.l.b16 %v877
        %v3054 = vunpack.c.h.b16 %v877
        %v3055 = vunpack.c.l.b16 %v878
        %v3056 = vunpack.c.h.b16 %v878
        %v3057 = vunpack.c.l.b16 %v879
        %v3058 = vunpack.c.h.b16 %v879
        %v3059 = vunpack.c.l.b16 %v880
        %v3060 = vunpack.c.h.b16 %v880
        %v3061 = vunpack.c.l.b16 %v881
        %v3062 = vunpack.c.h.b16 %v881
        %v3063 = vunpack.c.l.b16 %v882
        %v3064 = vunpack.c.h.b16 %v882
        %v3065 = vunpack.c.l.b16 %v883
        %v3066 = vunpack.c.h.b16 %v883
        %v3067 = vunpack.c.l.b16 %v884
        %v3068 = vunpack.c.h.b16 %v884
        %v3069 = vunpack.c.l.b16 %v885
        %v3070 = vunpack.c.h.b16 %v885
        %v3071 = vunpack.c.l.b16 %v886
        %v3072 = vunpack.c.h.b16 %v886
        %v3073 = vunpack.c.l.b16 %v887
        %v3074 = vunpack.c.h.b16 %v887
        %v3075 = vunpack.c.l.b16 %v888
        %v3076 = vunpack.c.h.b16 %v888
        %v3077 = vunpack.c.l.b16 %v889
        %v3078 = vunpack.c.h.b16 %v889
        %v3079 = vunpack.c.l.b16 %v890
        %v3080 = vunpack.c.h.b16 %v890
        %v3081 = vunpack.c.l.b16 %v891
        %v3082 = vunpack.c.h.b16 %v891
        %v3083 = vunpack.c.l.b16 %v892
        %v3084 = vunpack.c.h.b16 %v892
        %v3085 = vunpack.c.l.b16 %v893
        %v3086 = vunpack.c.h.b16 %v893
        %v3087 = vunpack.c.l.b16 %v894
        %v3088 = vunpack.c.h.b16 %v894
        %v3089 = vunpack.c.l.b16 %v895
        %v3090 = vunpack.c.h.b16 %v895
        %v3091 = vunpack.c.l.b16 %v896
        %v3092 = vunpack.c.h.b16 %v896
        %v3093 = vunpack.c.l.b16 %v897
        %v3094 = vunpack.c.h.b16 %v897
        %v3095 = vunpack.c.l.b16 %v898
        %v3096 = vunpack.c.h.b16 %v898
        %v3097 = vunpack.c.l.b16 %v899
        %v3098 = vunpack.c.h.b16 %v899
        %v3099 = vunpack.c.l.b16 %v900
        %v3100 = vunpack.c.h.b16 %v900
        %v3101 = vunpack.c.l.b16 %v901
        %v3102 = vunpack.c.h.b16 %v901
        %v3103 = vunpack.c.l.b16 %v902
        %v3104 = vunpack.c.h.b16 %v902
        %v3105 = vunpack.c.l.b16 %v903
        %v3106 = vunpack.c.h.b16 %v903
        %v3107 = vunpack.c.l.b16 %v904
        %v3108 = vunpack.c.h.b16 %v904
        %v3109 = vunpack.c.l.b16 %v905
        %v3110 = vunpack.c.h.b16 %v905
        %v3111 = vunpack.c.l.b16 %v906
        %v3112 = vunpack.c.h.b16 %v906
        %v3113 = vunpack.c.l.b16 %v907
        %v3114 = vunpack.c.h.b16 %v907
        %v3115 = vunpack.c.l.b16 %v908
        %v3116 = vunpack.c.h.b16 %v908
        %v3117 = vunpack.c.l.b16 %v909
        %v3118 = vunpack.c.h.b16 %v909
        %v3119 = vunpack.c.l.b16 %v910
        %v3120 = vunpack.c.h.b16 %v910
        %v3121 = vunpack.c.l.b16 %v911
        %v3122 = vunpack.c.h.b16 %v911
        %v3123 = vunpack.c.l.b16 %v912
        %v3124 = vunpack.c.h.b16 %v912
        %v3125 = vunpack.c.l.b16 %v913
        %v3126 = vunpack.c.h.b16 %v913
        %v3127 = vunpack.c.l.b16 %v914
        %v3128 = vunpack.c.h.b16 %v914
        %v3129 = vunpack.c.l.b16 %v915
        %v3130 = vunpack.c.h.b16 %v915
        %v3131 = vunpack.c.l.b16 %v916
        %v3132 = vunpack.c.h.b16 %v916
        %v3133 = vunpack.c.l.b16 %v917
        %v3134 = vunpack.c.h.b16 %v917
        %v3135 = vunpack.c.l.b16 %v918
        %v3136 = vunpack.c.h.b16 %v918
        %v3137 = vunpack.c.l.b16 %v919
        %v3138 = vunpack.c.h.b16 %v919
        %v3139 = vunpack.c.l.b16 %v920
        %v3140 = vunpack.c.h.b16 %v920
        %v3141 = vunpack.c.l.b16 %v921
        %v3142 = vunpack.c.h.b16 %v921
        %v3143 = vunpack.c.l.b16 %v922
        %v3144 = vunpack.c.h.b16 %v922
        %v3145 = vunpack.c.l.b16 %v923
        %v3146 = vunpack.c.h.b16 %v923
        %v3147 = vunpack.c.l.b16 %v924
        %v3148 = vunpack.c.h.b16 %v924
        %v3149 = vunpack.c.l.b16 %v925
        %v3150 = vunpack.c.h.b16 %v925
        %v3151 = vunpack.c.l.b16 %v926
        %v3152 = vunpack.c.h.b16 %v926
        %v3153 = vunpack.c.l.b16 %v927
        %v3154 = vunpack.c.h.b16 %v927
        %v3155 = vunpack.c.l.b16 %v928
        %v3156 = vunpack.c.h.b16 %v928
        %v3157 = vunpack.c.l.b16 %v929
        %v3158 = vunpack.c.h.b16 %v929
        %v3159 = vunpack.c.l.b16 %v930
        %v3160 = vunpack.c.h.b16 %v930
        %v3161 = vunpack.c.l.b16 %v931
        %v3162 = vunpack.c.h.b16 %v931
        %v3163 = vunpack.c.l.b16 %v932
        %v3164 = vunpack.c.h.b16 %v932
        %v3165 = vunpack.c.l.b16 %v933
        %v3166 = vunpack.c.h.b16 %v933
        %v3167 = vunpack.c.l.b16 %v934
        %v3168 = vunpack.c.h.b16 %v934
        %v3169 = vunpack.c.l.b16 %v935
        %v3170 = vunpack.c.h.b16 %v935
        %v3171 = vunpack.c.l.b16 %v936
        %v3172 = vunpack.c.h.b16 %v936
        %v3173 = vunpack.c.l.b16 %v937
        %v3174 = vunpack.c.h.b16 %v937
        %v3175 = vunpack.c.l.b16 %v938
        %v3176 = vunpack.c.h.b16 %v938
        %v3177 = vunpack.c.l.b16 %v939
        %v3178 = vunpack.c.h.b16 %v939
        %v3179 = vunpack.c.l.b16 %v940
        %v3180 = vunpack.c.h.b16 %v940
        %v3181 = vunpack.c.l.b16 %v941
        %v3182 = vunpack.c.h.b16 %v941
        %v3183 = vunpack.c.l.b16 %v942
        %v3184 = vunpack.c.h.b16 %v942
        %v3185 = vunpack.c.l.b16 %v943
        %v3186 = vunpack.c.h.b16 %v943
        %v3187 = vunpack.c.l.b16 %v944
        %v3188 = vunpack.c.h.b16 %v944
        %v3189 = vunpack.c.l.b16 %v945
        %v3190 = vunpack.c.h.b16 %v945
        %v3191 = vunpack.c.l.b16 %v946
        %v3192 = vunpack.c.h.b16 %v946
        %v3193 = vunpack.c.l.b16 %v947
        %v3194 = vunpack.c.h.b16 %v947
        %v3195 = vunpack.c.l.b16 %v948
        %v3196 = vunpack.c.h.b16 %v948
        %v3197 = vunpack.c.l.b16 %v949
        %v3198 = vunpack.c.h.b16 %v949
        %v3199 = vunpack.c.l.b16 %v950
        %v3200 = vunpack.c.h.b16 %v950
        %v3201 = vunpack.c.l.b16 %v951
        %v3202 = vunpack.c.h.b16 %v951
        %v3203 = vunpack.c.l.b16 %v952
        %v3204 = vunpack.c.h.b16 %v952
        %v3205 = vunpack.c.l.b16 %v953
        %v3206 = vunpack.c.h.b16 %v953
        %v3207 = vunpack.c.l.b16 %v954
        %v3208 = vunpack.c.h.b16 %v954
        %v3209 = vunpack.c.l.b16 %v955
        %v3210 = vunpack.c.h.b16 %v955
        %v3211 = vunpack.c.l.b16 %v956
        %v3212 = vunpack.c.h.b16 %v956
        %v3213 = vunpack.c.l.b16 %v957
        %v3214 = vunpack.c.h.b16 %v957
        %v3215 = vunpack.c.l.b16 %v958
        %v3216 = vunpack.c.h.b16 %v958
        %v3217 = vunpack.c.l.b16 %v959
        %v3218 = vunpack.c.h.b16 %v959
        %v3219 = vunpack.c.l.b16 %v960
        %v3220 = vunpack.c.h.b16 %v960
        %v3221 = vunpack.c.l.b16 %v961
        %v3222 = vunpack.c.h.b16 %v961
        %v3223 = vunpack.c.l.b16 %v962
        %v3224 = vunpack.c.h.b16 %v962
        %v3225 = vunpack.c.l.b16 %v963
        %v3226 = vunpack.c.h.b16 %v963
        %v3227 = vunpack.c.l.b16 %v964
        %v3228 = vunpack.c.h.b16 %v964
        %v3229 = vunpack.c.l.b16 %v965
        %v3230 = vunpack.c.h.b16 %v965
        %v3231 = vunpack.c.l.b16 %v966
        %v3232 = vunpack.c.h.b16 %v966
        %v3233 = vunpack.c.l.b16 %v967
        %v3234 = vunpack.c.h.b16 %v967
        %v3235 = vunpack.c.l.b16 %v968
        %v3236 = vunpack.c.h.b16 %v968
        %v3237 = vunpack.c.l.b16 %v969
        %v3238 = vunpack.c.h.b16 %v969
        %v3239 = vunpack.c.l.b16 %v970
        %v3240 = vunpack.c.h.b16 %v970
        %v3241 = vunpack.c.l.b16 %v971
        %v3242 = vunpack.c.h.b16 %v971
        %v3243 = vunpack.c.l.b16 %v972
        %v3244 = vunpack.c.h.b16 %v972
        %v3245 = vunpack.c.l.b16 %v973
        %v3246 = vunpack.c.h.b16 %v973
        %v3247 = vunpack.c.l.b16 %v974
        %v3248 = vunpack.c.h.b16 %v974
        %v3249 = vunpack.c.l.b16 %v975
        %v3250 = vunpack.c.h.b16 %v975
        %v3251 = vunpack.c.l.b16 %v976
        %v3252 = vunpack.c.h.b16 %v976
        %v3253 = vunpack.c.l.b16 %v977
        %v3254 = vunpack.c.h.b16 %v977
        %v3255 = vunpack.c.l.b16 %v978
        %v3256 = vunpack.c.h.b16 %v978
        %v3257 = vunpack.c.l.b16 %v979
        %v3258 = vunpack.c.h.b16 %v979
        %v3259 = vunpack.c.l.b16 %v980
        %v3260 = vunpack.c.h.b16 %v980
        %v3261 = vunpack.c.l.b16 %v981
        %v3262 = vunpack.c.h.b16 %v981
        %v3263 = vunpack.c.l.b16 %v982
        %v3264 = vunpack.c.h.b16 %v982
        %v3265 = vunpack.c.l.b16 %v983
        %v3266 = vunpack.c.h.b16 %v983
        %v3267 = vunpack.c.l.b16 %v984
        %v3268 = vunpack.c.h.b16 %v984
        %v3269 = vunpack.c.l.b16 %v985
        %v3270 = vunpack.c.h.b16 %v985
        %v3271 = vunpack.c.l.b16 %v986
        %v3272 = vunpack.c.h.b16 %v986
        %v3273 = vunpack.c.l.b16 %v987
        %v3274 = vunpack.c.h.b16 %v987
        %v3275 = vunpack.c.l.b16 %v988
        %v3276 = vunpack.c.h.b16 %v988
        %v3277 = vunpack.c.l.b16 %v989
        %v3278 = vunpack.c.h.b16 %v989
        %v3279 = vunpack.c.l.b16 %v990
        %v3280 = vunpack.c.h.b16 %v990
        %v3281 = vunpack.c.l.b16 %v991
        %v3282 = vunpack.c.h.b16 %v991
        %v3283 = vunpack.c.l.b16 %v992
        %v3284 = vunpack.c.h.b16 %v992
        %v3285 = vunpack.c.l.b16 %v993
        %v3286 = vunpack.c.h.b16 %v993
        %v3287 = vunpack.c.l.b16 %v994
        %v3288 = vunpack.c.h.b16 %v994
        %v3289 = vunpack.c.l.b16 %v995
        %v3290 = vunpack.c.h.b16 %v995
        %v3291 = vunpack.c.l.b16 %v996
        %v3292 = vunpack.c.h.b16 %v996
        %v3293 = vunpack.c.l.b16 %v997
        %v3294 = vunpack.c.h.b16 %v997
        %v3295 = vunpack.c.l.b16 %v998
        %v3296 = vunpack.c.h.b16 %v998
        %v3297 = vunpack.c.l.b16 %v999
        %v3298 = vunpack.c.h.b16 %v999
        %v3299 = vunpack.c.l.b16 %v1000
        %v3300 = vunpack.c.h.b16 %v1000
        %v3301 = vunpack.c.l.b16 %v1001
        %v3302 = vunpack.c.h.b16 %v1001
        %v3303 = vunpack.c.l.b16 %v1002
        %v3304 = vunpack.c.h.b16 %v1002
        %v3305 = vunpack.c.l.b16 %v1003
        %v3306 = vunpack.c.h.b16 %v1003
        %v3307 = vunpack.c.l.b16 %v1004
        %v3308 = vunpack.c.h.b16 %v1004
        %v3309 = vunpack.c.l.b16 %v1005
        %v3310 = vunpack.c.h.b16 %v1005
        %v3311 = vunpack.c.l.b16 %v1006
        %v3312 = vunpack.c.h.b16 %v1006
        %v3313 = vunpack.c.l.b16 %v1007
        %v3314 = vunpack.c.h.b16 %v1007
        %v3315 = vunpack.c.l.b16 %v1008
        %v3316 = vunpack.c.h.b16 %v1008
        %v3317 = vunpack.c.l.b16 %v1009
        %v3318 = vunpack.c.h.b16 %v1009
        %v3319 = vunpack.c.l.b16 %v1010
        %v3320 = vunpack.c.h.b16 %v1010
        %v3321 = vunpack.c.l.b16 %v1011
        %v3322 = vunpack.c.h.b16 %v1011
        %v3323 = vunpack.c.l.b16 %v1012
        %v3324 = vunpack.c.h.b16 %v1012
        %v3325 = vunpack.c.l.b16 %v1013
        %v3326 = vunpack.c.h.b16 %v1013
        %v3327 = vunpack.c.l.b16 %v1014
        %v3328 = vunpack.c.h.b16 %v1014
        %v3329 = vunpack.c.l.b16 %v1015
        %v3330 = vunpack.c.h.b16 %v1015
        %v3331 = vunpack.c.l.b16 %v1016
        %v3332 = vunpack.c.h.b16 %v1016
        %v3333 = vunpack.c.l.b16 %v1017
        %v3334 = vunpack.c.h.b16 %v1017
        %v3335 = vunpack.c.l.b16 %v1018
        %v3336 = vunpack.c.h.b16 %v1018
        %v3337 = vunpack.c.l.b16 %v1019
        %v3338 = vunpack.c.h.b16 %v1019
        %v3339 = vunpack.c.l.b16 %v1020
        %v3340 = vunpack.c.h.b16 %v1020
        %v3341 = vunpack.c.l.b16 %v1021
        %v3342 = vunpack.c.h.b16 %v1021
        %v3343 = vunpack.c.l.b16 %v1022
        %v3344 = vunpack.c.h.b16 %v1022
        %v3345 = vunpack.c.l.b16 %v1023
        %v3346 = vunpack.c.h.b16 %v1023
        %v3347 = vunpack.c.l.b16 %v1024
        %v3348 = vunpack.c.h.b16 %v1024
        %v3349 = vunpack.c.l.b16 %v1025
        %v3350 = vunpack.c.h.b16 %v1025
        %v3351 = vunpack.c.l.b16 %v1026
        %v3352 = vunpack.c.h.b16 %v1026
        %v3353 = vunpack.c.l.b16 %v1027
        %v3354 = vunpack.c.h.b16 %v1027
        %v3355 = vunpack.c.l.b16 %v1028
        %v3356 = vunpack.c.h.b16 %v1028
        %v3357 = vunpack.c.l.b16 %v1029
        %v3358 = vunpack.c.h.b16 %v1029
        %v3359 = vunpack.c.l.b16 %v1030
        %v3360 = vunpack.c.h.b16 %v1030
        %v3361 = vunpack.c.l.b16 %v1031
        %v3362 = vunpack.c.h.b16 %v1031
        %v3363 = vunpack.c.l.b16 %v1032
        %v3364 = vunpack.c.h.b16 %v1032
        %v3365 = vunpack.c.l.b16 %v1033
        %v3366 = vunpack.c.h.b16 %v1033
        %v3367 = vunpack.c.l.b16 %v1034
        %v3368 = vunpack.c.h.b16 %v1034
        %v3369 = vunpack.c.l.b16 %v1035
        %v3370 = vunpack.c.h.b16 %v1035
        %v3371 = vunpack.c.l.b16 %v1036
        %v3372 = vunpack.c.h.b16 %v1036
        %v3373 = vunpack.c.l.b16 %v1037
        %v3374 = vunpack.c.h.b16 %v1037
        %v3375 = vunpack.c.l.b16 %v1038
        %v3376 = vunpack.c.h.b16 %v1038
        %v3377 = vunpack.c.l.b16 %v1039
        %v3378 = vunpack.c.h.b16 %v1039
        %v3379 = vunpack.c.l.b16 %v1040
        %v3380 = vunpack.c.h.b16 %v1040
        %v3381 = vunpack.c.l.b16 %v1041
        %v3382 = vunpack.c.h.b16 %v1041
        %v3383 = vunpack.c.l.b16 %v1042
        %v3384 = vunpack.c.h.b16 %v1042
        %v3385 = vunpack.c.l.b16 %v1043
        %v3386 = vunpack.c.h.b16 %v1043
        %v3387 = vunpack.c.l.b16 %v1044
        %v3388 = vunpack.c.h.b16 %v1044
        %v3389 = vpack.c.b16 %v1865, %v1853
        %v3390 = vpack.c.b16 %v1866, %v1854
        %v3391 = vpack.c.b16 %v1867, %v1855
        %v3392 = vpack.c.b16 %v1868, %v1856
        %v3393 = vpack.c.b16 %v1869, %v1857
        %v3394 = vpack.c.b16 %v1870, %v1858
        %v3395 = vpack.c.b16 %v1871, %v1859
        %v3396 = vpack.c.b16 %v1872, %v1860
        %v3397 = vpack.c.b16 %v1873, %v1861
        %v3398 = vpack.c.b16 %v1874, %v1862
        %v3399 = vpack.c.b16 %v1875, %v1863
        %v3400 = vpack.c.b16 %v1876, %v1864
        %v3401 = vpack.c.b16 %v1889, %v1877
        %v3402 = vpack.c.b16 %v1890, %v1878
        %v3403 = vpack.c.b16 %v1891, %v1879
        %v3404 = vpack.c.b16 %v1892, %v1880
        %v3405 = vpack.c.b16 %v1893, %v1881
        %v3406 = vpack.c.b16 %v1894, %v1882
        %v3407 = vpack.c.b16 %v1895, %v1883
        %v3408 = vpack.c.b16 %v1896, %v1884
        %v3409 = vpack.c.b16 %v1897, %v1885
        %v3410 = vpack.c.b16 %v1898, %v1886
        %v3411 = vpack.c.b16 %v1899, %v1887
        %v3412 = vpack.c.b16 %v1900, %v1888
        %v3413 = vpack.c.b16 %v1913, %v1901
        %v3414 = vpack.c.b16 %v1914, %v1902
        %v3415 = vpack.c.b16 %v1915, %v1903
        %v3416 = vpack.c.b16 %v1916, %v1904
        %v3417 = vpack.c.b16 %v1917, %v1905
        %v3418 = vpack.c.b16 %v1918, %v1906
        %v3419 = vpack.c.b16 %v1919, %v1907
        %v3420 = vpack.c.b16 %v1920, %v1908
        %v3421 = vpack.c.b16 %v1921, %v1909
        %v3422 = vpack.c.b16 %v1922, %v1910
        %v3423 = vpack.c.b16 %v1923, %v1911
        %v3424 = vpack.c.b16 %v1924, %v1912
        %v3425 = vpack.c.b16 %v1937, %v1925
        %v3426 = vpack.c.b16 %v1938, %v1926
        %v3427 = vpack.c.b16 %v1939, %v1927
        %v3428 = vpack.c.b16 %v1940, %v1928
        %v3429 = vpack.c.b16 %v1941, %v1929
        %v3430 = vpack.c.b16 %v1942, %v1930
        %v3431 = vpack.c.b16 %v1943, %v1931
        %v3432 = vpack.c.b16 %v1944, %v1932
        %v3433 = vpack.c.b16 %v1945, %v1933
        %v3434 = vpack.c.b16 %v1946, %v1934
        %v3435 = vpack.c.b16 %v1947, %v1935
        %v3436 = vpack.c.b16 %v1948, %v1936
        %v3437 = vpack.c.b16 %v1961, %v1949
        %v3438 = vpack.c.b16 %v1962, %v1950
        %v3439 = vpack.c.b16 %v1963, %v1951
        %v3440 = vpack.c.b16 %v1964, %v1952
        %v3441 = vpack.c.b16 %v1965, %v1953
        %v3442 = vpack.c.b16 %v1966, %v1954
        %v3443 = vpack.c.b16 %v1967, %v1955
        %v3444 = vpack.c.b16 %v1968, %v1956
        %v3445 = vpack.c.b16 %v1969, %v1957
        %v3446 = vpack.c.b16 %v1970, %v1958
        %v3447 = vpack.c.b16 %v1971, %v1959
        %v3448 = vpack.c.b16 %v1972, %v1960
        %v3449 = vpack.c.b16 %v1985, %v1973
        %v3450 = vpack.c.b16 %v1986, %v1974
        %v3451 = vpack.c.b16 %v1987, %v1975
        %v3452 = vpack.c.b16 %v1988, %v1976
        %v3453 = vpack.c.b16 %v1989, %v1977
        %v3454 = vpack.c.b16 %v1990, %v1978
        %v3455 = vpack.c.b16 %v1991, %v1979
        %v3456 = vpack.c.b16 %v1992, %v1980
        %v3457 = vpack.c.b16 %v1993, %v1981
        %v3458 = vpack.c.b16 %v1994, %v1982
        %v3459 = vpack.c.b16 %v1995, %v1983
        %v3460 = vpack.c.b16 %v1996, %v1984
        %v3461 = vpack.c.b16 %v2009, %v1997
        %v3462 = vpack.c.b16 %v2010, %v1998
        %v3463 = vpack.c.b16 %v2011, %v1999
        %v3464 = vpack.c.b16 %v2012, %v2000
        %v3465 = vpack.c.b16 %v2013, %v2001
        %v3466 = vpack.c.b16 %v2014, %v2002
        %v3467 = vpack.c.b16 %v2015, %v2003
        %v3468 = vpack.c.b16 %v2016, %v2004
        %v3469 = vpack.c.b16 %v2017, %v2005
        %v3470 = vpack.c.b16 %v2018, %v2006
        %v3471 = vpack.c.b16 %v2019, %v2007
        %v3472 = vpack.c.b16 %v2020, %v2008
        %v3473 = vpack.c.b16 %v2033, %v2021
        %v3474 = vpack.c.b16 %v2034, %v2022
        %v3475 = vpack.c.b16 %v2035, %v2023
        %v3476 = vpack.c.b16 %v2036, %v2024
        %v3477 = vpack.c.b16 %v2037, %v2025
        %v3478 = vpack.c.b16 %v2038, %v2026
        %v3479 = vpack.c.b16 %v2039, %v2027
        %v3480 = vpack.c.b16 %v2040, %v2028
        %v3481 = vpack.c.b16 %v2041, %v2029
        %v3482 = vpack.c.b16 %v2042, %v2030
        %v3483 = vpack.c.b16 %v2043, %v2031
        %v3484 = vpack.c.b16 %v2044, %v2032
        %v3485 = vpack.c.b16 %v2057, %v2045
        %v3486 = vpack.c.b16 %v2058, %v2046
        %v3487 = vpack.c.b16 %v2059, %v2047
        %v3488 = vpack.c.b16 %v2060, %v2048
        %v3489 = vpack.c.b16 %v2061, %v2049
        %v3490 = vpack.c.b16 %v2062, %v2050
        %v3491 = vpack.c.b16 %v2063, %v2051
        %v3492 = vpack.c.b16 %v2064, %v2052
        %v3493 = vpack.c.b16 %v2065, %v2053
        %v3494 = vpack.c.b16 %v2066, %v2054
        %v3495 = vpack.c.b16 %v2067, %v2055
        %v3496 = vpack.c.b16 %v2068, %v2056
        %v3497 = vpack.c.b16 %v2081, %v2069
        %v3498 = vpack.c.b16 %v2082, %v2070
        %v3499 = vpack.c.b16 %v2083, %v2071
        %v3500 = vpack.c.b16 %v2084, %v2072
        %v3501 = vpack.c.b16 %v2085, %v2073
        %v3502 = vpack.c.b16 %v2086, %v2074
        %v3503 = vpack.c.b16 %v2087, %v2075
        %v3504 = vpack.c.b16 %v2088, %v2076
        %v3505 = vpack.c.b16 %v2089, %v2077
        %v3506 = vpack.c.b16 %v2090, %v2078
        %v3507 = vpack.c.b16 %v2091, %v2079
        %v3508 = vpack.c.b16 %v2092, %v2080
        %v3509 = vpack.c.b16 %v2105, %v2093
        %v3510 = vpack.c.b16 %v2106, %v2094
        %v3511 = vpack.c.b16 %v2107, %v2095
        %v3512 = vpack.c.b16 %v2108, %v2096
        %v3513 = vpack.c.b16 %v2109, %v2097
        %v3514 = vpack.c.b16 %v2110, %v2098
        %v3515 = vpack.c.b16 %v2111, %v2099
        %v3516 = vpack.c.b16 %v2112, %v2100
        %v3517 = vpack.c.b16 %v2113, %v2101
        %v3518 = vpack.c.b16 %v2114, %v2102
        %v3519 = vpack.c.b16 %v2115, %v2103
        %v3520 = vpack.c.b16 %v2116, %v2104
        %v3521 = vpack.c.b16 %v2129, %v2117
        %v3522 = vpack.c.b16 %v2130, %v2118
        %v3523 = vpack.c.b16 %v2131, %v2119
        %v3524 = vpack.c.b16 %v2132, %v2120
        %v3525 = vpack.c.b16 %v2133, %v2121
        %v3526 = vpack.c.b16 %v2134, %v2122
        %v3527 = vpack.c.b16 %v2135, %v2123
        %v3528 = vpack.c.b16 %v2136, %v2124
        %v3529 = vpack.c.b16 %v2137, %v2125
        %v3530 = vpack.c.b16 %v2138, %v2126
        %v3531 = vpack.c.b16 %v2139, %v2127
        %v3532 = vpack.c.b16 %v2140, %v2128
        %v3533 = vpack.c.b16 %v2153, %v2141
        %v3534 = vpack.c.b16 %v2154, %v2142
        %v3535 = vpack.c.b16 %v2155, %v2143
        %v3536 = vpack.c.b16 %v2156, %v2144
        %v3537 = vpack.c.b16 %v2157, %v2145
        %v3538 = vpack.c.b16 %v2158, %v2146
        %v3539 = vpack.c.b16 %v2159, %v2147
        %v3540 = vpack.c.b16 %v2160, %v2148
        %v3541 = vpack.c.b16 %v2161, %v2149
        %v3542 = vpack.c.b16 %v2162, %v2150
        %v3543 = vpack.c.b16 %v2163, %v2151
        %v3544 = vpack.c.b16 %v2164, %v2152
        %v3545 = vpack.c.b16 %v2177, %v2165
        %v3546 = vpack.c.b16 %v2178, %v2166
        %v3547 = vpack.c.b16 %v2179, %v2167
        %v3548 = vpack.c.b16 %v2180, %v2168
        %v3549 = vpack.c.b16 %v2181, %v2169
        %v3550 = vpack.c.b16 %v2182, %v2170
        %v3551 = vpack.c.b16 %v2183, %v2171
        %v3552 = vpack.c.b16 %v2184, %v2172
        %v3553 = vpack.c.b16 %v2185, %v2173
        %v3554 = vpack.c.b16 %v2186, %v2174
        %v3555 = vpack.c.b16 %v2187, %v2175
        %v3556 = vpack.c.b16 %v2188, %v2176
        %v3557 = vpack.c.b16 %v2201, %v2189
        %v3558 = vpack.c.b16 %v2202, %v2190
        %v3559 = vpack.c.b16 %v2203, %v2191
        %v3560 = vpack.c.b16 %v2204, %v2192
        %v3561 = vpack.c.b16 %v2205, %v2193
        %v3562 = vpack.c.b16 %v2206, %v2194
        %v3563 = vpack.c.b16 %v2207, %v2195
        %v3564 = vpack.c.b16 %v2208, %v2196
        %v3565 = vpack.c.b16 %v2209, %v2197
        %v3566 = vpack.c.b16 %v2210, %v2198
        %v3567 = vpack.c.b16 %v2211, %v2199
        %v3568 = vpack.c.b16 %v2212, %v2200
        %v3569 = vpack.c.b16 %v2225, %v2213
        %v3570 = vpack.c.b16 %v2226, %v2214
        %v3571 = vpack.c.b16 %v2227, %v2215
        %v3572 = vpack.c.b16 %v2228, %v2216
        %v3573 = vpack.c.b16 %v2229, %v2217
        %v3574 = vpack.c.b16 %v2230, %v2218
        %v3575 = vpack.c.b16 %v2231, %v2219
        %v3576 = vpack.c.b16 %v2232, %v2220
        %v3577 = vpack.c.b16 %v2233, %v2221
        %v3578 = vpack.c.b16 %v2234, %v2222
        %v3579 = vpack.c.b16 %v2235, %v2223
        %v3580 = vpack.c.b16 %v2236, %v2224
        %v3581 = vpack.c.b16 %v2249, %v2237
        %v3582 = vpack.c.b16 %v2250, %v2238
        %v3583 = vpack.c.b16 %v2251, %v2239
        %v3584 = vpack.c.b16 %v2252, %v2240
        %v3585 = vpack.c.b16 %v2253, %v2241
        %v3586 = vpack.c.b16 %v2254, %v2242
        %v3587 = vpack.c.b16 %v2255, %v2243
        %v3588 = vpack.c.b16 %v2256, %v2244
        %v3589 = vpack.c.b16 %v2257, %v2245
        %v3590 = vpack.c.b16 %v2258, %v2246
        %v3591 = vpack.c.b16 %v2259, %v2247
        %v3592 = vpack.c.b16 %v2260, %v2248
        %v3593 = vpack.c.b16 %v2273, %v2261
        %v3594 = vpack.c.b16 %v2274, %v2262
        %v3595 = vpack.c.b16 %v2275, %v2263
        %v3596 = vpack.c.b16 %v2276, %v2264
        %v3597 = vpack.c.b16 %v2277, %v2265
        %v3598 = vpack.c.b16 %v2278, %v2266
        %v3599 = vpack.c.b16 %v2279, %v2267
        %v3600 = vpack.c.b16 %v2280, %v2268
        %v3601 = vpack.c.b16 %v2281, %v2269
        %v3602 = vpack.c.b16 %v2282, %v2270
        %v3603 = vpack.c.b16 %v2283, %v2271
        %v3604 = vpack.c.b16 %v2284, %v2272
        %v3605 = vpack.c.b16 %v2297, %v2285
        %v3606 = vpack.c.b16 %v2298, %v2286
        %v3607 = vpack.c.b16 %v2299, %v2287
        %v3608 = vpack.c.b16 %v2300, %v2288
        %v3609 = vpack.c.b16 %v2301, %v2289
        %v3610 = vpack.c.b16 %v2302, %v2290
        %v3611 = vpack.c.b16 %v2303, %v2291
        %v3612 = vpack.c.b16 %v2304, %v2292
        %v3613 = vpack.c.b16 %v2305, %v2293
        %v3614 = vpack.c.b16 %v2306, %v2294
        %v3615 = vpack.c.b16 %v2307, %v2295
        %v3616 = vpack.c.b16 %v2308, %v2296
        %v3617 = vpack.c.b16 %v2321, %v2309
        %v3618 = vpack.c.b16 %v2322, %v2310
        %v3619 = vpack.c.b16 %v2323, %v2311
        %v3620 = vpack.c.b16 %v2324, %v2312
        %v3621 = vpack.c.b16 %v2325, %v2313
        %v3622 = vpack.c.b16 %v2326, %v2314
        %v3623 = vpack.c.b16 %v2327, %v2315
        %v3624 = vpack.c.b16 %v2328, %v2316
        %v3625 = vpack.c.b16 %v2329, %v2317
        %v3626 = vpack.c.b16 %v2330, %v2318
        %v3627 = vpack.c.b16 %v2331, %v2319
        %v3628 = vpack.c.b16 %v2332, %v2320
        %v3629 = vpack.c.b16 %v2345, %v2333
        %v3630 = vpack.c.b16 %v2346, %v2334
        %v3631 = vpack.c.b16 %v2347, %v2335
        %v3632 = vpack.c.b16 %v2348, %v2336
        %v3633 = vpack.c.b16 %v2349, %v2337
        %v3634 = vpack.c.b16 %v2350, %v2338
        %v3635 = vpack.c.b16 %v2351, %v2339
        %v3636 = vpack.c.b16 %v2352, %v2340
        %v3637 = vpack.c.b16 %v2353, %v2341
        %v3638 = vpack.c.b16 %v2354, %v2342
        %v3639 = vpack.c.b16 %v2355, %v2343
        %v3640 = vpack.c.b16 %v2356, %v2344
        %v3641 = vpack.c.b16 %v2369, %v2357
        %v3642 = vpack.c.b16 %v2370, %v2358
        %v3643 = vpack.c.b16 %v2371, %v2359
        %v3644 = vpack.c.b16 %v2372, %v2360
        %v3645 = vpack.c.b16 %v2373, %v2361
        %v3646 = vpack.c.b16 %v2374, %v2362
        %v3647 = vpack.c.b16 %v2375, %v2363
        %v3648 = vpack.c.b16 %v2376, %v2364
        %v3649 = vpack.c.b16 %v2377, %v2365
        %v3650 = vpack.c.b16 %v2378, %v2366
        %v3651 = vpack.c.b16 %v2379, %v2367
        %v3652 = vpack.c.b16 %v2380, %v2368
        %v3653 = vpack.c.b16 %v2393, %v2381
        %v3654 = vpack.c.b16 %v2394, %v2382
        %v3655 = vpack.c.b16 %v2395, %v2383
        %v3656 = vpack.c.b16 %v2396, %v2384
        %v3657 = vpack.c.b16 %v2397, %v2385
        %v3658 = vpack.c.b16 %v2398, %v2386
        %v3659 = vpack.c.b16 %v2399, %v2387
        %v3660 = vpack.c.b16 %v2400, %v2388
        %v3661 = vpack.c.b16 %v2401, %v2389
        %v3662 = vpack.c.b16 %v2402, %v2390
        %v3663 = vpack.c.b16 %v2403, %v2391
        %v3664 = vpack.c.b16 %v2404, %v2392
        %v3665 = vpack.c.b16 %v2417, %v2405
        %v3666 = vpack.c.b16 %v2418, %v2406
        %v3667 = vpack.c.b16 %v2419, %v2407
        %v3668 = vpack.c.b16 %v2420, %v2408
        %v3669 = vpack.c.b16 %v2421, %v2409
        %v3670 = vpack.c.b16 %v2422, %v2410
        %v3671 = vpack.c.b16 %v2423, %v2411
        %v3672 = vpack.c.b16 %v2424, %v2412
        %v3673 = vpack.c.b16 %v2425, %v2413
        %v3674 = vpack.c.b16 %v2426, %v2414
        %v3675 = vpack.c.b16 %v2427, %v2415
        %v3676 = vpack.c.b16 %v2428, %v2416
        %v3677 = vpack.c.b16 %v2441, %v2429
        %v3678 = vpack.c.b16 %v2442, %v2430
        %v3679 = vpack.c.b16 %v2443, %v2431
        %v3680 = vpack.c.b16 %v2444, %v2432
        %v3681 = vpack.c.b16 %v2445, %v2433
        %v3682 = vpack.c.b16 %v2446, %v2434
        %v3683 = vpack.c.b16 %v2447, %v2435
        %v3684 = vpack.c.b16 %v2448, %v2436
        %v3685 = vpack.c.b16 %v2449, %v2437
        %v3686 = vpack.c.b16 %v2450, %v2438
        %v3687 = vpack.c.b16 %v2451, %v2439
        %v3688 = vpack.c.b16 %v2452, %v2440
        %v3689 = vpack.c.b16 %v2465, %v2453
        %v3690 = vpack.c.b16 %v2466, %v2454
        %v3691 = vpack.c.b16 %v2467, %v2455
        %v3692 = vpack.c.b16 %v2468, %v2456
        %v3693 = vpack.c.b16 %v2469, %v2457
        %v3694 = vpack.c.b16 %v2470, %v2458
        %v3695 = vpack.c.b16 %v2471, %v2459
        %v3696 = vpack.c.b16 %v2472, %v2460
        %v3697 = vpack.c.b16 %v2473, %v2461
        %v3698 = vpack.c.b16 %v2474, %v2462
        %v3699 = vpack.c.b16 %v2475, %v2463
        %v3700 = vpack.c.b16 %v2476, %v2464
        %v3701 = vpack.c.b16 %v2489, %v2477
        %v3702 = vpack.c.b16 %v2490, %v2478
        %v3703 = vpack.c.b16 %v2491, %v2479
        %v3704 = vpack.c.b16 %v2492, %v2480
        %v3705 = vpack.c.b16 %v2493, %v2481
        %v3706 = vpack.c.b16 %v2494, %v2482
        %v3707 = vpack.c.b16 %v2495, %v2483
        %v3708 = vpack.c.b16 %v2496, %v2484
        %v3709 = vpack.c.b16 %v2497, %v2485
        %v3710 = vpack.c.b16 %v2498, %v2486
        %v3711 = vpack.c.b16 %v2499, %v2487
        %v3712 = vpack.c.b16 %v2500, %v2488
        %v3713 = vpack.c.b16 %v2513, %v2501
        %v3714 = vpack.c.b16 %v2514, %v2502
        %v3715 = vpack.c.b16 %v2515, %v2503
        %v3716 = vpack.c.b16 %v2516, %v2504
        %v3717 = vpack.c.b16 %v2517, %v2505
        %v3718 = vpack.c.b16 %v2518, %v2506
        %v3719 = vpack.c.b16 %v2519, %v2507
        %v3720 = vpack.c.b16 %v2520, %v2508
        %v3721 = vpack.c.b16 %v2521, %v2509
        %v3722 = vpack.c.b16 %v2522, %v2510
        %v3723 = vpack.c.b16 %v2523, %v2511
        %v3724 = vpack.c.b16 %v2524, %v2512
        %v3725 = vpack.c.b16 %v2537, %v2525
        %v3726 = vpack.c.b16 %v2538, %v2526
        %v3727 = vpack.c.b16 %v2539, %v2527
        %v3728 = vpack.c.b16 %v2540, %v2528
        %v3729 = vpack.c.b16 %v2541, %v2529
        %v3730 = vpack.c.b16 %v2542, %v2530
        %v3731 = vpack.c.b16 %v2543, %v2531
        %v3732 = vpack.c.b16 %v2544, %v2532
        %v3733 = vpack.c.b16 %v2545, %v2533
        %v3734 = vpack.c.b16 %v2546, %v2534
        %v3735 = vpack.c.b16 %v2547, %v2535
        %v3736 = vpack.c.b16 %v2548, %v2536
        %v3737 = vpack.c.b16 %v2561, %v2549
        %v3738 = vpack.c.b16 %v2562, %v2550
        %v3739 = vpack.c.b16 %v2563, %v2551
        %v3740 = vpack.c.b16 %v2564, %v2552
        %v3741 = vpack.c.b16 %v2565, %v2553
        %v3742 = vpack.c.b16 %v2566, %v2554
        %v3743 = vpack.c.b16 %v2567, %v2555
        %v3744 = vpack.c.b16 %v2568, %v2556
        %v3745 = vpack.c.b16 %v2569, %v2557
        %v3746 = vpack.c.b16 %v2570, %v2558
        %v3747 = vpack.c.b16 %v2571, %v2559
        %v3748 = vpack.c.b16 %v2572, %v2560
        %v3749 = vpack.c.b16 %v2585, %v2573
        %v3750 = vpack.c.b16 %v2586, %v2574
        %v3751 = vpack.c.b16 %v2587, %v2575
        %v3752 = vpack.c.b16 %v2588, %v2576
        %v3753 = vpack.c.b16 %v2589, %v2577
        %v3754 = vpack.c.b16 %v2590, %v2578
        %v3755 = vpack.c.b16 %v2591, %v2579
        %v3756 = vpack.c.b16 %v2592, %v2580
        %v3757 = vpack.c.b16 %v2593, %v2581
        %v3758 = vpack.c.b16 %v2594, %v2582
        %v3759 = vpack.c.b16 %v2595, %v2583
        %v3760 = vpack.c.b16 %v2596, %v2584
        %v3761 = vpack.c.b16 %v2609, %v2597
        %v3762 = vpack.c.b16 %v2610, %v2598
        %v3763 = vpack.c.b16 %v2611, %v2599
        %v3764 = vpack.c.b16 %v2612, %v2600
        %v3765 = vpack.c.b16 %v2613, %v2601
        %v3766 = vpack.c.b16 %v2614, %v2602
        %v3767 = vpack.c.b16 %v2615, %v2603
        %v3768 = vpack.c.b16 %v2616, %v2604
        %v3769 = vpack.c.b16 %v2617, %v2605
        %v3770 = vpack.c.b16 %v2618, %v2606
        %v3771 = vpack.c.b16 %v2619, %v2607
        %v3772 = vpack.c.b16 %v2620, %v2608
        %v3773 = vpack.c.b16 %v2633, %v2621
        %v3774 = vpack.c.b16 %v2634, %v2622
        %v3775 = vpack.c.b16 %v2635, %v2623
        %v3776 = vpack.c.b16 %v2636, %v2624
        %v3777 = vpack.c.b16 %v2637, %v2625
        %v3778 = vpack.c.b16 %v2638, %v2626
        %v3779 = vpack.c.b16 %v2639, %v2627
        %v3780 = vpack.c.b16 %v2640, %v2628
        %v3781 = vpack.c.b16 %v2641, %v2629
        %v3782 = vpack.c.b16 %v2642, %v2630
        %v3783 = vpack.c.b16 %v2643, %v2631
        %v3784 = vpack.c.b16 %v2644, %v2632
        %v3785 = vpack.c.b16 %v2657, %v2645
        %v3786 = vpack.c.b16 %v2658, %v2646
        %v3787 = vpack.c.b16 %v2659, %v2647
        %v3788 = vpack.c.b16 %v2660, %v2648
        %v3789 = vpack.c.b16 %v2661, %v2649
        %v3790 = vpack.c.b16 %v2662, %v2650
        %v3791 = vpack.c.b16 %v2663, %v2651
        %v3792 = vpack.c.b16 %v2664, %v2652
        %v3793 = vpack.c.b16 %v2665, %v2653
        %v3794 = vpack.c.b16 %v2666, %v2654
        %v3795 = vpack.c.b16 %v2667, %v2655
        %v3796 = vpack.c.b16 %v2668, %v2656
        %v3797 = vpack.c.b16 %v2681, %v2669
        %v3798 = vpack.c.b16 %v2682, %v2670
        %v3799 = vpack.c.b16 %v2683, %v2671
        %v3800 = vpack.c.b16 %v2684, %v2672
        %v3801 = vpack.c.b16 %v2685, %v2673
        %v3802 = vpack.c.b16 %v2686, %v2674
        %v3803 = vpack.c.b16 %v2687, %v2675
        %v3804 = vpack.c.b16 %v2688, %v2676
        %v3805 = vpack.c.b16 %v2689, %v2677
        %v3806 = vpack.c.b16 %v2690, %v2678
        %v3807 = vpack.c.b16 %v2691, %v2679
        %v3808 = vpack.c.b16 %v2692, %v2680
        %v3809 = vpack.c.b16 %v2705, %v2693
        %v3810 = vpack.c.b16 %v2706, %v2694
        %v3811 = vpack.c.b16 %v2707, %v2695
        %v3812 = vpack.c.b16 %v2708, %v2696
        %v3813 = vpack.c.b16 %v2709, %v2697
        %v3814 = vpack.c.b16 %v2710, %v2698
        %v3815 = vpack.c.b16 %v2711, %v2699
        %v3816 = vpack.c.b16 %v2712, %v2700
        %v3817 = vpack.c.b16 %v2713, %v2701
        %v3818 = vpack.c.b16 %v2714, %v2702
        %v3819 = vpack.c.b16 %v2715, %v2703
        %v3820 = vpack.c.b16 %v2716, %v2704
        %v3821 = vpack.c.b16 %v2729, %v2717
        %v3822 = vpack.c.b16 %v2730, %v2718
        %v3823 = vpack.c.b16 %v2731, %v2719
        %v3824 = vpack.c.b16 %v2732, %v2720
        %v3825 = vpack.c.b16 %v2733, %v2721
        %v3826 = vpack.c.b16 %v2734, %v2722
        %v3827 = vpack.c.b16 %v2735, %v2723
        %v3828 = vpack.c.b16 %v2736, %v2724
        %v3829 = vpack.c.b16 %v2737, %v2725
        %v3830 = vpack.c.b16 %v2738, %v2726
        %v3831 = vpack.c.b16 %v2739, %v2727
        %v3832 = vpack.c.b16 %v2740, %v2728
        %v3833 = vpack.c.b16 %v2753, %v2741
        %v3834 = vpack.c.b16 %v2754, %v2742
        %v3835 = vpack.c.b16 %v2755, %v2743
        %v3836 = vpack.c.b16 %v2756, %v2744
        %v3837 = vpack.c.b16 %v2757, %v2745
        %v3838 = vpack.c.b16 %v2758, %v2746
        %v3839 = vpack.c.b16 %v2759, %v2747
        %v3840 = vpack.c.b16 %v2760, %v2748
        %v3841 = vpack.c.b16 %v2761, %v2749
        %v3842 = vpack.c.b16 %v2762, %v2750
        %v3843 = vpack.c.b16 %v2763, %v2751
        %v3844 = vpack.c.b16 %v2764, %v2752
        %v3845 = vpack.c.b16 %v2777, %v2765
        %v3846 = vpack.c.b16 %v2778, %v2766
        %v3847 = vpack.c.b16 %v2779, %v2767
        %v3848 = vpack.c.b16 %v2780, %v2768
        %v3849 = vpack.c.b16 %v2781, %v2769
        %v3850 = vpack.c.b16 %v2782, %v2770
        %v3851 = vpack.c.b16 %v2783, %v2771
        %v3852 = vpack.c.b16 %v2784, %v2772
        %v3853 = vpack.c.b16 %v2785, %v2773
        %v3854 = vpack.c.b16 %v2786, %v2774
        %v3855 = vpack.c.b16 %v2787, %v2775
        %v3856 = vpack.c.b16 %v2788, %v2776
        %v3857 = vpack.c.b16 %v2801, %v2789
        %v3858 = vpack.c.b16 %v2802, %v2790
        %v3859 = vpack.c.b16 %v2803, %v2791
        %v3860 = vpack.c.b16 %v2804, %v2792
        %v3861 = vpack.c.b16 %v2805, %v2793
        %v3862 = vpack.c.b16 %v2806, %v2794
        %v3863 = vpack.c.b16 %v2807, %v2795
        %v3864 = vpack.c.b16 %v2808, %v2796
        %v3865 = vpack.c.b16 %v2809, %v2797
        %v3866 = vpack.c.b16 %v2810, %v2798
        %v3867 = vpack.c.b16 %v2811, %v2799
        %v3868 = vpack.c.b16 %v2812, %v2800
        %v3869 = vpack.c.b16 %v2825, %v2813
        %v3870 = vpack.c.b16 %v2826, %v2814
        %v3871 = vpack.c.b16 %v2827, %v2815
        %v3872 = vpack.c.b16 %v2828, %v2816
        %v3873 = vpack.c.b16 %v2829, %v2817
        %v3874 = vpack.c.b16 %v2830, %v2818
        %v3875 = vpack.c.b16 %v2831, %v2819
        %v3876 = vpack.c.b16 %v2832, %v2820
        %v3877 = vpack.c.b16 %v2833, %v2821
        %v3878 = vpack.c.b16 %v2834, %v2822
        %v3879 = vpack.c.b16 %v2835, %v2823
        %v3880 = vpack.c.b16 %v2836, %v2824
        %v3881 = vpack.c.b16 %v2849, %v2837
        %v3882 = vpack.c.b16 %v2850, %v2838
        %v3883 = vpack.c.b16 %v2851, %v2839
        %v3884 = vpack.c.b16 %v2852, %v2840
        %v3885 = vpack.c.b16 %v2853, %v2841
        %v3886 = vpack.c.b16 %v2854, %v2842
        %v3887 = vpack.c.b16 %v2855, %v2843
        %v3888 = vpack.c.b16 %v2856, %v2844
        %v3889 = vpack.c.b16 %v2857, %v2845
        %v3890 = vpack.c.b16 %v2858, %v2846
        %v3891 = vpack.c.b16 %v2859, %v2847
        %v3892 = vpack.c.b16 %v2860, %v2848
        %v3893 = vpack.c.b16 %v2873, %v2861
        %v3894 = vpack.c.b16 %v2874, %v2862
        %v3895 = vpack.c.b16 %v2875, %v2863
        %v3896 = vpack.c.b16 %v2876, %v2864
        %v3897 = vpack.c.b16 %v2877, %v2865
        %v3898 = vpack.c.b16 %v2878, %v2866
        %v3899 = vpack.c.b16 %v2879, %v2867
        %v3900 = vpack.c.b16 %v2880, %v2868
        %v3901 = vpack.c.b16 %v2881, %v2869
        %v3902 = vpack.c.b16 %v2882, %v2870
        %v3903 = vpack.c.b16 %v2883, %v2871
        %v3904 = vpack.c.b16 %v2884, %v2872
        %v3905 = vpack.c.b16 %v2897, %v2885
        %v3906 = vpack.c.b16 %v2898, %v2886
        %v3907 = vpack.c.b16 %v2899, %v2887
        %v3908 = vpack.c.b16 %v2900, %v2888
        %v3909 = vpack.c.b16 %v2901, %v2889
        %v3910 = vpack.c.b16 %v2902, %v2890
        %v3911 = vpack.c.b16 %v2903, %v2891
        %v3912 = vpack.c.b16 %v2904, %v2892
        %v3913 = vpack.c.b16 %v2905, %v2893
        %v3914 = vpack.c.b16 %v2906, %v2894
        %v3915 = vpack.c.b16 %v2907, %v2895
        %v3916 = vpack.c.b16 %v2908, %v2896
        %v3917 = vpack.c.b16 %v2921, %v2909
        %v3918 = vpack.c.b16 %v2922, %v2910
        %v3919 = vpack.c.b16 %v2923, %v2911
        %v3920 = vpack.c.b16 %v2924, %v2912
        %v3921 = vpack.c.b16 %v2925, %v2913
        %v3922 = vpack.c.b16 %v2926, %v2914
        %v3923 = vpack.c.b16 %v2927, %v2915
        %v3924 = vpack.c.b16 %v2928, %v2916
        %v3925 = vpack.c.b16 %v2929, %v2917
        %v3926 = vpack.c.b16 %v2930, %v2918
        %v3927 = vpack.c.b16 %v2931, %v2919
        %v3928 = vpack.c.b16 %v2932, %v2920
        %v3929 = vpack.c.b16 %v2945, %v2933
        %v3930 = vpack.c.b16 %v2946, %v2934
        %v3931 = vpack.c.b16 %v2947, %v2935
        %v3932 = vpack.c.b16 %v2948, %v2936
        %v3933 = vpack.c.b16 %v2949, %v2937
        %v3934 = vpack.c.b16 %v2950, %v2938
        %v3935 = vpack.c.b16 %v2951, %v2939
        %v3936 = vpack.c.b16 %v2952, %v2940
        %v3937 = vpack.c.b16 %v2953, %v2941
        %v3938 = vpack.c.b16 %v2954, %v2942
        %v3939 = vpack.c.b16 %v2955, %v2943
        %v3940 = vpack.c.b16 %v2956, %v2944
        %v3941 = vpack.c.b16 %v2969, %v2957
        %v3942 = vpack.c.b16 %v2970, %v2958
        %v3943 = vpack.c.b16 %v2971, %v2959
        %v3944 = vpack.c.b16 %v2972, %v2960
        %v3945 = vpack.c.b16 %v2973, %v2961
        %v3946 = vpack.c.b16 %v2974, %v2962
        %v3947 = vpack.c.b16 %v2975, %v2963
        %v3948 = vpack.c.b16 %v2976, %v2964
        %v3949 = vpack.c.b16 %v2977, %v2965
        %v3950 = vpack.c.b16 %v2978, %v2966
        %v3951 = vpack.c.b16 %v2979, %v2967
        %v3952 = vpack.c.b16 %v2980, %v2968
        %v3953 = vpack.c.b16 %v2993, %v2981
        %v3954 = vpack.c.b16 %v2994, %v2982
        %v3955 = vpack.c.b16 %v2995, %v2983
        %v3956 = vpack.c.b16 %v2996, %v2984
        %v3957 = vpack.c.b16 %v2997, %v2985
        %v3958 = vpack.c.b16 %v2998, %v2986
        %v3959 = vpack.c.b16 %v2999, %v2987
        %v3960 = vpack.c.b16 %v3000, %v2988
        %v3961 = vpack.c.b16 %v3001, %v2989
        %v3962 = vpack.c.b16 %v3002, %v2990
        %v3963 = vpack.c.b16 %v3003, %v2991
        %v3964 = vpack.c.b16 %v3004, %v2992
        %v3965 = vpack.c.b16 %v3017, %v3005
        %v3966 = vpack.c.b16 %v3018, %v3006
        %v3967 = vpack.c.b16 %v3019, %v3007
        %v3968 = vpack.c.b16 %v3020, %v3008
        %v3969 = vpack.c.b16 %v3021, %v3009
        %v3970 = vpack.c.b16 %v3022, %v3010
        %v3971 = vpack.c.b16 %v3023, %v3011
        %v3972 = vpack.c.b16 %v3024, %v3012
        %v3973 = vpack.c.b16 %v3025, %v3013
        %v3974 = vpack.c.b16 %v3026, %v3014
        %v3975 = vpack.c.b16 %v3027, %v3015
        %v3976 = vpack.c.b16 %v3028, %v3016
        %v3977 = vpack.c.b16 %v3041, %v3029
        %v3978 = vpack.c.b16 %v3042, %v3030
        %v3979 = vpack.c.b16 %v3043, %v3031
        %v3980 = vpack.c.b16 %v3044, %v3032
        %v3981 = vpack.c.b16 %v3045, %v3033
        %v3982 = vpack.c.b16 %v3046, %v3034
        %v3983 = vpack.c.b16 %v3047, %v3035
        %v3984 = vpack.c.b16 %v3048, %v3036
        %v3985 = vpack.c.b16 %v3049, %v3037
        %v3986 = vpack.c.b16 %v3050, %v3038
        %v3987 = vpack.c.b16 %v3051, %v3039
        %v3988 = vpack.c.b16 %v3052, %v3040
        %v3989 = vpack.c.b16 %v3065, %v3053
        %v3990 = vpack.c.b16 %v3066, %v3054
        %v3991 = vpack.c.b16 %v3067, %v3055
        %v3992 = vpack.c.b16 %v3068, %v3056
        %v3993 = vpack.c.b16 %v3069, %v3057
        %v3994 = vpack.c.b16 %v3070, %v3058
        %v3995 = vpack.c.b16 %v3071, %v3059
        %v3996 = vpack.c.b16 %v3072, %v3060
        %v3997 = vpack.c.b16 %v3073, %v3061
        %v3998 = vpack.c.b16 %v3074, %v3062
        %v3999 = vpack.c.b16 %v3075, %v3063
        %v4000 = vpack.c.b16 %v3076, %v3064
        %v4001 = vpack.c.b16 %v3089, %v3077
        %v4002 = vpack.c.b16 %v3090, %v3078
        %v4003 = vpack.c.b16 %v3091, %v3079
        %v4004 = vpack.c.b16 %v3092, %v3080
        %v4005 = vpack.c.b16 %v3093, %v3081
        %v4006 = vpack.c.b16 %v3094, %v3082
        %v4007 = vpack.c.b16 %v3095, %v3083
        %v4008 = vpack.c.b16 %v3096, %v3084
        %v4009 = vpack.c.b16 %v3097, %v3085
        %v4010 = vpack.c.b16 %v3098, %v3086
        %v4011 = vpack.c.b16 %v3099, %v3087
        %v4012 = vpack.c.b16 %v3100, %v3088
        %v4013 = vpack.c.b16 %v3113, %v3101
        %v4014 = vpack.c.b16 %v3114, %v3102
        %v4015 = vpack.c.b16 %v3115, %v3103
        %v4016 = vpack.c.b16 %v3116, %v3104
        %v4017 = vpack.c.b16 %v3117, %v3105
        %v4018 = vpack.c.b16 %v3118, %v3106
        %v4019 = vpack.c.b16 %v3119, %v3107
        %v4020 = vpack.c.b16 %v3120, %v3108
        %v4021 = vpack.c.b16 %v3121, %v3109
        %v4022 = vpack.c.b16 %v3122, %v3110
        %v4023 = vpack.c.b16 %v3123, %v3111
        %v4024 = vpack.c.b16 %v3124, %v3112
        %v4025 = vpack.c.b16 %v3137, %v3125
        %v4026 = vpack.c.b16 %v3138, %v3126
        %v4027 = vpack.c.b16 %v3139, %v3127
        %v4028 = vpack.c.b16 %v3140, %v3128
        %v4029 = vpack.c.b16 %v3141, %v3129
        %v4030 = vpack.c.b16 %v3142, %v3130
        %v4031 = vpack.c.b16 %v3143, %v3131
        %v4032 = vpack.c.b16 %v3144, %v3132
        %v4033 = vpack.c.b16 %v3145, %v3133
        %v4034 = vpack.c.b16 %v3146, %v3134
        %v4035 = vpack.c.b16 %v3147, %v3135
        %v4036 = vpack.c.b16 %v3148, %v3136
        %v4037 = vpack.c.b16 %v3161, %v3149
        %v4038 = vpack.c.b16 %v3162, %v3150
        %v4039 = vpack.c.b16 %v3163, %v3151
        %v4040 = vpack.c.b16 %v3164, %v3152
        %v4041 = vpack.c.b16 %v3165, %v3153
        %v4042 = vpack.c.b16 %v3166, %v3154
        %v4043 = vpack.c.b16 %v3167, %v3155
        %v4044 = vpack.c.b16 %v3168, %v3156
        %v4045 = vpack.c.b16 %v3169, %v3157
        %v4046 = vpack.c.b16 %v3170, %v3158
        %v4047 = vpack.c.b16 %v3171, %v3159
        %v4048 = vpack.c.b16 %v3172, %v3160
        %v4049 = vpack.c.b16 %v3185, %v3173
        %v4050 = vpack.c.b16 %v3186, %v3174
        %v4051 = vpack.c.b16 %v3187, %v3175
        %v4052 = vpack.c.b16 %v3188, %v3176
        %v4053 = vpack.c.b16 %v3189, %v3177
        %v4054 = vpack.c.b16 %v3190, %v3178
        %v4055 = vpack.c.b16 %v3191, %v3179
        %v4056 = vpack.c.b16 %v3192, %v3180
        %v4057 = vpack.c.b16 %v3193, %v3181
        %v4058 = vpack.c.b16 %v3194, %v3182
        %v4059 = vpack.c.b16 %v3195, %v3183
        %v4060 = vpack.c.b16 %v3196, %v3184
        %v4061 = vpack.c.b16 %v3209, %v3197
        %v4062 = vpack.c.b16 %v3210, %v3198
        %v4063 = vpack.c.b16 %v3211, %v3199
        %v4064 = vpack.c.b16 %v3212, %v3200
        %v4065 = vpack.c.b16 %v3213, %v3201
        %v4066 = vpack.c.b16 %v3214, %v3202
        %v4067 = vpack.c.b16 %v3215, %v3203
        %v4068 = vpack.c.b16 %v3216, %v3204
        %v4069 = vpack.c.b16 %v3217, %v3205
        %v4070 = vpack.c.b16 %v3218, %v3206
        %v4071 = vpack.c.b16 %v3219, %v3207
        %v4072 = vpack.c.b16 %v3220, %v3208
        %v4073 = vpack.c.b16 %v3233, %v3221
        %v4074 = vpack.c.b16 %v3234, %v3222
        %v4075 = vpack.c.b16 %v3235, %v3223
        %v4076 = vpack.c.b16 %v3236, %v3224
        %v4077 = vpack.c.b16 %v3237, %v3225
        %v4078 = vpack.c.b16 %v3238, %v3226
        %v4079 = vpack.c.b16 %v3239, %v3227
        %v4080 = vpack.c.b16 %v3240, %v3228
        %v4081 = vpack.c.b16 %v3241, %v3229
        %v4082 = vpack.c.b16 %v3242, %v3230
        %v4083 = vpack.c.b16 %v3243, %v3231
        %v4084 = vpack.c.b16 %v3244, %v3232
        %v4085 = vpack.c.b16 %v3257, %v3245
        %v4086 = vpack.c.b16 %v3258, %v3246
        %v4087 = vpack.c.b16 %v3259, %v3247
        %v4088 = vpack.c.b16 %v3260, %v3248
        %v4089 = vpack.c.b16 %v3261, %v3249
        %v4090 = vpack.c.b16 %v3262, %v3250
        %v4091 = vpack.c.b16 %v3263, %v3251
        %v4092 = vpack.c.b16 %v3264, %v3252
        %v4093 = vpack.c.b16 %v3265, %v3253
        %v4094 = vpack.c.b16 %v3266, %v3254
        %v4095 = vpack.c.b16 %v3267, %v3255
        %v4096 = vpack.c.b16 %v3268, %v3256
        %v4097 = vpack.c.b16 %v3281, %v3269
        %v4098 = vpack.c.b16 %v3282, %v3270
        %v4099 = vpack.c.b16 %v3283, %v3271
        %v4100 = vpack.c.b16 %v3284, %v3272
        %v4101 = vpack.c.b16 %v3285, %v3273
        %v4102 = vpack.c.b16 %v3286, %v3274
        %v4103 = vpack.c.b16 %v3287, %v3275
        %v4104 = vpack.c.b16 %v3288, %v3276
        %v4105 = vpack.c.b16 %v3289, %v3277
        %v4106 = vpack.c.b16 %v3290, %v3278
        %v4107 = vpack.c.b16 %v3291, %v3279
        %v4108 = vpack.c.b16 %v3292, %v3280
        %v4109 = vpack.c.b16 %v3305, %v3293
        %v4110 = vpack.c.b16 %v3306, %v3294
        %v4111 = vpack.c.b16 %v3307, %v3295
        %v4112 = vpack.c.b16 %v3308, %v3296
        %v4113 = vpack.c.b16 %v3309, %v3297
        %v4114 = vpack.c.b16 %v3310, %v3298
        %v4115 = vpack.c.b16 %v3311, %v3299
        %v4116 = vpack.c.b16 %v3312, %v3300
        %v4117 = vpack.c.b16 %v3313, %v3301
        %v4118 = vpack.c.b16 %v3314, %v3302
        %v4119 = vpack.c.b16 %v3315, %v3303
        %v4120 = vpack.c.b16 %v3316, %v3304
        %v4121 = vpack.c.b16 %v3329, %v3317
        %v4122 = vpack.c.b16 %v3330, %v3318
        %v4123 = vpack.c.b16 %v3331, %v3319
        %v4124 = vpack.c.b16 %v3332, %v3320
        %v4125 = vpack.c.b16 %v3333, %v3321
        %v4126 = vpack.c.b16 %v3334, %v3322
        %v4127 = vpack.c.b16 %v3335, %v3323
        %v4128 = vpack.c.b16 %v3336, %v3324
        %v4129 = vpack.c.b16 %v3337, %v3325
        %v4130 = vpack.c.b16 %v3338, %v3326
        %v4131 = vpack.c.b16 %v3339, %v3327
        %v4132 = vpack.c.b16 %v3340, %v3328
        %v4133 = vpack.c.b16 %v3353, %v3341
        %v4134 = vpack.c.b16 %v3354, %v3342
        %v4135 = vpack.c.b16 %v3355, %v3343
        %v4136 = vpack.c.b16 %v3356, %v3344
        %v4137 = vpack.c.b16 %v3357, %v3345
        %v4138 = vpack.c.b16 %v3358, %v3346
        %v4139 = vpack.c.b16 %v3359, %v3347
        %v4140 = vpack.c.b16 %v3360, %v3348
        %v4141 = vpack.c.b16 %v3361, %v3349
        %v4142 = vpack.c.b16 %v3362, %v3350
        %v4143 = vpack.c.b16 %v3363, %v3351
        %v4144 = vpack.c.b16 %v3364, %v3352
        %v4145 = vpack.c.b16 %v3377, %v3365
        %v4146 = vpack.c.b16 %v3378, %v3366
        %v4147 = vpack.c.b16 %v3379, %v3367
        %v4148 = vpack.c.b16 %v3380, %v3368
        %v4149 = vpack.c.b16 %v3381, %v3369
        %v4150 = vpack.c.b16 %v3382, %v3370
        %v4151 = vpack.c.b16 %v3383, %v3371
        %v4152 = vpack.c.b16 %v3384, %v3372
        %v4153 = vpack.c.b16 %v3385, %v3373
        %v4154 = vpack.c.b16 %v3386, %v3374
        %v4155 = vpack.c.b16 %v3387, %v3375
        %v4156 = vpack.c.b16 %v3388, %v3376
        %4925 = vmatprep.subr.bf16.mxu0 %v3390
        %4926 = vmatpush1.bf16.msra.mxu0 %v3389
        %4927 = vmatprep.subr.bf16.mxu0 %v3402
        %4928 = vmatpush1.bf16.msra.mxu0 %v3401
        %4929 = vmatprep.subr.bf16.mxu0 %v3414
        %4930 = vmatpush1.bf16.msra.mxu0 %v3413
        %4931 = vmatprep.subr.bf16.mxu0 %v3426
        %4932 = vmatpush1.bf16.msra.mxu0 %v3425
        %4933 = vmatprep.subr.bf16.mxu0 %v3438
        %4934 = vmatpush1.bf16.msra.mxu0 %v3437
        %4935 = vmatprep.subr.bf16.mxu0 %v3450
        %4936 = vmatpush1.bf16.msra.mxu0 %v3449
        %4937 = vmatprep.subr.bf16.mxu0 %v3462
        %4938 = vmatpush1.bf16.msra.mxu0 %v3461
        %4939 = vmatprep.subr.bf16.mxu0 %v3474
        %4940 = vmatpush1.bf16.msra.mxu0 %v3473
        %4941 = vmatprep.subr.bf16.mxu0 %v3486
        %4942 = vmatpush1.bf16.msra.mxu0 %v3485
        %4943 = vmatprep.subr.bf16.mxu0 %v3498
        %4944 = vmatpush1.bf16.msra.mxu0 %v3497
        %4945 = vmatprep.subr.bf16.mxu0 %v3510
        %4946 = vmatpush1.bf16.msra.mxu0 %v3509
        %4947 = vmatprep.subr.bf16.mxu0 %v3522
        %4948 = vmatpush1.bf16.msra.mxu0 %v3521
        %4949 = vmatprep.subr.bf16.mxu0 %v3534
        %4950 = vmatpush1.bf16.msra.mxu0 %v3533
        %4951 = vmatprep.subr.bf16.mxu0 %v3546
        %4952 = vmatpush1.bf16.msra.mxu0 %v3545
        %4953 = vmatprep.subr.bf16.mxu0 %v3558
        %4954 = vmatpush1.bf16.msra.mxu0 %v3557
        %4955 = vmatprep.subr.bf16.mxu0 %v3570
        %4956 = vmatpush1.bf16.msra.mxu0 %v3569
        %4957 = vmatprep.mubr.bf16.mxu0 %v1070
        %4958 = vmatmul.mubr.bf16.gmra.mrb[0].mxu0 %v1069
        %v4959 = vpop.f32.mrb[0].mxu0
        %v4960 = vadd.f32 0.0, %v4959
        %v4961 = vpop.f32.mrb[0].mxu0
        %v4962 = vadd.f32 0.0, %v4961
        %v4963 = vpop.f32.mrb[0].mxu0
        %v4964 = vadd.f32 0.0, %v4963
        %v4965 = vpop.f32.mrb[0].mxu0
        %v4966 = vadd.f32 0.0, %v4965
        %4967 = vdwg.mxu0
        %4968 = vmatprep.subr.bf16.mxu0 %v3582
        %4969 = vmatpush1.bf16.msra.mxu0 %v3581
        %4970 = vmatprep.subr.bf16.mxu0 %v3594
        %4971 = vmatpush1.bf16.msra.mxu0 %v3593
        %4972 = vmatprep.subr.bf16.mxu0 %v3606
        %4973 = vmatpush1.bf16.msra.mxu0 %v3605
        %4974 = vmatprep.subr.bf16.mxu0 %v3618
        %4975 = vmatpush1.bf16.msra.mxu0 %v3617
        %4976 = vmatprep.subr.bf16.mxu0 %v3630
        %4977 = vmatpush1.bf16.msra.mxu0 %v3629
        %4978 = vmatprep.subr.bf16.mxu0 %v3642
        %4979 = vmatpush1.bf16.msra.mxu0 %v3641
        %4980 = vmatprep.subr.bf16.mxu0 %v3654
        %4981 = vmatpush1.bf16.msra.mxu0 %v3653
        %4982 = vmatprep.subr.bf16.mxu0 %v3666
        %4983 = vmatpush1.bf16.msra.mxu0 %v3665
        %4984 = vmatprep.subr.bf16.mxu0 %v3678
        %4985 = vmatpush1.bf16.msra.mxu0 %v3677
        %4986 = vmatprep.subr.bf16.mxu0 %v3690
        %4987 = vmatpush1.bf16.msra.mxu0 %v3689
        %4988 = vmatprep.subr.bf16.mxu0 %v3702
        %4989 = vmatpush1.bf16.msra.mxu0 %v3701
        %4990 = vmatprep.subr.bf16.mxu0 %v3714
        %4991 = vmatpush1.bf16.msra.mxu0 %v3713
        %4992 = vmatprep.subr.bf16.mxu0 %v3726
        %4993 = vmatpush1.bf16.msra.mxu0 %v3725
        %4994 = vmatprep.subr.bf16.mxu0 %v3738
        %4995 = vmatpush1.bf16.msra.mxu0 %v3737
        %4996 = vmatprep.subr.bf16.mxu0 %v3750
        %4997 = vmatpush1.bf16.msra.mxu0 %v3749
        %4998 = vmatprep.subr.bf16.mxu0 %v3762
        %4999 = vmatpush1.bf16.msra.mxu0 %v3761
        %5000 = vmatprep.mubr.bf16.mxu0 %v1072
        %5001 = vmatmul.mubr.bf16.gmra.mrb[0].mxu0 %v1071
        %v5002 = vpop.f32.mrb[0].mxu0
        %v5003 = vadd.f32 %v4960, %v5002
        %v5004 = vpop.f32.mrb[0].mxu0
        %v5005 = vadd.f32 %v4962, %v5004
        %v5006 = vpop.f32.mrb[0].mxu0
        %v5007 = vadd.f32 %v4964, %v5006
        %v5008 = vpop.f32.mrb[0].mxu0
        %v5009 = vadd.f32 %v4966, %v5008
        %5010 = vdwg.mxu0
        %5011 = vmatprep.subr.bf16.mxu0 %v3774
        %5012 = vmatpush1.bf16.msra.mxu0 %v3773
        %5013 = vmatprep.subr.bf16.mxu0 %v3786
        %5014 = vmatpush1.bf16.msra.mxu0 %v3785
        %5015 = vmatprep.subr.bf16.mxu0 %v3798
        %5016 = vmatpush1.bf16.msra.mxu0 %v3797
        %5017 = vmatprep.subr.bf16.mxu0 %v3810
        %5018 = vmatpush1.bf16.msra.mxu0 %v3809
        %5019 = vmatprep.subr.bf16.mxu0 %v3822
        %5020 = vmatpush1.bf16.msra.mxu0 %v3821
        %5021 = vmatprep.subr.bf16.mxu0 %v3834
        %5022 = vmatpush1.bf16.msra.mxu0 %v3833
        %5023 = vmatprep.subr.bf16.mxu0 %v3846
        %5024 = vmatpush1.bf16.msra.mxu0 %v3845
        %5025 = vmatprep.subr.bf16.mxu0 %v3858
        %5026 = vmatpush1.bf16.msra.mxu0 %v3857
        %5027 = vmatprep.subr.bf16.mxu0 %v3870
        %5028 = vmatpush1.bf16.msra.mxu0 %v3869
        %5029 = vmatprep.subr.bf16.mxu0 %v3882
        %5030 = vmatpush1.bf16.msra.mxu0 %v3881
        %5031 = vmatprep.subr.bf16.mxu0 %v3894
        %5032 = vmatpush1.bf16.msra.mxu0 %v3893
        %5033 = vmatprep.subr.bf16.mxu0 %v3906
        %5034 = vmatpush1.bf16.msra.mxu0 %v3905
        %5035 = vmatprep.subr.bf16.mxu0 %v3918
        %5036 = vmatpush1.bf16.msra.mxu0 %v3917
        %5037 = vmatprep.subr.bf16.mxu0 %v3930
        %5038 = vmatpush1.bf16.msra.mxu0 %v3929
        %5039 = vmatprep.subr.bf16.mxu0 %v3942
        %5040 = vmatpush1.bf16.msra.mxu0 %v3941
        %5041 = vmatprep.subr.bf16.mxu0 %v3954
        %5042 = vmatpush1.bf16.msra.mxu0 %v3953
        %5043 = vmatprep.mubr.bf16.mxu0 %v1074
        %5044 = vmatmul.mubr.bf16.gmra.mrb[0].mxu0 %v1073
        %v5045 = vpop.f32.mrb[0].mxu0
        %v5046 = vadd.f32 %v5003, %v5045
        %v5047 = vpop.f32.mrb[0].mxu0
        %v5048 = vadd.f32 %v5005, %v5047
        %v5049 = vpop.f32.mrb[0].mxu0
        %v5050 = vadd.f32 %v5007, %v5049
        %v5051 = vpop.f32.mrb[0].mxu0
        %v5052 = vadd.f32 %v5009, %v5051
        %5053 = vdwg.mxu0
        %5054 = vmatprep.subr.bf16.mxu0 %v3966
        %5055 = vmatpush1.bf16.msra.mxu0 %v3965
        %5056 = vmatprep.subr.bf16.mxu0 %v3978
        %5057 = vmatpush1.bf16.msra.mxu0 %v3977
        %5058 = vmatprep.subr.bf16.mxu0 %v3990
        %5059 = vmatpush1.bf16.msra.mxu0 %v3989
        %5060 = vmatprep.subr.bf16.mxu0 %v4002
        %5061 = vmatpush1.bf16.msra.mxu0 %v4001
        %5062 = vmatprep.subr.bf16.mxu0 %v4014
        %5063 = vmatpush1.bf16.msra.mxu0 %v4013
        %5064 = vmatprep.subr.bf16.mxu0 %v4026
        %5065 = vmatpush1.bf16.msra.mxu0 %v4025
        %5066 = vmatprep.subr.bf16.mxu0 %v4038
        %5067 = vmatpush1.bf16.msra.mxu0 %v4037
        %5068 = vmatprep.subr.bf16.mxu0 %v4050
        %5069 = vmatpush1.bf16.msra.mxu0 %v4049
        %5070 = vmatprep.subr.bf16.mxu0 %v4062
        %5071 = vmatpush1.bf16.msra.mxu0 %v4061
        %5072 = vmatprep.subr.bf16.mxu0 %v4074
        %5073 = vmatpush1.bf16.msra.mxu0 %v4073
        %5074 = vmatprep.subr.bf16.mxu0 %v4086
        %5075 = vmatpush1.bf16.msra.mxu0 %v4085
        %5076 = vmatprep.subr.bf16.mxu0 %v4098
        %5077 = vmatpush1.bf16.msra.mxu0 %v4097
        %5078 = vmatprep.subr.bf16.mxu0 %v4110
        %5079 = vmatpush1.bf16.msra.mxu0 %v4109
        %5080 = vmatprep.subr.bf16.mxu0 %v4122
        %5081 = vmatpush1.bf16.msra.mxu0 %v4121
        %5082 = vmatprep.subr.bf16.mxu0 %v4134
        %5083 = vmatpush1.bf16.msra.mxu0 %v4133
        %5084 = vmatprep.subr.bf16.mxu0 %v4146
        %5085 = vmatpush1.bf16.msra.mxu0 %v4145
        %5086 = vmatprep.mubr.bf16.mxu0 %v1076
        %5087 = vmatmul.mubr.bf16.gmra.mrb[0].mxu0 %v1075
        %v5088 = vpop.f32.mrb[0].mxu0
        %v5089 = vadd.f32 %v5046, %v5088
        %v5090 = vpop.f32.mrb[0].mxu0
        %v5091 = vadd.f32 %v5048, %v5090
        %v5092 = vpop.f32.mrb[0].mxu0
        %v5093 = vadd.f32 %v5050, %v5092
        %v5094 = vpop.f32.mrb[0].mxu0
        %v5095 = vadd.f32 %v5052, %v5094
        %5096 = vdwg.mxu0
        %5097 = vmatprep.subr.bf16.mxu0 %v3392
        %5098 = vmatpush1.bf16.msra.mxu0 %v3391
        %5099 = vmatprep.subr.bf16.mxu0 %v3404
        %5100 = vmatpush1.bf16.msra.mxu0 %v3403
        %5101 = vmatprep.subr.bf16.mxu0 %v3416
        %5102 = vmatpush1.bf16.msra.mxu0 %v3415
        %5103 = vmatprep.subr.bf16.mxu0 %v3428
        %5104 = vmatpush1.bf16.msra.mxu0 %v3427
        %5105 = vmatprep.subr.bf16.mxu0 %v3440
        %5106 = vmatpush1.bf16.msra.mxu0 %v3439
        %5107 = vmatprep.subr.bf16.mxu0 %v3452
        %5108 = vmatpush1.bf16.msra.mxu0 %v3451
        %5109 = vmatprep.subr.bf16.mxu0 %v3464
        %5110 = vmatpush1.bf16.msra.mxu0 %v3463
        %5111 = vmatprep.subr.bf16.mxu0 %v3476
        %5112 = vmatpush1.bf16.msra.mxu0 %v3475
        %5113 = vmatprep.subr.bf16.mxu0 %v3488
        %5114 = vmatpush1.bf16.msra.mxu0 %v3487
        %5115 = vmatprep.subr.bf16.mxu0 %v3500
        %5116 = vmatpush1.bf16.msra.mxu0 %v3499
        %5117 = vmatprep.subr.bf16.mxu0 %v3512
        %5118 = vmatpush1.bf16.msra.mxu0 %v3511
        %5119 = vmatprep.subr.bf16.mxu0 %v3524
        %5120 = vmatpush1.bf16.msra.mxu0 %v3523
        %5121 = vmatprep.subr.bf16.mxu0 %v3536
        %5122 = vmatpush1.bf16.msra.mxu0 %v3535
        %5123 = vmatprep.subr.bf16.mxu0 %v3548
        %5124 = vmatpush1.bf16.msra.mxu0 %v3547
        %5125 = vmatprep.subr.bf16.mxu0 %v3560
        %5126 = vmatpush1.bf16.msra.mxu0 %v3559
        %5127 = vmatprep.subr.bf16.mxu0 %v3572
        %5128 = vmatpush1.bf16.msra.mxu0 %v3571
        %5129 = vmatprep.mubr.bf16.mxu0 %v1070
        %5130 = vmatmul.mubr.bf16.gmra.mrb[0].mxu0 %v1069
        %v5131 = vpop.f32.mrb[0].mxu0
        %v5132 = vadd.f32 0.0, %v5131
        %v5133 = vpop.f32.mrb[0].mxu0
        %v5134 = vadd.f32 0.0, %v5133
        %v5135 = vpop.f32.mrb[0].mxu0
        %v5136 = vadd.f32 0.0, %v5135
        %v5137 = vpop.f32.mrb[0].mxu0
        %v5138 = vadd.f32 0.0, %v5137
        %5139 = vdwg.mxu0
        %5140 = vmatprep.subr.bf16.mxu0 %v3584
        %5141 = vmatpush1.bf16.msra.mxu0 %v3583
        %5142 = vmatprep.subr.bf16.mxu0 %v3596
        %5143 = vmatpush1.bf16.msra.mxu0 %v3595
        %5144 = vmatprep.subr.bf16.mxu0 %v3608
        %5145 = vmatpush1.bf16.msra.mxu0 %v3607
        %5146 = vmatprep.subr.bf16.mxu0 %v3620
        %5147 = vmatpush1.bf16.msra.mxu0 %v3619
        %5148 = vmatprep.subr.bf16.mxu0 %v3632
        %5149 = vmatpush1.bf16.msra.mxu0 %v3631
        %5150 = vmatprep.subr.bf16.mxu0 %v3644
        %5151 = vmatpush1.bf16.msra.mxu0 %v3643
        %5152 = vmatprep.subr.bf16.mxu0 %v3656
        %5153 = vmatpush1.bf16.msra.mxu0 %v3655
        %5154 = vmatprep.subr.bf16.mxu0 %v3668
        %5155 = vmatpush1.bf16.msra.mxu0 %v3667
        %5156 = vmatprep.subr.bf16.mxu0 %v3680
        %5157 = vmatpush1.bf16.msra.mxu0 %v3679
        %5158 = vmatprep.subr.bf16.mxu0 %v3692
        %5159 = vmatpush1.bf16.msra.mxu0 %v3691
        %5160 = vmatprep.subr.bf16.mxu0 %v3704
        %5161 = vmatpush1.bf16.msra.mxu0 %v3703
        %5162 = vmatprep.subr.bf16.mxu0 %v3716
        %5163 = vmatpush1.bf16.msra.mxu0 %v3715
        %5164 = vmatprep.subr.bf16.mxu0 %v3728
        %5165 = vmatpush1.bf16.msra.mxu0 %v3727
        %5166 = vmatprep.subr.bf16.mxu0 %v3740
        %5167 = vmatpush1.bf16.msra.mxu0 %v3739
        %5168 = vmatprep.subr.bf16.mxu0 %v3752
        %5169 = vmatpush1.bf16.msra.mxu0 %v3751
        %5170 = vmatprep.subr.bf16.mxu0 %v3764
        %5171 = vmatpush1.bf16.msra.mxu0 %v3763
        %5172 = vmatprep.mubr.bf16.mxu0 %v1072
        %5173 = vmatmul.mubr.bf16.gmra.mrb[0].mxu0 %v1071
        %v5174 = vpop.f32.mrb[0].mxu0
        %v5175 = vadd.f32 %v5132, %v5174
        %v5176 = vpop.f32.mrb[0].mxu0
        %v5177 = vadd.f32 %v5134, %v5176
        %v5178 = vpop.f32.mrb[0].mxu0
        %v5179 = vadd.f32 %v5136, %v5178
        %v5180 = vpop.f32.mrb[0].mxu0
        %v5181 = vadd.f32 %v5138, %v5180
        %5182 = vdwg.mxu0
        %5183 = vmatprep.subr.bf16.mxu0 %v3776
        %5184 = vmatpush1.bf16.msra.mxu0 %v3775
        %5185 = vmatprep.subr.bf16.mxu0 %v3788
        %5186 = vmatpush1.bf16.msra.mxu0 %v3787
        %5187 = vmatprep.subr.bf16.mxu0 %v3800
        %5188 = vmatpush1.bf16.msra.mxu0 %v3799
        %5189 = vmatprep.subr.bf16.mxu0 %v3812
        %5190 = vmatpush1.bf16.msra.mxu0 %v3811
        %5191 = vmatprep.subr.bf16.mxu0 %v3824
        %5192 = vmatpush1.bf16.msra.mxu0 %v3823
        %5193 = vmatprep.subr.bf16.mxu0 %v3836
        %5194 = vmatpush1.bf16.msra.mxu0 %v3835
        %5195 = vmatprep.subr.bf16.mxu0 %v3848
        %5196 = vmatpush1.bf16.msra.mxu0 %v3847
        %5197 = vmatprep.subr.bf16.mxu0 %v3860
        %5198 = vmatpush1.bf16.msra.mxu0 %v3859
        %5199 = vmatprep.subr.bf16.mxu0 %v3872
        %5200 = vmatpush1.bf16.msra.mxu0 %v3871
        %5201 = vmatprep.subr.bf16.mxu0 %v3884
        %5202 = vmatpush1.bf16.msra.mxu0 %v3883
        %5203 = vmatprep.subr.bf16.mxu0 %v3896
        %5204 = vmatpush1.bf16.msra.mxu0 %v3895
        %5205 = vmatprep.subr.bf16.mxu0 %v3908
        %5206 = vmatpush1.bf16.msra.mxu0 %v3907
        %5207 = vmatprep.subr.bf16.mxu0 %v3920
        %5208 = vmatpush1.bf16.msra.mxu0 %v3919
        %5209 = vmatprep.subr.bf16.mxu0 %v3932
        %5210 = vmatpush1.bf16.msra.mxu0 %v3931
        %5211 = vmatprep.subr.bf16.mxu0 %v3944
        %5212 = vmatpush1.bf16.msra.mxu0 %v3943
        %5213 = vmatprep.subr.bf16.mxu0 %v3956
        %5214 = vmatpush1.bf16.msra.mxu0 %v3955
        %5215 = vmatprep.mubr.bf16.mxu0 %v1074
        %5216 = vmatmul.mubr.bf16.gmra.mrb[0].mxu0 %v1073
        %v5217 = vpop.f32.mrb[0].mxu0
        %v5218 = vadd.f32 %v5175, %v5217
        %v5219 = vpop.f32.mrb[0].mxu0
        %v5220 = vadd.f32 %v5177, %v5219
        %v5221 = vpop.f32.mrb[0].mxu0
        %v5222 = vadd.f32 %v5179, %v5221
        %v5223 = vpop.f32.mrb[0].mxu0
        %v5224 = vadd.f32 %v5181, %v5223
        %5225 = vdwg.mxu0
        %5226 = vmatprep.subr.bf16.mxu0 %v3968
        %5227 = vmatpush1.bf16.msra.mxu0 %v3967
        %5228 = vmatprep.subr.bf16.mxu0 %v3980
        %5229 = vmatpush1.bf16.msra.mxu0 %v3979
        %5230 = vmatprep.subr.bf16.mxu0 %v3992
        %5231 = vmatpush1.bf16.msra.mxu0 %v3991
        %5232 = vmatprep.subr.bf16.mxu0 %v4004
        %5233 = vmatpush1.bf16.msra.mxu0 %v4003
        %5234 = vmatprep.subr.bf16.mxu0 %v4016
        %5235 = vmatpush1.bf16.msra.mxu0 %v4015
        %5236 = vmatprep.subr.bf16.mxu0 %v4028
        %5237 = vmatpush1.bf16.msra.mxu0 %v4027
        %5238 = vmatprep.subr.bf16.mxu0 %v4040
        %5239 = vmatpush1.bf16.msra.mxu0 %v4039
        %5240 = vmatprep.subr.bf16.mxu0 %v4052
        %5241 = vmatpush1.bf16.msra.mxu0 %v4051
        %5242 = vmatprep.subr.bf16.mxu0 %v4064
        %5243 = vmatpush1.bf16.msra.mxu0 %v4063
        %5244 = vmatprep.subr.bf16.mxu0 %v4076
        %5245 = vmatpush1.bf16.msra.mxu0 %v4075
        %5246 = vmatprep.subr.bf16.mxu0 %v4088
        %5247 = vmatpush1.bf16.msra.mxu0 %v4087
        %5248 = vmatprep.subr.bf16.mxu0 %v4100
        %5249 = vmatpush1.bf16.msra.mxu0 %v4099
        %5250 = vmatprep.subr.bf16.mxu0 %v4112
        %5251 = vmatpush1.bf16.msra.mxu0 %v4111
        %5252 = vmatprep.subr.bf16.mxu0 %v4124
        %5253 = vmatpush1.bf16.msra.mxu0 %v4123
        %5254 = vmatprep.subr.bf16.mxu0 %v4136
        %5255 = vmatpush1.bf16.msra.mxu0 %v4135
        %5256 = vmatprep.subr.bf16.mxu0 %v4148
        %5257 = vmatpush1.bf16.msra.mxu0 %v4147
        %5258 = vmatprep.mubr.bf16.mxu0 %v1076
        %5259 = vmatmul.mubr.bf16.gmra.mrb[0].mxu0 %v1075
        %v5260 = vpop.f32.mrb[0].mxu0
        %v5261 = vadd.f32 %v5218, %v5260
        %v5262 = vpop.f32.mrb[0].mxu0
        %v5263 = vadd.f32 %v5220, %v5262
        %v5264 = vpop.f32.mrb[0].mxu0
        %v5265 = vadd.f32 %v5222, %v5264
        %v5266 = vpop.f32.mrb[0].mxu0
        %v5267 = vadd.f32 %v5224, %v5266
        %5268 = vdwg.mxu0
        %5269 = vmatprep.subr.bf16.mxu0 %v3394
        %5270 = vmatpush1.bf16.msra.mxu0 %v3393
        %5271 = vmatprep.subr.bf16.mxu0 %v3406
        %5272 = vmatpush1.bf16.msra.mxu0 %v3405
        %5273 = vmatprep.subr.bf16.mxu0 %v3418
        %5274 = vmatpush1.bf16.msra.mxu0 %v3417
        %5275 = vmatprep.subr.bf16.mxu0 %v3430
        %5276 = vmatpush1.bf16.msra.mxu0 %v3429
        %5277 = vmatprep.subr.bf16.mxu0 %v3442
        %5278 = vmatpush1.bf16.msra.mxu0 %v3441
        %5279 = vmatprep.subr.bf16.mxu0 %v3454
        %5280 = vmatpush1.bf16.msra.mxu0 %v3453
        %5281 = vmatprep.subr.bf16.mxu0 %v3466
        %5282 = vmatpush1.bf16.msra.mxu0 %v3465
        %5283 = vmatprep.subr.bf16.mxu0 %v3478
        %5284 = vmatpush1.bf16.msra.mxu0 %v3477
        %5285 = vmatprep.subr.bf16.mxu0 %v3490
        %5286 = vmatpush1.bf16.msra.mxu0 %v3489
        %5287 = vmatprep.subr.bf16.mxu0 %v3502
        %5288 = vmatpush1.bf16.msra.mxu0 %v3501
        %5289 = vmatprep.subr.bf16.mxu0 %v3514
        %5290 = vmatpush1.bf16.msra.mxu0 %v3513
        %5291 = vmatprep.subr.bf16.mxu0 %v3526
        %5292 = vmatpush1.bf16.msra.mxu0 %v3525
        %5293 = vmatprep.subr.bf16.mxu0 %v3538
        %5294 = vmatpush1.bf16.msra.mxu0 %v3537
        %5295 = vmatprep.subr.bf16.mxu0 %v3550
        %5296 = vmatpush1.bf16.msra.mxu0 %v3549
        %5297 = vmatprep.subr.bf16.mxu0 %v3562
        %5298 = vmatpush1.bf16.msra.mxu0 %v3561
        %5299 = vmatprep.subr.bf16.mxu0 %v3574
        %5300 = vmatpush1.bf16.msra.mxu0 %v3573
        %5301 = vmatprep.mubr.bf16.mxu0 %v1070
        %5302 = vmatmul.mubr.bf16.gmra.mrb[0].mxu0 %v1069
        %v5303 = vpop.f32.mrb[0].mxu0
        %v5304 = vadd.f32 0.0, %v5303
        %v5305 = vpop.f32.mrb[0].mxu0
        %v5306 = vadd.f32 0.0, %v5305
        %v5307 = vpop.f32.mrb[0].mxu0
        %v5308 = vadd.f32 0.0, %v5307
        %v5309 = vpop.f32.mrb[0].mxu0
        %v5310 = vadd.f32 0.0, %v5309
        %5311 = vdwg.mxu0
        %5312 = vmatprep.subr.bf16.mxu0 %v3586
        %5313 = vmatpush1.bf16.msra.mxu0 %v3585
        %5314 = vmatprep.subr.bf16.mxu0 %v3598
        %5315 = vmatpush1.bf16.msra.mxu0 %v3597
        %5316 = vmatprep.subr.bf16.mxu0 %v3610
        %5317 = vmatpush1.bf16.msra.mxu0 %v3609
        %5318 = vmatprep.subr.bf16.mxu0 %v3622
        %5319 = vmatpush1.bf16.msra.mxu0 %v3621
        %5320 = vmatprep.subr.bf16.mxu0 %v3634
        %5321 = vmatpush1.bf16.msra.mxu0 %v3633
        %5322 = vmatprep.subr.bf16.mxu0 %v3646
        %5323 = vmatpush1.bf16.msra.mxu0 %v3645
        %5324 = vmatprep.subr.bf16.mxu0 %v3658
        %5325 = vmatpush1.bf16.msra.mxu0 %v3657
        %5326 = vmatprep.subr.bf16.mxu0 %v3670
        %5327 = vmatpush1.bf16.msra.mxu0 %v3669
        %5328 = vmatprep.subr.bf16.mxu0 %v3682
        %5329 = vmatpush1.bf16.msra.mxu0 %v3681
        %5330 = vmatprep.subr.bf16.mxu0 %v3694
        %5331 = vmatpush1.bf16.msra.mxu0 %v3693
        %5332 = vmatprep.subr.bf16.mxu0 %v3706
        %5333 = vmatpush1.bf16.msra.mxu0 %v3705
        %5334 = vmatprep.subr.bf16.mxu0 %v3718
        %5335 = vmatpush1.bf16.msra.mxu0 %v3717
        %5336 = vmatprep.subr.bf16.mxu0 %v3730
        %5337 = vmatpush1.bf16.msra.mxu0 %v3729
        %5338 = vmatprep.subr.bf16.mxu0 %v3742
        %5339 = vmatpush1.bf16.msra.mxu0 %v3741
        %5340 = vmatprep.subr.bf16.mxu0 %v3754
        %5341 = vmatpush1.bf16.msra.mxu0 %v3753
        %5342 = vmatprep.subr.bf16.mxu0 %v3766
        %5343 = vmatpush1.bf16.msra.mxu0 %v3765
        %5344 = vmatprep.mubr.bf16.mxu0 %v1072
        %5345 = vmatmul.mubr.bf16.gmra.mrb[0].mxu0 %v1071
        %v5346 = vpop.f32.mrb[0].mxu0
        %v5347 = vadd.f32 %v5304, %v5346
        %v5348 = vpop.f32.mrb[0].mxu0
        %v5349 = vadd.f32 %v5306, %v5348
        %v5350 = vpop.f32.mrb[0].mxu0
        %v5351 = vadd.f32 %v5308, %v5350
        %v5352 = vpop.f32.mrb[0].mxu0
        %v5353 = vadd.f32 %v5310, %v5352
        %5354 = vdwg.mxu0
        %5355 = vmatprep.subr.bf16.mxu0 %v3778
        %5356 = vmatpush1.bf16.msra.mxu0 %v3777
        %5357 = vmatprep.subr.bf16.mxu0 %v3790
        %5358 = vmatpush1.bf16.msra.mxu0 %v3789
        %5359 = vmatprep.subr.bf16.mxu0 %v3802
        %5360 = vmatpush1.bf16.msra.mxu0 %v3801
        %5361 = vmatprep.subr.bf16.mxu0 %v3814
        %5362 = vmatpush1.bf16.msra.mxu0 %v3813
        %5363 = vmatprep.subr.bf16.mxu0 %v3826
        %5364 = vmatpush1.bf16.msra.mxu0 %v3825
        %5365 = vmatprep.subr.bf16.mxu0 %v3838
        %5366 = vmatpush1.bf16.msra.mxu0 %v3837
        %5367 = vmatprep.subr.bf16.mxu0 %v3850
        %5368 = vmatpush1.bf16.msra.mxu0 %v3849
        %5369 = vmatprep.subr.bf16.mxu0 %v3862
        %5370 = vmatpush1.bf16.msra.mxu0 %v3861
        %5371 = vmatprep.subr.bf16.mxu0 %v3874
        %5372 = vmatpush1.bf16.msra.mxu0 %v3873
        %5373 = vmatprep.subr.bf16.mxu0 %v3886
        %5374 = vmatpush1.bf16.msra.mxu0 %v3885
        %5375 = vmatprep.subr.bf16.mxu0 %v3898
        %5376 = vmatpush1.bf16.msra.mxu0 %v3897
        %5377 = vmatprep.subr.bf16.mxu0 %v3910
        %5378 = vmatpush1.bf16.msra.mxu0 %v3909
        %5379 = vmatprep.subr.bf16.mxu0 %v3922
        %5380 = vmatpush1.bf16.msra.mxu0 %v3921
        %5381 = vmatprep.subr.bf16.mxu0 %v3934
        %5382 = vmatpush1.bf16.msra.mxu0 %v3933
        %5383 = vmatprep.subr.bf16.mxu0 %v3946
        %5384 = vmatpush1.bf16.msra.mxu0 %v3945
        %5385 = vmatprep.subr.bf16.mxu0 %v3958
        %5386 = vmatpush1.bf16.msra.mxu0 %v3957
        %5387 = vmatprep.mubr.bf16.mxu0 %v1074
        %5388 = vmatmul.mubr.bf16.gmra.mrb[0].mxu0 %v1073
        %v5389 = vpop.f32.mrb[0].mxu0
        %v5390 = vadd.f32 %v5347, %v5389
        %v5391 = vpop.f32.mrb[0].mxu0
        %v5392 = vadd.f32 %v5349, %v5391
        %v5393 = vpop.f32.mrb[0].mxu0
        %v5394 = vadd.f32 %v5351, %v5393
        %v5395 = vpop.f32.mrb[0].mxu0
        %v5396 = vadd.f32 %v5353, %v5395
        %5397 = vdwg.mxu0
        %5398 = vmatprep.subr.bf16.mxu0 %v3970
        %5399 = vmatpush1.bf16.msra.mxu0 %v3969
        %5400 = vmatprep.subr.bf16.mxu0 %v3982
        %5401 = vmatpush1.bf16.msra.mxu0 %v3981
        %5402 = vmatprep.subr.bf16.mxu0 %v3994
        %5403 = vmatpush1.bf16.msra.mxu0 %v3993
        %5404 = vmatprep.subr.bf16.mxu0 %v4006
        %5405 = vmatpush1.bf16.msra.mxu0 %v4005
        %5406 = vmatprep.subr.bf16.mxu0 %v4018
        %5407 = vmatpush1.bf16.msra.mxu0 %v4017
        %5408 = vmatprep.subr.bf16.mxu0 %v4030
        %5409 = vmatpush1.bf16.msra.mxu0 %v4029
        %5410 = vmatprep.subr.bf16.mxu0 %v4042
        %5411 = vmatpush1.bf16.msra.mxu0 %v4041
        %5412 = vmatprep.subr.bf16.mxu0 %v4054
        %5413 = vmatpush1.bf16.msra.mxu0 %v4053
        %5414 = vmatprep.subr.bf16.mxu0 %v4066
        %5415 = vmatpush1.bf16.msra.mxu0 %v4065
        %5416 = vmatprep.subr.bf16.mxu0 %v4078
        %5417 = vmatpush1.bf16.msra.mxu0 %v4077
        %5418 = vmatprep.subr.bf16.mxu0 %v4090
        %5419 = vmatpush1.bf16.msra.mxu0 %v4089
        %5420 = vmatprep.subr.bf16.mxu0 %v4102
        %5421 = vmatpush1.bf16.msra.mxu0 %v4101
        %5422 = vmatprep.subr.bf16.mxu0 %v4114
        %5423 = vmatpush1.bf16.msra.mxu0 %v4113
        %5424 = vmatprep.subr.bf16.mxu0 %v4126
        %5425 = vmatpush1.bf16.msra.mxu0 %v4125
        %5426 = vmatprep.subr.bf16.mxu0 %v4138
        %5427 = vmatpush1.bf16.msra.mxu0 %v4137
        %5428 = vmatprep.subr.bf16.mxu0 %v4150
        %5429 = vmatpush1.bf16.msra.mxu0 %v4149
        %5430 = vmatprep.mubr.bf16.mxu0 %v1076
        %5431 = vmatmul.mubr.bf16.gmra.mrb[0].mxu0 %v1075
        %v5432 = vpop.f32.mrb[0].mxu0
        %v5433 = vadd.f32 %v5390, %v5432
        %v5434 = vpop.f32.mrb[0].mxu0
        %v5435 = vadd.f32 %v5392, %v5434
        %v5436 = vpop.f32.mrb[0].mxu0
        %v5437 = vadd.f32 %v5394, %v5436
        %v5438 = vpop.f32.mrb[0].mxu0
        %v5439 = vadd.f32 %v5396, %v5438
        %5440 = vdwg.mxu0
        %5441 = vmatprep.subr.bf16.mxu0 %v3396
        %5442 = vmatpush1.bf16.msra.mxu0 %v3395
        %5443 = vmatprep.subr.bf16.mxu0 %v3408
        %5444 = vmatpush1.bf16.msra.mxu0 %v3407
        %5445 = vmatprep.subr.bf16.mxu0 %v3420
        %5446 = vmatpush1.bf16.msra.mxu0 %v3419
        %5447 = vmatprep.subr.bf16.mxu0 %v3432
        %5448 = vmatpush1.bf16.msra.mxu0 %v3431
        %5449 = vmatprep.subr.bf16.mxu0 %v3444
        %5450 = vmatpush1.bf16.msra.mxu0 %v3443
        %5451 = vmatprep.subr.bf16.mxu0 %v3456
        %5452 = vmatpush1.bf16.msra.mxu0 %v3455
        %5453 = vmatprep.subr.bf16.mxu0 %v3468
        %5454 = vmatpush1.bf16.msra.mxu0 %v3467
        %5455 = vmatprep.subr.bf16.mxu0 %v3480
        %5456 = vmatpush1.bf16.msra.mxu0 %v3479
        %5457 = vmatprep.subr.bf16.mxu0 %v3492
        %5458 = vmatpush1.bf16.msra.mxu0 %v3491
        %5459 = vmatprep.subr.bf16.mxu0 %v3504
        %5460 = vmatpush1.bf16.msra.mxu0 %v3503
        %5461 = vmatprep.subr.bf16.mxu0 %v3516
        %5462 = vmatpush1.bf16.msra.mxu0 %v3515
        %5463 = vmatprep.subr.bf16.mxu0 %v3528
        %5464 = vmatpush1.bf16.msra.mxu0 %v3527
        %5465 = vmatprep.subr.bf16.mxu0 %v3540
        %5466 = vmatpush1.bf16.msra.mxu0 %v3539
        %5467 = vmatprep.subr.bf16.mxu0 %v3552
        %5468 = vmatpush1.bf16.msra.mxu0 %v3551
        %5469 = vmatprep.subr.bf16.mxu0 %v3564
        %5470 = vmatpush1.bf16.msra.mxu0 %v3563
        %5471 = vmatprep.subr.bf16.mxu0 %v3576
        %5472 = vmatpush1.bf16.msra.mxu0 %v3575
        %5473 = vmatprep.mubr.bf16.mxu0 %v1070
        %5474 = vmatmul.mubr.bf16.gmra.mrb[0].mxu0 %v1069
        %v5475 = vpop.f32.mrb[0].mxu0
        %v5476 = vadd.f32 0.0, %v5475
        %v5477 = vpop.f32.mrb[0].mxu0
        %v5478 = vadd.f32 0.0, %v5477
        %v5479 = vpop.f32.mrb[0].mxu0
        %v5480 = vadd.f32 0.0, %v5479
        %v5481 = vpop.f32.mrb[0].mxu0
        %v5482 = vadd.f32 0.0, %v5481
        %5483 = vdwg.mxu0
        %5484 = vmatprep.subr.bf16.mxu0 %v3588
        %5485 = vmatpush1.bf16.msra.mxu0 %v3587
        %5486 = vmatprep.subr.bf16.mxu0 %v3600
        %5487 = vmatpush1.bf16.msra.mxu0 %v3599
        %5488 = vmatprep.subr.bf16.mxu0 %v3612
        %5489 = vmatpush1.bf16.msra.mxu0 %v3611
        %5490 = vmatprep.subr.bf16.mxu0 %v3624
        %5491 = vmatpush1.bf16.msra.mxu0 %v3623
        %5492 = vmatprep.subr.bf16.mxu0 %v3636
        %5493 = vmatpush1.bf16.msra.mxu0 %v3635
        %5494 = vmatprep.subr.bf16.mxu0 %v3648
        %5495 = vmatpush1.bf16.msra.mxu0 %v3647
        %5496 = vmatprep.subr.bf16.mxu0 %v3660
        %5497 = vmatpush1.bf16.msra.mxu0 %v3659
        %5498 = vmatprep.subr.bf16.mxu0 %v3672
        %5499 = vmatpush1.bf16.msra.mxu0 %v3671
        %5500 = vmatprep.subr.bf16.mxu0 %v3684
        %5501 = vmatpush1.bf16.msra.mxu0 %v3683
        %5502 = vmatprep.subr.bf16.mxu0 %v3696
        %5503 = vmatpush1.bf16.msra.mxu0 %v3695
        %5504 = vmatprep.subr.bf16.mxu0 %v3708
        %5505 = vmatpush1.bf16.msra.mxu0 %v3707
        %5506 = vmatprep.subr.bf16.mxu0 %v3720
        %5507 = vmatpush1.bf16.msra.mxu0 %v3719
        %5508 = vmatprep.subr.bf16.mxu0 %v3732
        %5509 = vmatpush1.bf16.msra.mxu0 %v3731
        %5510 = vmatprep.subr.bf16.mxu0 %v3744
        %5511 = vmatpush1.bf16.msra.mxu0 %v3743
        %5512 = vmatprep.subr.bf16.mxu0 %v3756
        %5513 = vmatpush1.bf16.msra.mxu0 %v3755
        %5514 = vmatprep.subr.bf16.mxu0 %v3768
        %5515 = vmatpush1.bf16.msra.mxu0 %v3767
        %5516 = vmatprep.mubr.bf16.mxu0 %v1072
        %5517 = vmatmul.mubr.bf16.gmra.mrb[0].mxu0 %v1071
        %v5518 = vpop.f32.mrb[0].mxu0
        %v5519 = vadd.f32 %v5476, %v5518
        %v5520 = vpop.f32.mrb[0].mxu0
        %v5521 = vadd.f32 %v5478, %v5520
        %v5522 = vpop.f32.mrb[0].mxu0
        %v5523 = vadd.f32 %v5480, %v5522
        %v5524 = vpop.f32.mrb[0].mxu0
        %v5525 = vadd.f32 %v5482, %v5524
        %5526 = vdwg.mxu0
        %5527 = vmatprep.subr.bf16.mxu0 %v3780
        %5528 = vmatpush1.bf16.msra.mxu0 %v3779
        %5529 = vmatprep.subr.bf16.mxu0 %v3792
        %5530 = vmatpush1.bf16.msra.mxu0 %v3791
        %5531 = vmatprep.subr.bf16.mxu0 %v3804
        %5532 = vmatpush1.bf16.msra.mxu0 %v3803
        %5533 = vmatprep.subr.bf16.mxu0 %v3816
        %5534 = vmatpush1.bf16.msra.mxu0 %v3815
        %5535 = vmatprep.subr.bf16.mxu0 %v3828
        %5536 = vmatpush1.bf16.msra.mxu0 %v3827
        %5537 = vmatprep.subr.bf16.mxu0 %v3840
        %5538 = vmatpush1.bf16.msra.mxu0 %v3839
        %5539 = vmatprep.subr.bf16.mxu0 %v3852
        %5540 = vmatpush1.bf16.msra.mxu0 %v3851
        %5541 = vmatprep.subr.bf16.mxu0 %v3864
        %5542 = vmatpush1.bf16.msra.mxu0 %v3863
        %5543 = vmatprep.subr.bf16.mxu0 %v3876
        %5544 = vmatpush1.bf16.msra.mxu0 %v3875
        %5545 = vmatprep.subr.bf16.mxu0 %v3888
        %5546 = vmatpush1.bf16.msra.mxu0 %v3887
        %5547 = vmatprep.subr.bf16.mxu0 %v3900
        %5548 = vmatpush1.bf16.msra.mxu0 %v3899
        %5549 = vmatprep.subr.bf16.mxu0 %v3912
        %5550 = vmatpush1.bf16.msra.mxu0 %v3911
        %5551 = vmatprep.subr.bf16.mxu0 %v3924
        %5552 = vmatpush1.bf16.msra.mxu0 %v3923
        %5553 = vmatprep.subr.bf16.mxu0 %v3936
        %5554 = vmatpush1.bf16.msra.mxu0 %v3935
        %5555 = vmatprep.subr.bf16.mxu0 %v3948
        %5556 = vmatpush1.bf16.msra.mxu0 %v3947
        %5557 = vmatprep.subr.bf16.mxu0 %v3960
        %5558 = vmatpush1.bf16.msra.mxu0 %v3959
        %5559 = vmatprep.mubr.bf16.mxu0 %v1074
        %5560 = vmatmul.mubr.bf16.gmra.mrb[0].mxu0 %v1073
        %v5561 = vpop.f32.mrb[0].mxu0
        %v5562 = vadd.f32 %v5519, %v5561
        %v5563 = vpop.f32.mrb[0].mxu0
        %v5564 = vadd.f32 %v5521, %v5563
        %v5565 = vpop.f32.mrb[0].mxu0
        %v5566 = vadd.f32 %v5523, %v5565
        %v5567 = vpop.f32.mrb[0].mxu0
        %v5568 = vadd.f32 %v5525, %v5567
        %5569 = vdwg.mxu0
        %5570 = vmatprep.subr.bf16.mxu0 %v3972
        %5571 = vmatpush1.bf16.msra.mxu0 %v3971
        %5572 = vmatprep.subr.bf16.mxu0 %v3984
        %5573 = vmatpush1.bf16.msra.mxu0 %v3983
        %5574 = vmatprep.subr.bf16.mxu0 %v3996
        %5575 = vmatpush1.bf16.msra.mxu0 %v3995
        %5576 = vmatprep.subr.bf16.mxu0 %v4008
        %5577 = vmatpush1.bf16.msra.mxu0 %v4007
        %5578 = vmatprep.subr.bf16.mxu0 %v4020
        %5579 = vmatpush1.bf16.msra.mxu0 %v4019
        %5580 = vmatprep.subr.bf16.mxu0 %v4032
        %5581 = vmatpush1.bf16.msra.mxu0 %v4031
        %5582 = vmatprep.subr.bf16.mxu0 %v4044
        %5583 = vmatpush1.bf16.msra.mxu0 %v4043
        %5584 = vmatprep.subr.bf16.mxu0 %v4056
        %5585 = vmatpush1.bf16.msra.mxu0 %v4055
        %5586 = vmatprep.subr.bf16.mxu0 %v4068
        %5587 = vmatpush1.bf16.msra.mxu0 %v4067
        %5588 = vmatprep.subr.bf16.mxu0 %v4080
        %5589 = vmatpush1.bf16.msra.mxu0 %v4079
        %5590 = vmatprep.subr.bf16.mxu0 %v4092
        %5591 = vmatpush1.bf16.msra.mxu0 %v4091
        %5592 = vmatprep.subr.bf16.mxu0 %v4104
        %5593 = vmatpush1.bf16.msra.mxu0 %v4103
        %5594 = vmatprep.subr.bf16.mxu0 %v4116
        %5595 = vmatpush1.bf16.msra.mxu0 %v4115
        %5596 = vmatprep.subr.bf16.mxu0 %v4128
        %5597 = vmatpush1.bf16.msra.mxu0 %v4127
        %5598 = vmatprep.subr.bf16.mxu0 %v4140
        %5599 = vmatpush1.bf16.msra.mxu0 %v4139
        %5600 = vmatprep.subr.bf16.mxu0 %v4152
        %5601 = vmatpush1.bf16.msra.mxu0 %v4151
        %5602 = vmatprep.mubr.bf16.mxu0 %v1076
        %5603 = vmatmul.mubr.bf16.gmra.mrb[0].mxu0 %v1075
        %v5604 = vpop.f32.mrb[0].mxu0
        %v5605 = vadd.f32 %v5562, %v5604
        %v5606 = vpop.f32.mrb[0].mxu0
        %v5607 = vadd.f32 %v5564, %v5606
        %v5608 = vpop.f32.mrb[0].mxu0
        %v5609 = vadd.f32 %v5566, %v5608
        %v5610 = vpop.f32.mrb[0].mxu0
        %v5611 = vadd.f32 %v5568, %v5610
        %5612 = vdwg.mxu0
        %5613 = vmatprep.subr.bf16.mxu0 %v3398
        %5614 = vmatpush1.bf16.msra.mxu0 %v3397
        %5615 = vmatprep.subr.bf16.mxu0 %v3410
        %5616 = vmatpush1.bf16.msra.mxu0 %v3409
        %5617 = vmatprep.subr.bf16.mxu0 %v3422
        %5618 = vmatpush1.bf16.msra.mxu0 %v3421
        %5619 = vmatprep.subr.bf16.mxu0 %v3434
        %5620 = vmatpush1.bf16.msra.mxu0 %v3433
        %5621 = vmatprep.subr.bf16.mxu0 %v3446
        %5622 = vmatpush1.bf16.msra.mxu0 %v3445
        %5623 = vmatprep.subr.bf16.mxu0 %v3458
        %5624 = vmatpush1.bf16.msra.mxu0 %v3457
        %5625 = vmatprep.subr.bf16.mxu0 %v3470
        %5626 = vmatpush1.bf16.msra.mxu0 %v3469
        %5627 = vmatprep.subr.bf16.mxu0 %v3482
        %5628 = vmatpush1.bf16.msra.mxu0 %v3481
        %5629 = vmatprep.subr.bf16.mxu0 %v3494
        %5630 = vmatpush1.bf16.msra.mxu0 %v3493
        %5631 = vmatprep.subr.bf16.mxu0 %v3506
        %5632 = vmatpush1.bf16.msra.mxu0 %v3505
        %5633 = vmatprep.subr.bf16.mxu0 %v3518
        %5634 = vmatpush1.bf16.msra.mxu0 %v3517
        %5635 = vmatprep.subr.bf16.mxu0 %v3530
        %5636 = vmatpush1.bf16.msra.mxu0 %v3529
        %5637 = vmatprep.subr.bf16.mxu0 %v3542
        %5638 = vmatpush1.bf16.msra.mxu0 %v3541
        %5639 = vmatprep.subr.bf16.mxu0 %v3554
        %5640 = vmatpush1.bf16.msra.mxu0 %v3553
        %5641 = vmatprep.subr.bf16.mxu0 %v3566
        %5642 = vmatpush1.bf16.msra.mxu0 %v3565
        %5643 = vmatprep.subr.bf16.mxu0 %v3578
        %5644 = vmatpush1.bf16.msra.mxu0 %v3577
        %5645 = vmatprep.mubr.bf16.mxu0 %v1070
        %5646 = vmatmul.mubr.bf16.gmra.mrb[0].mxu0 %v1069
        %v5647 = vpop.f32.mrb[0].mxu0
        %v5648 = vadd.f32 0.0, %v5647
        %v5649 = vpop.f32.mrb[0].mxu0
        %v5650 = vadd.f32 0.0, %v5649
        %v5651 = vpop.f32.mrb[0].mxu0
        %v5652 = vadd.f32 0.0, %v5651
        %v5653 = vpop.f32.mrb[0].mxu0
        %v5654 = vadd.f32 0.0, %v5653
        %5655 = vdwg.mxu0
        %5656 = vmatprep.subr.bf16.mxu0 %v3590
        %5657 = vmatpush1.bf16.msra.mxu0 %v3589
        %5658 = vmatprep.subr.bf16.mxu0 %v3602
        %5659 = vmatpush1.bf16.msra.mxu0 %v3601
        %5660 = vmatprep.subr.bf16.mxu0 %v3614
        %5661 = vmatpush1.bf16.msra.mxu0 %v3613
        %5662 = vmatprep.subr.bf16.mxu0 %v3626
        %5663 = vmatpush1.bf16.msra.mxu0 %v3625
        %5664 = vmatprep.subr.bf16.mxu0 %v3638
        %5665 = vmatpush1.bf16.msra.mxu0 %v3637
        %5666 = vmatprep.subr.bf16.mxu0 %v3650
        %5667 = vmatpush1.bf16.msra.mxu0 %v3649
        %5668 = vmatprep.subr.bf16.mxu0 %v3662
        %5669 = vmatpush1.bf16.msra.mxu0 %v3661
        %5670 = vmatprep.subr.bf16.mxu0 %v3674
        %5671 = vmatpush1.bf16.msra.mxu0 %v3673
        %5672 = vmatprep.subr.bf16.mxu0 %v3686
        %5673 = vmatpush1.bf16.msra.mxu0 %v3685
        %5674 = vmatprep.subr.bf16.mxu0 %v3698
        %5675 = vmatpush1.bf16.msra.mxu0 %v3697
        %5676 = vmatprep.subr.bf16.mxu0 %v3710
        %5677 = vmatpush1.bf16.msra.mxu0 %v3709
        %5678 = vmatprep.subr.bf16.mxu0 %v3722
        %5679 = vmatpush1.bf16.msra.mxu0 %v3721
        %5680 = vmatprep.subr.bf16.mxu0 %v3734
        %5681 = vmatpush1.bf16.msra.mxu0 %v3733
        %5682 = vmatprep.subr.bf16.mxu0 %v3746
        %5683 = vmatpush1.bf16.msra.mxu0 %v3745
        %5684 = vmatprep.subr.bf16.mxu0 %v3758
        %5685 = vmatpush1.bf16.msra.mxu0 %v3757
        %5686 = vmatprep.subr.bf16.mxu0 %v3770
        %5687 = vmatpush1.bf16.msra.mxu0 %v3769
        %5688 = vmatprep.mubr.bf16.mxu0 %v1072
        %5689 = vmatmul.mubr.bf16.gmra.mrb[0].mxu0 %v1071
        %v5690 = vpop.f32.mrb[0].mxu0
        %v5691 = vadd.f32 %v5648, %v5690
        %v5692 = vpop.f32.mrb[0].mxu0
        %v5693 = vadd.f32 %v5650, %v5692
        %v5694 = vpop.f32.mrb[0].mxu0
        %v5695 = vadd.f32 %v5652, %v5694
        %v5696 = vpop.f32.mrb[0].mxu0
        %v5697 = vadd.f32 %v5654, %v5696
        %5698 = vdwg.mxu0
        %5699 = vmatprep.subr.bf16.mxu0 %v3782
        %5700 = vmatpush1.bf16.msra.mxu0 %v3781
        %5701 = vmatprep.subr.bf16.mxu0 %v3794
        %5702 = vmatpush1.bf16.msra.mxu0 %v3793
        %5703 = vmatprep.subr.bf16.mxu0 %v3806
        %5704 = vmatpush1.bf16.msra.mxu0 %v3805
        %5705 = vmatprep.subr.bf16.mxu0 %v3818
        %5706 = vmatpush1.bf16.msra.mxu0 %v3817
        %5707 = vmatprep.subr.bf16.mxu0 %v3830
        %5708 = vmatpush1.bf16.msra.mxu0 %v3829
        %5709 = vmatprep.subr.bf16.mxu0 %v3842
        %5710 = vmatpush1.bf16.msra.mxu0 %v3841
        %5711 = vmatprep.subr.bf16.mxu0 %v3854
        %5712 = vmatpush1.bf16.msra.mxu0 %v3853
        %5713 = vmatprep.subr.bf16.mxu0 %v3866
        %5714 = vmatpush1.bf16.msra.mxu0 %v3865
        %5715 = vmatprep.subr.bf16.mxu0 %v3878
        %5716 = vmatpush1.bf16.msra.mxu0 %v3877
        %5717 = vmatprep.subr.bf16.mxu0 %v3890
        %5718 = vmatpush1.bf16.msra.mxu0 %v3889
        %5719 = vmatprep.subr.bf16.mxu0 %v3902
        %5720 = vmatpush1.bf16.msra.mxu0 %v3901
        %5721 = vmatprep.subr.bf16.mxu0 %v3914
        %5722 = vmatpush1.bf16.msra.mxu0 %v3913
        %5723 = vmatprep.subr.bf16.mxu0 %v3926
        %5724 = vmatpush1.bf16.msra.mxu0 %v3925
        %5725 = vmatprep.subr.bf16.mxu0 %v3938
        %5726 = vmatpush1.bf16.msra.mxu0 %v3937
        %5727 = vmatprep.subr.bf16.mxu0 %v3950
        %5728 = vmatpush1.bf16.msra.mxu0 %v3949
        %5729 = vmatprep.subr.bf16.mxu0 %v3962
        %5730 = vmatpush1.bf16.msra.mxu0 %v3961
        %5731 = vmatprep.mubr.bf16.mxu0 %v1074
        %5732 = vmatmul.mubr.bf16.gmra.mrb[0].mxu0 %v1073
        %v5733 = vpop.f32.mrb[0].mxu0
        %v5734 = vadd.f32 %v5691, %v5733
        %v5735 = vpop.f32.mrb[0].mxu0
        %v5736 = vadd.f32 %v5693, %v5735
        %v5737 = vpop.f32.mrb[0].mxu0
        %v5738 = vadd.f32 %v5695, %v5737
        %v5739 = vpop.f32.mrb[0].mxu0
        %v5740 = vadd.f32 %v5697, %v5739
        %5741 = vdwg.mxu0
        %5742 = vmatprep.subr.bf16.mxu0 %v3974
        %5743 = vmatpush1.bf16.msra.mxu0 %v3973
        %5744 = vmatprep.subr.bf16.mxu0 %v3986
        %5745 = vmatpush1.bf16.msra.mxu0 %v3985
        %5746 = vmatprep.subr.bf16.mxu0 %v3998
        %5747 = vmatpush1.bf16.msra.mxu0 %v3997
        %5748 = vmatprep.subr.bf16.mxu0 %v4010
        %5749 = vmatpush1.bf16.msra.mxu0 %v4009
        %5750 = vmatprep.subr.bf16.mxu0 %v4022
        %5751 = vmatpush1.bf16.msra.mxu0 %v4021
        %5752 = vmatprep.subr.bf16.mxu0 %v4034
        %5753 = vmatpush1.bf16.msra.mxu0 %v4033
        %5754 = vmatprep.subr.bf16.mxu0 %v4046
        %5755 = vmatpush1.bf16.msra.mxu0 %v4045
        %5756 = vmatprep.subr.bf16.mxu0 %v4058
        %5757 = vmatpush1.bf16.msra.mxu0 %v4057
        %5758 = vmatprep.subr.bf16.mxu0 %v4070
        %5759 = vmatpush1.bf16.msra.mxu0 %v4069
        %5760 = vmatprep.subr.bf16.mxu0 %v4082
        %5761 = vmatpush1.bf16.msra.mxu0 %v4081
        %5762 = vmatprep.subr.bf16.mxu0 %v4094
        %5763 = vmatpush1.bf16.msra.mxu0 %v4093
        %5764 = vmatprep.subr.bf16.mxu0 %v4106
        %5765 = vmatpush1.bf16.msra.mxu0 %v4105
        %5766 = vmatprep.subr.bf16.mxu0 %v4118
        %5767 = vmatpush1.bf16.msra.mxu0 %v4117
        %5768 = vmatprep.subr.bf16.mxu0 %v4130
        %5769 = vmatpush1.bf16.msra.mxu0 %v4129
        %5770 = vmatprep.subr.bf16.mxu0 %v4142
        %5771 = vmatpush1.bf16.msra.mxu0 %v4141
        %5772 = vmatprep.subr.bf16.mxu0 %v4154
        %5773 = vmatpush1.bf16.msra.mxu0 %v4153
        %5774 = vmatprep.mubr.bf16.mxu0 %v1076
        %5775 = vmatmul.mubr.bf16.gmra.mrb[0].mxu0 %v1075
        %v5776 = vpop.f32.mrb[0].mxu0
        %v5777 = vadd.f32 %v5734, %v5776
        %v5778 = vpop.f32.mrb[0].mxu0
        %v5779 = vadd.f32 %v5736, %v5778
        %v5780 = vpop.f32.mrb[0].mxu0
        %v5781 = vadd.f32 %v5738, %v5780
        %v5782 = vpop.f32.mrb[0].mxu0
        %v5783 = vadd.f32 %v5740, %v5782
        %5784 = vdwg.mxu0
        %5785 = vmatprep.subr.bf16.mxu0 %v3400
        %5786 = vmatpush1.bf16.msra.mxu0 %v3399
        %5787 = vmatprep.subr.bf16.mxu0 %v3412
        %5788 = vmatpush1.bf16.msra.mxu0 %v3411
        %5789 = vmatprep.subr.bf16.mxu0 %v3424
        %5790 = vmatpush1.bf16.msra.mxu0 %v3423
        %5791 = vmatprep.subr.bf16.mxu0 %v3436
        %5792 = vmatpush1.bf16.msra.mxu0 %v3435
        %5793 = vmatprep.subr.bf16.mxu0 %v3448
        %5794 = vmatpush1.bf16.msra.mxu0 %v3447
        %5795 = vmatprep.subr.bf16.mxu0 %v3460
        %5796 = vmatpush1.bf16.msra.mxu0 %v3459
        %5797 = vmatprep.subr.bf16.mxu0 %v3472
        %5798 = vmatpush1.bf16.msra.mxu0 %v3471
        %5799 = vmatprep.subr.bf16.mxu0 %v3484
        %5800 = vmatpush1.bf16.msra.mxu0 %v3483
        %5801 = vmatprep.subr.bf16.mxu0 %v3496
        %5802 = vmatpush1.bf16.msra.mxu0 %v3495
        %5803 = vmatprep.subr.bf16.mxu0 %v3508
        %5804 = vmatpush1.bf16.msra.mxu0 %v3507
        %5805 = vmatprep.subr.bf16.mxu0 %v3520
        %5806 = vmatpush1.bf16.msra.mxu0 %v3519
        %5807 = vmatprep.subr.bf16.mxu0 %v3532
        %5808 = vmatpush1.bf16.msra.mxu0 %v3531
        %5809 = vmatprep.subr.bf16.mxu0 %v3544
        %5810 = vmatpush1.bf16.msra.mxu0 %v3543
        %5811 = vmatprep.subr.bf16.mxu0 %v3556
        %5812 = vmatpush1.bf16.msra.mxu0 %v3555
        %5813 = vmatprep.subr.bf16.mxu0 %v3568
        %5814 = vmatpush1.bf16.msra.mxu0 %v3567
        %5815 = vmatprep.subr.bf16.mxu0 %v3580
        %5816 = vmatpush1.bf16.msra.mxu0 %v3579
        %5817 = vmatprep.mubr.bf16.mxu0 %v1070
        %5818 = vmatmul.mubr.bf16.gmra.mrb[0].mxu0 %v1069
        %v5819 = vpop.f32.mrb[0].mxu0
        %v5820 = vadd.f32 0.0, %v5819
        %v5821 = vpop.f32.mrb[0].mxu0
        %v5822 = vadd.f32 0.0, %v5821
        %v5823 = vpop.f32.mrb[0].mxu0
        %v5824 = vadd.f32 0.0, %v5823
        %v5825 = vpop.f32.mrb[0].mxu0
        %v5826 = vadd.f32 0.0, %v5825
        %5827 = vdwg.mxu0
        %5828 = vmatprep.subr.bf16.mxu0 %v3592
        %5829 = vmatpush1.bf16.msra.mxu0 %v3591
        %5830 = vmatprep.subr.bf16.mxu0 %v3604
        %5831 = vmatpush1.bf16.msra.mxu0 %v3603
        %5832 = vmatprep.subr.bf16.mxu0 %v3616
        %5833 = vmatpush1.bf16.msra.mxu0 %v3615
        %5834 = vmatprep.subr.bf16.mxu0 %v3628
        %5835 = vmatpush1.bf16.msra.mxu0 %v3627
        %5836 = vmatprep.subr.bf16.mxu0 %v3640
        %5837 = vmatpush1.bf16.msra.mxu0 %v3639
        %5838 = vmatprep.subr.bf16.mxu0 %v3652
        %5839 = vmatpush1.bf16.msra.mxu0 %v3651
        %5840 = vmatprep.subr.bf16.mxu0 %v3664
        %5841 = vmatpush1.bf16.msra.mxu0 %v3663
        %5842 = vmatprep.subr.bf16.mxu0 %v3676
        %5843 = vmatpush1.bf16.msra.mxu0 %v3675
        %5844 = vmatprep.subr.bf16.mxu0 %v3688
        %5845 = vmatpush1.bf16.msra.mxu0 %v3687
        %5846 = vmatprep.subr.bf16.mxu0 %v3700
        %5847 = vmatpush1.bf16.msra.mxu0 %v3699
        %5848 = vmatprep.subr.bf16.mxu0 %v3712
        %5849 = vmatpush1.bf16.msra.mxu0 %v3711
        %5850 = vmatprep.subr.bf16.mxu0 %v3724
        %5851 = vmatpush1.bf16.msra.mxu0 %v3723
        %5852 = vmatprep.subr.bf16.mxu0 %v3736
        %5853 = vmatpush1.bf16.msra.mxu0 %v3735
        %5854 = vmatprep.subr.bf16.mxu0 %v3748
        %5855 = vmatpush1.bf16.msra.mxu0 %v3747
        %5856 = vmatprep.subr.bf16.mxu0 %v3760
        %5857 = vmatpush1.bf16.msra.mxu0 %v3759
        %5858 = vmatprep.subr.bf16.mxu0 %v3772
        %5859 = vmatpush1.bf16.msra.mxu0 %v3771
        %5860 = vmatprep.mubr.bf16.mxu0 %v1072
        %5861 = vmatmul.mubr.bf16.gmra.mrb[0].mxu0 %v1071
        %v5862 = vpop.f32.mrb[0].mxu0
        %v5863 = vadd.f32 %v5820, %v5862
        %v5864 = vpop.f32.mrb[0].mxu0
        %v5865 = vadd.f32 %v5822, %v5864
        %v5866 = vpop.f32.mrb[0].mxu0
        %v5867 = vadd.f32 %v5824, %v5866
        %v5868 = vpop.f32.mrb[0].mxu0
        %v5869 = vadd.f32 %v5826, %v5868
        %5870 = vdwg.mxu0
        %5871 = vmatprep.subr.bf16.mxu0 %v3784
        %5872 = vmatpush1.bf16.msra.mxu0 %v3783
        %5873 = vmatprep.subr.bf16.mxu0 %v3796
        %5874 = vmatpush1.bf16.msra.mxu0 %v3795
        %5875 = vmatprep.subr.bf16.mxu0 %v3808
        %5876 = vmatpush1.bf16.msra.mxu0 %v3807
        %5877 = vmatprep.subr.bf16.mxu0 %v3820
        %5878 = vmatpush1.bf16.msra.mxu0 %v3819
        %5879 = vmatprep.subr.bf16.mxu0 %v3832
        %5880 = vmatpush1.bf16.msra.mxu0 %v3831
        %5881 = vmatprep.subr.bf16.mxu0 %v3844
        %5882 = vmatpush1.bf16.msra.mxu0 %v3843
        %5883 = vmatprep.subr.bf16.mxu0 %v3856
        %5884 = vmatpush1.bf16.msra.mxu0 %v3855
        %5885 = vmatprep.subr.bf16.mxu0 %v3868
        %5886 = vmatpush1.bf16.msra.mxu0 %v3867
        %5887 = vmatprep.subr.bf16.mxu0 %v3880
        %5888 = vmatpush1.bf16.msra.mxu0 %v3879
        %5889 = vmatprep.subr.bf16.mxu0 %v3892
        %5890 = vmatpush1.bf16.msra.mxu0 %v3891
        %5891 = vmatprep.subr.bf16.mxu0 %v3904
        %5892 = vmatpush1.bf16.msra.mxu0 %v3903
        %5893 = vmatprep.subr.bf16.mxu0 %v3916
        %5894 = vmatpush1.bf16.msra.mxu0 %v3915
        %5895 = vmatprep.subr.bf16.mxu0 %v3928
        %5896 = vmatpush1.bf16.msra.mxu0 %v3927
        %5897 = vmatprep.subr.bf16.mxu0 %v3940
        %5898 = vmatpush1.bf16.msra.mxu0 %v3939
        %5899 = vmatprep.subr.bf16.mxu0 %v3952
        %5900 = vmatpush1.bf16.msra.mxu0 %v3951
        %5901 = vmatprep.subr.bf16.mxu0 %v3964
        %5902 = vmatpush1.bf16.msra.mxu0 %v3963
        %5903 = vmatprep.mubr.bf16.mxu0 %v1074
        %5904 = vmatmul.mubr.bf16.gmra.mrb[0].mxu0 %v1073
        %v5905 = vpop.f32.mrb[0].mxu0
        %v5906 = vadd.f32 %v5863, %v5905
        %v5907 = vpop.f32.mrb[0].mxu0
        %v5908 = vadd.f32 %v5865, %v5907
        %v5909 = vpop.f32.mrb[0].mxu0
        %v5910 = vadd.f32 %v5867, %v5909
        %v5911 = vpop.f32.mrb[0].mxu0
        %v5912 = vadd.f32 %v5869, %v5911
        %5913 = vdwg.mxu0
        %5914 = vmatprep.subr.bf16.mxu0 %v3976
        %5915 = vmatpush1.bf16.msra.mxu0 %v3975
        %5916 = vmatprep.subr.bf16.mxu0 %v3988
        %5917 = vmatpush1.bf16.msra.mxu0 %v3987
        %5918 = vmatprep.subr.bf16.mxu0 %v4000
        %5919 = vmatpush1.bf16.msra.mxu0 %v3999
        %5920 = vmatprep.subr.bf16.mxu0 %v4012
        %5921 = vmatpush1.bf16.msra.mxu0 %v4011
        %5922 = vmatprep.subr.bf16.mxu0 %v4024
        %5923 = vmatpush1.bf16.msra.mxu0 %v4023
        %5924 = vmatprep.subr.bf16.mxu0 %v4036
        %5925 = vmatpush1.bf16.msra.mxu0 %v4035
        %5926 = vmatprep.subr.bf16.mxu0 %v4048
        %5927 = vmatpush1.bf16.msra.mxu0 %v4047
        %5928 = vmatprep.subr.bf16.mxu0 %v4060
        %5929 = vmatpush1.bf16.msra.mxu0 %v4059
        %5930 = vmatprep.subr.bf16.mxu0 %v4072
        %5931 = vmatpush1.bf16.msra.mxu0 %v4071
        %5932 = vmatprep.subr.bf16.mxu0 %v4084
        %5933 = vmatpush1.bf16.msra.mxu0 %v4083
        %5934 = vmatprep.subr.bf16.mxu0 %v4096
        %5935 = vmatpush1.bf16.msra.mxu0 %v4095
        %5936 = vmatprep.subr.bf16.mxu0 %v4108
        %5937 = vmatpush1.bf16.msra.mxu0 %v4107
        %5938 = vmatprep.subr.bf16.mxu0 %v4120
        %5939 = vmatpush1.bf16.msra.mxu0 %v4119
        %5940 = vmatprep.subr.bf16.mxu0 %v4132
        %5941 = vmatpush1.bf16.msra.mxu0 %v4131
        %5942 = vmatprep.subr.bf16.mxu0 %v4144
        %5943 = vmatpush1.bf16.msra.mxu0 %v4143
        %5944 = vmatprep.subr.bf16.mxu0 %v4156
        %5945 = vmatpush1.bf16.msra.mxu0 %v4155
        %5946 = vmatprep.mubr.bf16.mxu0 %v1076
        %5947 = vmatmul.mubr.bf16.gmra.mrb[0].mxu0 %v1075
        %v5948 = vpop.f32.mrb[0].mxu0
        %v5949 = vadd.f32 %v5906, %v5948
        %v5950 = vpop.f32.mrb[0].mxu0
        %v5951 = vadd.f32 %v5908, %v5950
        %v5952 = vpop.f32.mrb[0].mxu0
        %v5953 = vadd.f32 %v5910, %v5952
        %v5954 = vpop.f32.mrb[0].mxu0
        %v5955 = vadd.f32 %v5912, %v5954
        %5956 = vdwg.mxu0
        %v5957 = vadd.f32 %v245, %v5089
        %v5958 = vadd.f32 %v246, %v5091
        %v5959 = vadd.f32 %v247, %v5261
        %v5960 = vadd.f32 %v248, %v5263
        %v5961 = vadd.f32 %v249, %v5433
        %v5962 = vadd.f32 %v250, %v5435
        %v5963 = vadd.f32 %v251, %v5605
        %v5964 = vadd.f32 %v252, %v5607
        %v5965 = vadd.f32 %v253, %v5777
        %v5966 = vadd.f32 %v254, %v5779
        %v5967 = vadd.f32 %v255, %v5949
        %v5968 = vadd.f32 %v256, %v5951
        %v5969 = vadd.f32 %v257, %v5093
        %v5970 = vadd.f32 %v258, %v5095
        %v5971 = vadd.f32 %v259, %v5265
        %v5972 = vadd.f32 %v260, %v5267
        %v5973 = vadd.f32 %v261, %v5437
        %v5974 = vadd.f32 %v262, %v5439
        %v5975 = vadd.f32 %v263, %v5609
        %v5976 = vadd.f32 %v264, %v5611
        %v5977 = vadd.f32 %v265, %v5781
        %v5978 = vadd.f32 %v266, %v5783
        %v5979 = vadd.f32 %v267, %v5953
        %v5980 = vadd.f32 %v268, %v5955
        %5981 = vst [vmem:[#allocation2] sm:$0xff] %v5957
        %5982 = vst [vmem:[#allocation2 + $0x8] sm:$0xff] %v5958
        %5983 = vst [vmem:[#allocation2 + $0x10] sm:$0xff] %v5959
        %5984 = vst [vmem:[#allocation2 + $0x18] sm:$0xff] %v5960
        %5985 = vst [vmem:[#allocation2 + $0x20] sm:$0xff] %v5961
        %5986 = vst [vmem:[#allocation2 + $0x28] sm:$0xff] %v5962
        %5987 = vst [vmem:[#allocation2 + $0x30] sm:$0xff] %v5963
        %5988 = vst [vmem:[#allocation2 + $0x38] sm:$0xff] %v5964
        %5989 = vst [vmem:[#allocation2 + $0x40] sm:$0xff] %v5965
        %5990 = vst [vmem:[#allocation2 + $0x48] sm:$0xff] %v5966
        %5991 = vst [vmem:[#allocation2 + $0x50] sm:$0xff] %v5967
        %5992 = vst [vmem:[#allocation2 + $0x58] sm:$0xff] %v5968
        %5993 = vst [vmem:[#allocation2 + $0x60] sm:$0xff] %v5969
        %5994 = vst [vmem:[#allocation2 + $0x68] sm:$0xff] %v5970
        %5995 = vst [vmem:[#allocation2 + $0x70] sm:$0xff] %v5971
        %5996 = vst [vmem:[#allocation2 + $0x78] sm:$0xff] %v5972
        %5997 = vst [vmem:[#allocation2 + $0x80] sm:$0xff] %v5973
        %5998 = vst [vmem:[#allocation2 + $0x88] sm:$0xff] %v5974
        %5999 = vst [vmem:[#allocation2 + $0x90] sm:$0xff] %v5975
        %6000 = vst [vmem:[#allocation2 + $0x98] sm:$0xff] %v5976
        %6001 = vst [vmem:[#allocation2 + $0xa0] sm:$0xff] %v5977
        %6002 = vst [vmem:[#allocation2 + $0xa8] sm:$0xff] %v5978
        %6003 = vst [vmem:[#allocation2 + $0xb0] sm:$0xff] %v5979
        %6004 = vst [vmem:[#allocation2 + $0xb8] sm:$0xff] %v5980
        %p6005 = scmp.eq.s32.totalorder %s25, 2
        // Predicated region
        $region41: #{tpu_custom_call.1} parent=27 // pred_check
          %p6006 = pneg %p6005
        $region42: #{tpu_custom_call.1} parent=27 // pred_check_branch
          %6008 = sbr.rel (%p6006) target = $region44
        $region43: #{tpu_custom_call.1} parent=27 // pred_region
          %v6009 = vld [vmem:[#allocation2] sm:$0xff]
          %v6010 = vld [vmem:[#allocation2 + $0x8] sm:$0xff]
          %v6011 = vld [vmem:[#allocation2 + $0x10] sm:$0xff]
          %v6012 = vld [vmem:[#allocation2 + $0x18] sm:$0xff]
          %v6013 = vld [vmem:[#allocation2 + $0x20] sm:$0xff]
          %v6014 = vld [vmem:[#allocation2 + $0x28] sm:$0xff]
          %v6015 = vld [vmem:[#allocation2 + $0x30] sm:$0xff]
          %v6016 = vld [vmem:[#allocation2 + $0x38] sm:$0xff]
          %v6017 = vld [vmem:[#allocation2 + $0x40] sm:$0xff]
          %v6018 = vld [vmem:[#allocation2 + $0x48] sm:$0xff]
          %v6019 = vld [vmem:[#allocation2 + $0x50] sm:$0xff]
          %v6020 = vld [vmem:[#allocation2 + $0x58] sm:$0xff]
          %v6021 = vld [vmem:[#allocation2 + $0x60] sm:$0xff]
          %v6022 = vld [vmem:[#allocation2 + $0x68] sm:$0xff]
          %v6023 = vld [vmem:[#allocation2 + $0x70] sm:$0xff]
          %v6024 = vld [vmem:[#allocation2 + $0x78] sm:$0xff]
          %v6025 = vld [vmem:[#allocation2 + $0x80] sm:$0xff]
          %v6026 = vld [vmem:[#allocation2 + $0x88] sm:$0xff]
          %v6027 = vld [vmem:[#allocation2 + $0x90] sm:$0xff]
          %v6028 = vld [vmem:[#allocation2 + $0x98] sm:$0xff]
          %v6029 = vld [vmem:[#allocation2 + $0xa0] sm:$0xff]
          %v6030 = vld [vmem:[#allocation2 + $0xa8] sm:$0xff]
          %v6031 = vld [vmem:[#allocation2 + $0xb0] sm:$0xff]
          %v6032 = vld [vmem:[#allocation2 + $0xb8] sm:$0xff]
          %v6033 = vxor.u32 %v6009, 2147483648
          %v6034 = vxor.u32 %v6010, 2147483648
          %v6035 = vxor.u32 %v6011, 2147483648
          %v6036 = vxor.u32 %v6012, 2147483648
          %v6037 = vxor.u32 %v6013, 2147483648
          %v6038 = vxor.u32 %v6014, 2147483648
          %v6039 = vxor.u32 %v6015, 2147483648
          %v6040 = vxor.u32 %v6016, 2147483648
          %v6041 = vxor.u32 %v6017, 2147483648
          %v6042 = vxor.u32 %v6018, 2147483648
          %v6043 = vxor.u32 %v6019, 2147483648
          %v6044 = vxor.u32 %v6020, 2147483648
          %v6045 = vxor.u32 %v6021, 2147483648
          %v6046 = vxor.u32 %v6022, 2147483648
          %v6047 = vxor.u32 %v6023, 2147483648
          %v6048 = vxor.u32 %v6024, 2147483648
          %v6049 = vxor.u32 %v6025, 2147483648
          %v6050 = vxor.u32 %v6026, 2147483648
          %v6051 = vxor.u32 %v6027, 2147483648
          %v6052 = vxor.u32 %v6028, 2147483648
          %v6053 = vxor.u32 %v6029, 2147483648
          %v6054 = vxor.u32 %v6030, 2147483648
          %v6055 = vxor.u32 %v6031, 2147483648
          %v6056 = vxor.u32 %v6032, 2147483648
          %v6057 = vmul.f32 %v6033, 1.442695
          %v6058 = vpow.pop %v6057
          %v6059 = vmul.f32 %v6034, 1.442695
          %v6060 = vpow.pop %v6059
          %v6061 = vmul.f32 %v6035, 1.442695
          %v6062 = vpow.pop %v6061
          %v6063 = vmul.f32 %v6036, 1.442695
          %v6064 = vpow.pop %v6063
          %v6065 = vmul.f32 %v6037, 1.442695
          %v6066 = vpow.pop %v6065
          %v6067 = vmul.f32 %v6038, 1.442695
          %v6068 = vpow.pop %v6067
          %v6069 = vmul.f32 %v6039, 1.442695
          %v6070 = vpow.pop %v6069
          %v6071 = vmul.f32 %v6040, 1.442695
          %v6072 = vpow.pop %v6071
          %v6073 = vmul.f32 %v6041, 1.442695
          %v6074 = vpow.pop %v6073
          %v6075 = vmul.f32 %v6042, 1.442695
          %v6076 = vpow.pop %v6075
          %v6077 = vmul.f32 %v6043, 1.442695
          %v6078 = vpow.pop %v6077
          %v6079 = vmul.f32 %v6044, 1.442695
          %v6080 = vpow.pop %v6079
          %v6081 = vmul.f32 %v6045, 1.442695
          %v6082 = vpow.pop %v6081
          %v6083 = vmul.f32 %v6046, 1.442695
          %v6084 = vpow.pop %v6083
          %v6085 = vmul.f32 %v6047, 1.442695
          %v6086 = vpow.pop %v6085
          %v6087 = vmul.f32 %v6048, 1.442695
          %v6088 = vpow.pop %v6087
          %v6089 = vmul.f32 %v6049, 1.442695
          %v6090 = vpow.pop %v6089
          %v6091 = vmul.f32 %v6050, 1.442695
          %v6092 = vpow.pop %v6091
          %v6093 = vmul.f32 %v6051, 1.442695
          %v6094 = vpow.pop %v6093
          %v6095 = vmul.f32 %v6052, 1.442695
          %v6096 = vpow.pop %v6095
          %v6097 = vmul.f32 %v6053, 1.442695
          %v6098 = vpow.pop %v6097
          %v6099 = vmul.f32 %v6054, 1.442695
          %v6100 = vpow.pop %v6099
          %v6101 = vmul.f32 %v6055, 1.442695
          %v6102 = vpow.pop %v6101
          %v6103 = vmul.f32 %v6056, 1.442695
          %v6104 = vpow.pop %v6103
          %v6105 = vadd.f32 %v6058, 1.0
          %v6106 = vadd.f32 %v6060, 1.0
          %v6107 = vadd.f32 %v6062, 1.0
          %v6108 = vadd.f32 %v6064, 1.0
          %v6109 = vadd.f32 %v6066, 1.0
          %v6110 = vadd.f32 %v6068, 1.0
          %v6111 = vadd.f32 %v6070, 1.0
          %v6112 = vadd.f32 %v6072, 1.0
          %v6113 = vadd.f32 %v6074, 1.0
          %v6114 = vadd.f32 %v6076, 1.0
          %v6115 = vadd.f32 %v6078, 1.0
          %v6116 = vadd.f32 %v6080, 1.0
          %v6117 = vadd.f32 %v6082, 1.0
          %v6118 = vadd.f32 %v6084, 1.0
          %v6119 = vadd.f32 %v6086, 1.0
          %v6120 = vadd.f32 %v6088, 1.0
          %v6121 = vadd.f32 %v6090, 1.0
          %v6122 = vadd.f32 %v6092, 1.0
          %v6123 = vadd.f32 %v6094, 1.0
          %v6124 = vadd.f32 %v6096, 1.0
          %v6125 = vadd.f32 %v6098, 1.0
          %v6126 = vadd.f32 %v6100, 1.0
          %v6127 = vadd.f32 %v6102, 1.0
          %v6128 = vadd.f32 %v6104, 1.0
          %v6129 = vrcp.pop %v6105
          %v6130 = vmul.f32 1.0, %v6129
          %v6131 = vrcp.pop %v6106
          %v6132 = vmul.f32 1.0, %v6131
          %v6133 = vrcp.pop %v6107
          %v6134 = vmul.f32 1.0, %v6133
          %v6135 = vrcp.pop %v6108
          %v6136 = vmul.f32 1.0, %v6135
          %v6137 = vrcp.pop %v6109
          %v6138 = vmul.f32 1.0, %v6137
          %v6139 = vrcp.pop %v6110
          %v6140 = vmul.f32 1.0, %v6139
          %v6141 = vrcp.pop %v6111
          %v6142 = vmul.f32 1.0, %v6141
          %v6143 = vrcp.pop %v6112
          %v6144 = vmul.f32 1.0, %v6143
          %v6145 = vrcp.pop %v6113
          %v6146 = vmul.f32 1.0, %v6145
          %v6147 = vrcp.pop %v6114
          %v6148 = vmul.f32 1.0, %v6147
          %v6149 = vrcp.pop %v6115
          %v6150 = vmul.f32 1.0, %v6149
          %v6151 = vrcp.pop %v6116
          %v6152 = vmul.f32 1.0, %v6151
          %v6153 = vrcp.pop %v6117
          %v6154 = vmul.f32 1.0, %v6153
          %v6155 = vrcp.pop %v6118
          %v6156 = vmul.f32 1.0, %v6155
          %v6157 = vrcp.pop %v6119
          %v6158 = vmul.f32 1.0, %v6157
          %v6159 = vrcp.pop %v6120
          %v6160 = vmul.f32 1.0, %v6159
          %v6161 = vrcp.pop %v6121
          %v6162 = vmul.f32 1.0, %v6161
          %v6163 = vrcp.pop %v6122
          %v6164 = vmul.f32 1.0, %v6163
          %v6165 = vrcp.pop %v6123
          %v6166 = vmul.f32 1.0, %v6165
          %v6167 = vrcp.pop %v6124
          %v6168 = vmul.f32 1.0, %v6167
          %v6169 = vrcp.pop %v6125
          %v6170 = vmul.f32 1.0, %v6169
          %v6171 = vrcp.pop %v6126
          %v6172 = vmul.f32 1.0, %v6171
          %v6173 = vrcp.pop %v6127
          %v6174 = vmul.f32 1.0, %v6173
          %v6175 = vrcp.pop %v6128
          %v6176 = vmul.f32 1.0, %v6175
          %v6177 = vmul.f32 %v6009, %v6130
          %v6178 = vmul.f32 %v6010, %v6132
          %v6179 = vmul.f32 %v6011, %v6134
          %v6180 = vmul.f32 %v6012, %v6136
          %v6181 = vmul.f32 %v6013, %v6138
          %v6182 = vmul.f32 %v6014, %v6140
          %v6183 = vmul.f32 %v6015, %v6142
          %v6184 = vmul.f32 %v6016, %v6144
          %v6185 = vmul.f32 %v6017, %v6146
          %v6186 = vmul.f32 %v6018, %v6148
          %v6187 = vmul.f32 %v6019, %v6150
          %v6188 = vmul.f32 %v6020, %v6152
          %v6189 = vmul.f32 %v6021, %v6154
          %v6190 = vmul.f32 %v6022, %v6156
          %v6191 = vmul.f32 %v6023, %v6158
          %v6192 = vmul.f32 %v6024, %v6160
          %v6193 = vmul.f32 %v6025, %v6162
          %v6194 = vmul.f32 %v6026, %v6164
          %v6195 = vmul.f32 %v6027, %v6166
          %v6196 = vmul.f32 %v6028, %v6168
          %v6197 = vmul.f32 %v6029, %v6170
          %v6198 = vmul.f32 %v6030, %v6172
          %v6199 = vmul.f32 %v6031, %v6174
          %v6200 = vmul.f32 %v6032, %v6176
          %6201 = vst [vmem:[#allocation8] sm:$0xff] %v6177
          %6202 = vst [vmem:[#allocation8 + $0x8] sm:$0xff] %v6178
          %6203 = vst [vmem:[#allocation8 + $0x10] sm:$0xff] %v6179
          %6204 = vst [vmem:[#allocation8 + $0x18] sm:$0xff] %v6180
          %6205 = vst [vmem:[#allocation8 + $0x20] sm:$0xff] %v6181
          %6206 = vst [vmem:[#allocation8 + $0x28] sm:$0xff] %v6182
          %6207 = vst [vmem:[#allocation8 + $0x30] sm:$0xff] %v6183
          %6208 = vst [vmem:[#allocation8 + $0x38] sm:$0xff] %v6184
          %6209 = vst [vmem:[#allocation8 + $0x40] sm:$0xff] %v6185
          %6210 = vst [vmem:[#allocation8 + $0x48] sm:$0xff] %v6186
          %6211 = vst [vmem:[#allocation8 + $0x50] sm:$0xff] %v6187
          %6212 = vst [vmem:[#allocation8 + $0x58] sm:$0xff] %v6188
          %6213 = vst [vmem:[#allocation8 + $0x60] sm:$0xff] %v6189
          %6214 = vst [vmem:[#allocation8 + $0x68] sm:$0xff] %v6190
          %6215 = vst [vmem:[#allocation8 + $0x70] sm:$0xff] %v6191
          %6216 = vst [vmem:[#allocation8 + $0x78] sm:$0xff] %v6192
          %6217 = vst [vmem:[#allocation8 + $0x80] sm:$0xff] %v6193
          %6218 = vst [vmem:[#allocation8 + $0x88] sm:$0xff] %v6194
          %6219 = vst [vmem:[#allocation8 + $0x90] sm:$0xff] %v6195
          %6220 = vst [vmem:[#allocation8 + $0x98] sm:$0xff] %v6196
          %6221 = vst [vmem:[#allocation8 + $0xa0] sm:$0xff] %v6197
          %6222 = vst [vmem:[#allocation8 + $0xa8] sm:$0xff] %v6198
          %6223 = vst [vmem:[#allocation8 + $0xb0] sm:$0xff] %v6199
          %6224 = vst [vmem:[#allocation8 + $0xb8] sm:$0xff] %v6200
        $region44: #{tpu_custom_call.1} parent=27 // pred_fallthru
          _
        // Predicated region
        $region45: #{tpu_custom_call.1} parent=27 // pred_check
          %p6225 = pneg %p104
        $region46: #{tpu_custom_call.1} parent=27 // pred_check_branch
          %6227 = sbr.rel (%p6225) target = $region48
        $region47: #{tpu_custom_call.1} parent=27 // pred_region
          %s6228 = smul.u32 2, %s24
          %s6230 = ssub.s32 3072, 3072
          %6231 = vsyncadd [#allocation5], %s6230
          %s6232 = smul.addr %s6228, 12
          %s6233 = smul.addr %s6232, 128
          %s6234 = scalar_lea.hbm %s2, %s6233
          %s6235 = sshll.u32 [#allocation8], 4
          %s6236 = int_to_ptr.vmem [resolvable:$true] %s6235
          %6241 = dma.vmem_to_hbm [thread:$0]  %s6236, 3072, %s6234, [#allocation5], 1536, 1536, 96
        $region48: #{tpu_custom_call.1} parent=27 // pred_fallthru
          _
        // Predicated region
        $region49: #{tpu_custom_call.1} parent=27 // pred_check
          %p6242 = pneg %p104
        $region50: #{tpu_custom_call.1} parent=27 // pred_check_branch
          %6244 = sbr.rel (%p6242) target = $region52
        $region51: #{tpu_custom_call.1} parent=27 // pred_region
          %6245 = dma.done [#allocation5], 3072
        $region52: #{tpu_custom_call.1} parent=27 // pred_fallthru
          _
      $region28: #{tpu_custom_call.1} parent=5 // pred_fallthru
        _
      %p6246 = scmp.le.s32.totalorder 2, %s15
      // Predicated region
      $region53: #{tpu_custom_call.1} parent=5 // pred_check
        %p6247 = pneg %p6246
      $region54: #{tpu_custom_call.1} parent=5 // pred_check_branch
        %6249 = sbr.rel (%p6247) target = $region56
      $region55: #{tpu_custom_call.1} parent=5 // pred_region
        %s6250 = ssub.s32 %s15, 2
      $region56: #{tpu_custom_call.1} parent=5 // pred_fallthru
        _
    $region6: #{tpu_custom_call.1} parent=1 // loop_footer
      %s19 = sadd.s32 1, %s15
    $region7: #{tpu_custom_call.1} parent=1 // loop_footer_branch
      %14 = sbr.rel target = $region3
    $region8: #{tpu_custom_call.1} parent=1 // loop_exit
      _
    %6251 = vsyncpa [#allocation4], 1
    %s6252 = scalar_lea.sflag [#allocation4], 1
    %6253 = vsyncpa %s6252, 1
    %6254 = vsyncpa [#allocation7], 1
    %s6255 = scalar_lea.sflag [#allocation7], 1
    %6256 = vsyncpa %s6255, 1
    %6257 = vsyncpa [#allocation5], 1
    %s6258 = scalar_lea.sflag [#allocation5], 1
    %6259 = vsyncpa %s6258, 1

</llo_original>
